<compile_context>
chip_gen: v7x
topology: tpu7x:2x2x1
jax: 0.10.0
libtpu: 0.0.40
codegen_flags: <defaults>
</compile_context>

<pallas_src>
import functools
import math

import jax
import jax.numpy as jnp
from jax.experimental import pallas as pl
from jax.experimental.pallas import tpu as pltpu

CDT = jnp.bfloat16       # MXU input dtype (accumulation stays f32)
Q_TILE_PREF = 256        # query rows per grid step (256-multiples feed v6e/v7x MXU)
KV_TILE_PREF = 512       # online-softmax key/value chunk (caps (H,TQ,TK) scores)
MLP_TILE_PREF = 512      # MLP hidden-dim chunk (caps (TQ, chunk) activation)


def _chunk(total, pref):
    """Largest usable chunk: `pref` if it divides `total`, else `total`."""
    return pref if (total >= pref and total % pref == 0) else total


# ----------------------------- kernel helpers -----------------------------

def _layernorm(v, g, b, eps=1e-5):
    mu = jnp.mean(v, axis=-1, keepdims=True)
    var = jnp.mean(jnp.square(v - mu), axis=-1, keepdims=True)
    return (v - mu) * jax.lax.rsqrt(var + eps) * g + b


def _gelu(x):  # exact erf-based GELU (PyTorch F.gelu default)
    return 0.5 * x * (1.0 + jax.lax.erf(x * 0.7071067811865476))


# --------------------------------- kernel ---------------------------------

def gpt_block_kernel(n_heads,
                     x_ref, xkv_ref, hs_ref, cos_ref, sin_ref, la_ref, pad_ref,
                     wq1, bq1, wk1, bk1, wv1, bv1, wo1, bo1,
                     wq2, bq2, wk2, bk2, wv2, bv2, wo2, bo2,
                     w1, b1, w2, b2,
                     g1, bt1, g2, bt2, g3, bt3,
                     out_ref):
    TQ, D = x_ref.shape
    S = xkv_ref.shape[0]
    H = n_heads
    hd = D // H
    hd2 = hd // 2

    x = x_ref[...]                       # (TQ, D) f32, this program's query rows

    # RoPE tables for the query rows (keys use static per-chunk slices below).
    if TQ == S:
        cos_q = cos_ref[...]
        sin_q = sin_ref[...]
    else:
        q_start = pl.multiple_of(pl.program_id(1) * TQ, TQ)
        cos_q = cos_ref[pl.ds(q_start, TQ), :]
        sin_q = sin_ref[pl.ds(q_start, TQ), :]

    def split_heads(t):
        # (T, D) -> (H, T, hd)
        return jnp.stack([t[:, h * hd:(h + 1) * hd] for h in range(H)], axis=0)

    def rot_swap(t):
        # per-head [x1, x2] -> [x2, x1] on (..., hd); rotate-half sign is folded
        # into the sin table.  XLU roll when hd is lane-aligned.
        if hd % 128 == 0:
            return pltpu.roll(t, shift=hd2, axis=-1)
        return jnp.concatenate([t[..., hd2:], t[..., :hd2]], axis=-1)

    def mha(q_in, kv_ref, wq, bq, wk, bk, wv, bv, wo, bo, mask, use_rope):
        """MHA of the (TQ, D) query tile against the full kv_ref context,
        online-softmax (flash-style) over key/value chunks."""
        Tq = q_in.shape[0]
        Tk = kv_ref.shape[0]
        TK = _chunk(Tk, KV_TILE_PREF)

        q = jnp.dot(q_in.astype(CDT), wq[...],
                    preferred_element_type=jnp.float32) + bq[...]
        qh = split_heads(q)                                   # (H, TQ, hd)
        if use_rope:   # 1/sqrt(hd) is folded into wq/bq; RoPE is linear -> OK
            qh = qh * cos_q + rot_swap(qh) * sin_q

        m = jnp.full((H, Tq, 1), -1e30, jnp.float32)
        l = jnp.zeros((H, Tq, 1), jnp.float32)
        acc = jnp.zeros((H, Tq, hd), jnp.float32)

        for t in range(Tk // TK):                             # static loop
            kv_t = kv_ref[t * TK:(t + 1) * TK, :]             # (TK, D)
            k = jnp.dot(kv_t.astype(CDT), wk[...],
                        preferred_element_type=jnp.float32) + bk[...]
            v = jnp.dot(kv_t.astype(CDT), wv[...],
                        preferred_element_type=jnp.float32) + bv[...]
            kh = split_heads(k)                               # (H, TK, hd)
            vh = split_heads(v)
            if use_rope:
                cos_k = cos_ref[t * TK:(t + 1) * TK, :]
                sin_k = sin_ref[t * TK:(t + 1) * TK, :]
                kh = kh * cos_k + rot_swap(kh) * sin_k

            s = jnp.einsum('hqd,hkd->hqk', qh.astype(CDT), kh.astype(CDT),
                           preferred_element_type=jnp.float32)
            s = s + mask[:, t * TK:(t + 1) * TK]              # additive mask chunk
            m_new = jnp.maximum(m, jnp.max(s, axis=-1, keepdims=True))
            a = jnp.exp(m - m_new)
            p = jnp.exp(s - m_new)
            l = a * l + jnp.sum(p, axis=-1, keepdims=True)
            acc = a * acc + jnp.einsum('hqk,hkd->hqd',
                                       p.astype(CDT), vh.astype(CDT),
                                       preferred_element_type=jnp.float32)
            m = m_new

        o = acc * pl.reciprocal(l, approx=True)               # (H, TQ, hd), EUP slot
        o = jnp.concatenate([o[h] for h in range(H)], axis=-1)  # head merge -> (TQ, D)
        return jnp.dot(o.astype(CDT), wo[...],
                       preferred_element_type=jnp.float32) + bo[...]

    # local (RoPE, causal) self-attention + residual + LN   (dropout_p = 0)
    local = mha(x, xkv_ref, wq1, bq1, wk1, bk1, wv1, bv1, wo1, bo1,
                la_ref[...], use_rope=True)
    local = _layernorm(local + x, g1[...], bt1[...])

    # global cross-attention over hidden_state + residual + LN
    glob = mha(local, hs_ref, wq2, bq2, wk2, bk2, wv2, bv2, wo2, bo2,
               pad_ref[...], use_rope=False)
    glob = _layernorm(glob + local, g2[...], bt2[...])

    # MLP (D -> 4D -> D, exact-erf GELU), hidden dim chunked to cap VMEM
    Dh = w1.shape[1]
    TKM = _chunk(Dh, MLP_TILE_PREF)
    glob_c = glob.astype(CDT)
    ffn = jnp.zeros((TQ, D), jnp.float32)
    for t in range(Dh // TKM):                                # static loop
        h_t = jnp.dot(glob_c, w1[:, t * TKM:(t + 1) * TKM],
                      preferred_element_type=jnp.float32) + b1[:, t * TKM:(t + 1) * TKM]
        h_t = _gelu(h_t)
        ffn = ffn + jnp.dot(h_t.astype(CDT), w2[t * TKM:(t + 1) * TKM, :],
                            preferred_element_type=jnp.float32)
    ffn = _layernorm(ffn + b2[...] + glob, g3[...], bt3[...])

    out_ref[...] = ffn.astype(out_ref.dtype)


# ------------------------- one-time parameter prep -------------------------

def prepare_params(params, n_heads):
    """Run ONCE at parameter-load time (hoisted out of the per-call path):
    fold 1/sqrt(hd) into the query projection, cast weights to bf16."""
    (wq1, bq1, wk1, bk1, wv1, bv1, wo1, bo1,
     wq2, bq2, wk2, bk2, wv2, bv2, wo2, bo2,
     w1, b1, w2, b2,
     g1, bt1, g2, bt2, g3, bt3) = params
    D = wq1.shape[0]
    scale = 1.0 / math.sqrt(D // n_heads)

    def attn(wq, bq, wk, bk, wv, bv, wo, bo):
        return [(wq * scale).astype(CDT), bq * scale,
                wk.astype(CDT), bk,
                wv.astype(CDT), bv,
                wo.astype(CDT), bo]

    return tuple(attn(wq1, bq1, wk1, bk1, wv1, bv1, wo1, bo1)
                 + attn(wq2, bq2, wk2, bk2, wv2, bv2, wo2, bo2)
                 + [w1.astype(CDT), b1, w2.astype(CDT), b2,
                    g1, bt1, g2, bt2, g3, bt3])


def prepare_rope(cos, sin):
    """Run ONCE: fold the rotate-half sign into the sin table."""
    hd2 = cos.shape[-1] // 2
    sin_signed = jnp.concatenate([-sin[:, :hd2], sin[:, hd2:]], axis=-1)
    return cos.astype(jnp.float32), sin_signed.astype(jnp.float32)


# --------------------------------- wrapper ---------------------------------

def gpt_block(x, hidden, cos, sin, la_mask, pad_mask, prepped, n_heads):
    B, S, D = x.shape
    M = hidden.shape[1]
    TQ = _chunk(S, Q_TILE_PREF)
    nQ = S // TQ

    def rep(a):
        # grid-invariant input: constant block index (no re-DMA) and
        # single-buffered (halves weight VMEM residency).
        nd = a.ndim
        return pl.BlockSpec(a.shape, lambda b, q, _nd=nd: (0,) * _nd,
                            pipeline_mode=pl.Buffered(1))

    in_specs = (
        [pl.BlockSpec((pl.Squeezed(), TQ, D), lambda b, q: (b, q, 0)),  # x (queries)
         pl.BlockSpec((pl.Squeezed(), S, D), lambda b, q: (b, 0, 0)),   # x (keys/values)
         pl.BlockSpec((pl.Squeezed(), M, D), lambda b, q: (b, 0, 0)),   # hidden_state
         rep(cos), rep(sin),
         pl.BlockSpec((TQ, S), lambda b, q: (q, 0)),                    # causal mask rows
         pl.BlockSpec((pl.Squeezed(), 1, M), lambda b, q: (b, 0, 0))]   # padding mask
        + [rep(w) for w in prepped])

    # VMEM budget: ~7/8 of physical, capped (v7x: ~56 MiB, v5e/v6e: 112 MiB).
    try:
        cap = int(pltpu.get_tpu_info().vmem_capacity_bytes)
    except Exception:
        cap = 128 * 1024 * 1024
    vmem_limit = min(cap * 7 // 8, 112 * 1024 * 1024)

    # advisory cost hint so XLA can schedule neighbors around the custom call
    param_bytes = sum(int(p.size) * p.dtype.itemsize for p in prepped)
    act_bytes = 4 * (3 * B * S * D + B * M * D)
    cost = pl.CostEstimate(
        flops=int(B * S * (32 * D * D + 4 * D * (S + M))),
        transcendentals=int(B * S * (S + M + 4 * D + 8)),
        bytes_accessed=int(param_bytes + act_bytes))

    return pl.pallas_call(
        functools.partial(gpt_block_kernel, n_heads),
        out_shape=jax.ShapeDtypeStruct((B, S, D), jnp.float32),
        grid=(B, nQ),
        in_specs=in_specs,
        out_specs=pl.BlockSpec((pl.Squeezed(), TQ, D), lambda b, q: (b, q, 0)),
        compiler_params=pltpu.CompilerParams(
            dimension_semantics=("parallel", "parallel"),   # megacore over B and q-tiles
            vmem_limit_bytes=int(vmem_limit)),
        cost_estimate=cost,
    )(x, x, hidden, cos, sin, la_mask, pad_mask, *prepped)


# ------------------------------ param helpers ------------------------------

def _make_linear(key, din, dout):
    k1, k2 = jax.random.split(key)
    w = jax.random.normal(k1, (din, dout), jnp.float32) * (1.0 / jnp.sqrt(din))
    b = jax.random.normal(k2, (1, dout), jnp.float32) * 0.01
    return w, b


def make_params(key, model_dim):
    D = model_dim
    keys = jax.random.split(key, 10)
    ki = iter(keys)
    params = []
    for _ in range(4):                       # local attn: q, k, v, out
        w, b = _make_linear(next(ki), D, D); params += [w, b]
    for _ in range(4):                       # global attn: q, k, v, out
        w, b = _make_linear(next(ki), D, D); params += [w, b]
    w, b = _make_linear(next(ki), D, 4 * D); params += [w, b]   # mlp hidden
    w, b = _make_linear(next(ki), 4 * D, D); params += [w, b]   # mlp out
    for _ in range(3):                       # norm_1, norm_2, norm_3
        params += [jnp.ones((1, D), jnp.float32), jnp.zeros((1, D), jnp.float32)]
    return params


def make_rope(seq_len, head_dim):
    half = head_dim // 2
    inv_freq = 1.0 / (10000.0 ** (jnp.arange(half, dtype=jnp.float32) / half))
    pos = jnp.arange(seq_len, dtype=jnp.float32)
    angles = pos[:, None] * inv_freq[None, :]          # (S, hd/2)
    cos = jnp.concatenate([jnp.cos(angles), jnp.cos(angles)], axis=-1)
    sin = jnp.concatenate([jnp.sin(angles), jnp.sin(angles)], axis=-1)
    return cos, sin


# ------------------------ pure-JAX reference (f32) -------------------------

def reference_gpt_block(x, hidden, cos, sin, la_mask, pad_mask, params, n_heads):
    (wq1, bq1, wk1, bk1, wv1, bv1, wo1, bo1,
     wq2, bq2, wk2, bk2, wv2, bv2, wo2, bo2,
     w1, b1, w2, b2,
     g1, bt1, g2, bt2, g3, bt3) = params
    H = n_heads
    D = x.shape[-1]
    hd = D // H

    def ln(v, g, b, eps=1e-5):
        mu = v.mean(-1, keepdims=True)
        var = ((v - mu) ** 2).mean(-1, keepdims=True)
        return (v - mu) / jnp.sqrt(var + eps) * g + b

    def rot_half(t):
        h = t.shape[-1] // 2
        return jnp.concatenate([-t[..., h:], t[..., :h]], axis=-1)

    def attn(q_in, kv_in, wq, bq, wk, bk, wv, bv, wo, bo, mask, use_rope):
        B_, Tq, _ = q_in.shape
        Tk = kv_in.shape[1]
        q = q_in @ wq + bq
        k = kv_in @ wk + bk
        v = kv_in @ wv + bv
        qh = q.reshape(B_, Tq, H, hd).transpose(0, 2, 1, 3)
        kh = k.reshape(B_, Tk, H, hd).transpose(0, 2, 1, 3)
        vh = v.reshape(B_, Tk, H, hd).transpose(0, 2, 1, 3)
        if use_rope:
            qh = qh * cos[None, None] + rot_half(qh) * sin[None, None]
            kh = kh * cos[None, None] + rot_half(kh) * sin[None, None]
        s = jnp.einsum('bhqd,bhkd->bhqk', qh, kh) / (hd ** 0.5) + mask
        p = jax.nn.softmax(s, axis=-1)
        o = jnp.einsum('bhqk,bhkd->bhqd', p, vh)
        o = o.transpose(0, 2, 1, 3).reshape(B_, Tq, D)
        return o @ wo + bo

    local = attn(x, x, wq1, bq1, wk1, bk1, wv1, bv1, wo1, bo1, la_mask, True)
    local = ln(local + x, g1, bt1)
    glob = attn(local, hidden, wq2, bq2, wk2, bk2, wv2, bv2, wo2, bo2,
                pad_mask[:, None], False)
    glob = ln(glob + local, g2, bt2)
    h = jax.nn.gelu(glob @ w1 + b1, approximate=False)
    ffn = h @ w2 + b2
    ffn = ln(ffn + glob, g3, bt3)
    return ffn


# ----------------------------------- main -----------------------------------

if __name__ == "__main__":
    B, S, M, D, NH = 2, 8, 8, 32, 4
    hd = D // NH

    key = jax.random.PRNGKey(0)
    kx, kh, kp = jax.random.split(key, 3)

    x = jax.random.normal(kx, (B, S, D), jnp.float32)
    hidden = jax.random.normal(kh, (B, M, D), jnp.float32)
    cos, sin = make_rope(S, hd)

    # additive masks: 0 = attend, -1e9 = masked
    causal = jnp.tril(jnp.ones((S, S), jnp.bool_))
    la_mask = jnp.where(causal, 0.0, -1e9).astype(jnp.float32)
    pad_mask = jnp.zeros((B, 1, M), jnp.float32)   # no padded memory tokens

    params = make_params(kp, D)

    # one-time prep, hoisted out of the per-call path
    prepped = prepare_params(params, NH)
    cos_k, sin_k = prepare_rope(cos, sin)

    out = gpt_block(x, hidden, cos_k, sin_k, la_mask, pad_mask, prepped, NH)
    out = jax.block_until_ready(out)
    assert out.shape == (B, S, D)
    assert bool(jnp.isfinite(out).all())

    # loose tolerance: kernel uses bf16 MXU inputs + approximate reciprocal
    ref = reference_gpt_block(x, hidden, cos, sin, la_mask, pad_mask, params, NH)
    max_err = float(jnp.max(jnp.abs(out - ref)))
    assert max_err < 0.2, max_err

    print("KERNEL_OK")
</pallas_src>

<mosaic_0001>
module attributes {stable_mosaic.version = 11 : i64} {
  func.func @gpt_block_kernel(%arg0: i32, %arg1: i32, %arg2: memref<1x8x32xf32, #tpu.memory_space<vmem>>, %arg3: memref<1x8x32xf32, #tpu.memory_space<vmem>>, %arg4: memref<1x8x32xf32, #tpu.memory_space<vmem>>, %arg5: memref<8x8xf32, #tpu.memory_space<vmem>>, %arg6: memref<8x8xf32, #tpu.memory_space<vmem>>, %arg7: memref<8x8xf32, #tpu.memory_space<vmem>>, %arg8: memref<1x1x8xf32, #tpu.memory_space<vmem>>, %arg9: memref<32x32xbf16, #tpu.memory_space<vmem>>, %arg10: memref<1x32xf32, #tpu.memory_space<vmem>>, %arg11: memref<32x32xbf16, #tpu.memory_space<vmem>>, %arg12: memref<1x32xf32, #tpu.memory_space<vmem>>, %arg13: memref<32x32xbf16, #tpu.memory_space<vmem>>, %arg14: memref<1x32xf32, #tpu.memory_space<vmem>>, %arg15: memref<32x32xbf16, #tpu.memory_space<vmem>>, %arg16: memref<1x32xf32, #tpu.memory_space<vmem>>, %arg17: memref<32x32xbf16, #tpu.memory_space<vmem>>, %arg18: memref<1x32xf32, #tpu.memory_space<vmem>>, %arg19: memref<32x32xbf16, #tpu.memory_space<vmem>>, %arg20: memref<1x32xf32, #tpu.memory_space<vmem>>, %arg21: memref<32x32xbf16, #tpu.memory_space<vmem>>, %arg22: memref<1x32xf32, #tpu.memory_space<vmem>>, %arg23: memref<32x32xbf16, #tpu.memory_space<vmem>>, %arg24: memref<1x32xf32, #tpu.memory_space<vmem>>, %arg25: memref<32x128xbf16, #tpu.memory_space<vmem>>, %arg26: memref<1x128xf32, #tpu.memory_space<vmem>>, %arg27: memref<128x32xbf16, #tpu.memory_space<vmem>>, %arg28: memref<1x32xf32, #tpu.memory_space<vmem>>, %arg29: memref<1x32xf32, #tpu.memory_space<vmem>>, %arg30: memref<1x32xf32, #tpu.memory_space<vmem>>, %arg31: memref<1x32xf32, #tpu.memory_space<vmem>>, %arg32: memref<1x32xf32, #tpu.memory_space<vmem>>, %arg33: memref<1x32xf32, #tpu.memory_space<vmem>>, %arg34: memref<1x32xf32, #tpu.memory_space<vmem>>, %arg35: memref<1x8x32xf32, #tpu.memory_space<vmem>>) attributes {dimension_semantics = [#tpu.dimension_semantics<parallel>, #tpu.dimension_semantics<parallel>], iteration_bounds = array<i64: 2, 1>, scalar_prefetch = 0 : i64, scratch_operands = 0 : i64, tpu.core_type = #tpu.core_type<tc>, window_params = [{transform_indices = @transform_0, window_bounds = array<i64: 1, 8, 32>}, {transform_indices = @transform_1, window_bounds = array<i64: 1, 8, 32>}, {transform_indices = @transform_2, window_bounds = array<i64: 1, 8, 32>}, {pipeline_mode = #tpu.pipeline_mode<synchronous>, transform_indices = @transform_3, window_bounds = array<i64: 8, 8>}, {pipeline_mode = #tpu.pipeline_mode<synchronous>, transform_indices = @transform_4, window_bounds = array<i64: 8, 8>}, {transform_indices = @transform_5, window_bounds = array<i64: 8, 8>}, {transform_indices = @transform_6, window_bounds = array<i64: 1, 1, 8>}, {pipeline_mode = #tpu.pipeline_mode<synchronous>, transform_indices = @transform_7, window_bounds = array<i64: 32, 32>}, {pipeline_mode = #tpu.pipeline_mode<synchronous>, transform_indices = @transform_8, window_bounds = array<i64: 1, 32>}, {pipeline_mode = #tpu.pipeline_mode<synchronous>, transform_indices = @transform_9, window_bounds = array<i64: 32, 32>}, {pipeline_mode = #tpu.pipeline_mode<synchronous>, transform_indices = @transform_10, window_bounds = array<i64: 1, 32>}, {pipeline_mode = #tpu.pipeline_mode<synchronous>, transform_indices = @transform_11, window_bounds = array<i64: 32, 32>}, {pipeline_mode = #tpu.pipeline_mode<synchronous>, transform_indices = @transform_12, window_bounds = array<i64: 1, 32>}, {pipeline_mode = #tpu.pipeline_mode<synchronous>, transform_indices = @transform_13, window_bounds = array<i64: 32, 32>}, {pipeline_mode = #tpu.pipeline_mode<synchronous>, transform_indices = @transform_14, window_bounds = array<i64: 1, 32>}, {pipeline_mode = #tpu.pipeline_mode<synchronous>, transform_indices = @transform_15, window_bounds = array<i64: 32, 32>}, {pipeline_mode = #tpu.pipeline_mode<synchronous>, transform_indices = @transform_16, window_bounds = array<i64: 1, 32>}, {pipeline_mode = #tpu.pipeline_mode<synchronous>, transform_indices = @transform_17, window_bounds = array<i64: 32, 32>}, {pipeline_mode = #tpu.pipeline_mode<synchronous>, transform_indices = @transform_18, window_bounds = array<i64: 1, 32>}, {pipeline_mode = #tpu.pipeline_mode<synchronous>, transform_indices = @transform_19, window_bounds = array<i64: 32, 32>}, {pipeline_mode = #tpu.pipeline_mode<synchronous>, transform_indices = @transform_20, window_bounds = array<i64: 1, 32>}, {pipeline_mode = #tpu.pipeline_mode<synchronous>, transform_indices = @transform_21, window_bounds = array<i64: 32, 32>}, {pipeline_mode = #tpu.pipeline_mode<synchronous>, transform_indices = @transform_22, window_bounds = array<i64: 1, 32>}, {pipeline_mode = #tpu.pipeline_mode<synchronous>, transform_indices = @transform_23, window_bounds = array<i64: 32, 128>}, {pipeline_mode = #tpu.pipeline_mode<synchronous>, transform_indices = @transform_24, window_bounds = array<i64: 1, 128>}, {pipeline_mode = #tpu.pipeline_mode<synchronous>, transform_indices = @transform_25, window_bounds = array<i64: 128, 32>}, {pipeline_mode = #tpu.pipeline_mode<synchronous>, transform_indices = @transform_26, window_bounds = array<i64: 1, 32>}, {pipeline_mode = #tpu.pipeline_mode<synchronous>, transform_indices = @transform_27, window_bounds = array<i64: 1, 32>}, {pipeline_mode = #tpu.pipeline_mode<synchronous>, transform_indices = @transform_28, window_bounds = array<i64: 1, 32>}, {pipeline_mode = #tpu.pipeline_mode<synchronous>, transform_indices = @transform_29, window_bounds = array<i64: 1, 32>}, {pipeline_mode = #tpu.pipeline_mode<synchronous>, transform_indices = @transform_30, window_bounds = array<i64: 1, 32>}, {pipeline_mode = #tpu.pipeline_mode<synchronous>, transform_indices = @transform_31, window_bounds = array<i64: 1, 32>}, {pipeline_mode = #tpu.pipeline_mode<synchronous>, transform_indices = @transform_32, window_bounds = array<i64: 1, 32>}, {transform_indices = @transform_33, window_bounds = array<i64: 1, 8, 32>}]} {
    %c0 = arith.constant 0 : index
    %c0_0 = arith.constant 0 : index
    %c0_1 = arith.constant 0 : index
    %0 = vector.load %arg2[%c0, %c0_0, %c0_1] : memref<1x8x32xf32, #tpu.memory_space<vmem>>, vector<1x8x32xf32>
    %1 = vector.shape_cast %0 : vector<1x8x32xf32> to vector<8x32xf32>
    %c0_2 = arith.constant 0 : index
    %c0_3 = arith.constant 0 : index
    %2 = vector.load %arg5[%c0_2, %c0_3] : memref<8x8xf32, #tpu.memory_space<vmem>>, vector<8x8xf32>
    %c0_4 = arith.constant 0 : index
    %c0_5 = arith.constant 0 : index
    %3 = vector.load %arg6[%c0_4, %c0_5] : memref<8x8xf32, #tpu.memory_space<vmem>>, vector<8x8xf32>
    %c0_6 = arith.constant 0 : index
    %c0_7 = arith.constant 0 : index
    %4 = vector.load %arg7[%c0_6, %c0_7] : memref<8x8xf32, #tpu.memory_space<vmem>>, vector<8x8xf32>
    %5 = arith.truncf %1 : vector<8x32xf32> to vector<8x32xbf16>
    %c0_8 = arith.constant 0 : index
    %c0_9 = arith.constant 0 : index
    %6 = vector.load %arg9[%c0_8, %c0_9] : memref<32x32xbf16, #tpu.memory_space<vmem>>, vector<32x32xbf16>
    %cst = arith.constant dense<0.000000e+00> : vector<8x32xf32>
    %7 = tpu.matmul %5, %6, %cst {dimension_numbers = #tpu.dot_dimension_numbers<[1], [0], [0], [1], [0, 0, 1, 1], [], []>} : vector<8x32xbf16>, vector<32x32xbf16>, vector<8x32xf32> -> vector<8x32xf32>
    %c0_10 = arith.constant 0 : index
    %c0_11 = arith.constant 0 : index
    %8 = vector.load %arg10[%c0_10, %c0_11] : memref<1x32xf32, #tpu.memory_space<vmem>>, vector<1x32xf32>
    %9 = vector.broadcast %8 : vector<1x32xf32> to vector<8x32xf32>
    %10 = arith.addf %7, %9 : vector<8x32xf32>
    %11 = vector.extract_strided_slice %10 {offsets = [0, 0], sizes = [8, 8], strides = [1, 1]} : vector<8x32xf32> to vector<8x8xf32>
    %12 = vector.extract_strided_slice %10 {offsets = [0, 8], sizes = [8, 8], strides = [1, 1]} : vector<8x32xf32> to vector<8x8xf32>
    %13 = vector.extract_strided_slice %10 {offsets = [0, 16], sizes = [8, 8], strides = [1, 1]} : vector<8x32xf32> to vector<8x8xf32>
    %14 = vector.extract_strided_slice %10 {offsets = [0, 24], sizes = [8, 8], strides = [1, 1]} : vector<8x32xf32> to vector<8x8xf32>
    %15 = vector.shape_cast %11 : vector<8x8xf32> to vector<1x8x8xf32>
    %16 = vector.shape_cast %12 : vector<8x8xf32> to vector<1x8x8xf32>
    %17 = vector.shape_cast %13 : vector<8x8xf32> to vector<1x8x8xf32>
    %18 = vector.shape_cast %14 : vector<8x8xf32> to vector<1x8x8xf32>
    %19 = tpu.concatenate %15, %16, %17, %18 in 0 : vector<1x8x8xf32>, vector<1x8x8xf32>, vector<1x8x8xf32>, vector<1x8x8xf32> -> vector<4x8x8xf32>
    %20 = vector.shape_cast %2 : vector<8x8xf32> to vector<1x8x8xf32>
    %21 = vector.broadcast %20 : vector<1x8x8xf32> to vector<4x8x8xf32>
    %22 = arith.mulf %19, %21 : vector<4x8x8xf32>
    %23 = vector.extract_strided_slice %19 {offsets = [0, 0, 4], sizes = [4, 8, 4], strides = [1, 1, 1]} : vector<4x8x8xf32> to vector<4x8x4xf32>
    %24 = vector.extract_strided_slice %19 {offsets = [0, 0, 0], sizes = [4, 8, 4], strides = [1, 1, 1]} : vector<4x8x8xf32> to vector<4x8x4xf32>
    %25 = tpu.concatenate %23, %24 in 2 : vector<4x8x4xf32>, vector<4x8x4xf32> -> vector<4x8x8xf32>
    %26 = vector.shape_cast %3 : vector<8x8xf32> to vector<1x8x8xf32>
    %27 = vector.broadcast %26 : vector<1x8x8xf32> to vector<4x8x8xf32>
    %28 = arith.mulf %25, %27 : vector<4x8x8xf32>
    %29 = arith.addf %22, %28 : vector<4x8x8xf32>
    %cst_12 = arith.constant -1.000000e+30 : f32
    %30 = vector.broadcast %cst_12 : f32 to vector<4x8x1xf32>
    %cst_13 = arith.constant 0.000000e+00 : f32
    %31 = vector.broadcast %cst_13 : f32 to vector<4x8x1xf32>
    %cst_14 = arith.constant 0.000000e+00 : f32
    %32 = vector.broadcast %cst_14 : f32 to vector<4x8x8xf32>
    %c0_15 = arith.constant 0 : index
    %c0_16 = arith.constant 0 : index
    %c0_17 = arith.constant 0 : index
    %33 = vector.load %arg3[%c0_15, %c0_16, %c0_17] : memref<1x8x32xf32, #tpu.memory_space<vmem>>, vector<1x8x32xf32>
    %34 = vector.shape_cast %33 : vector<1x8x32xf32> to vector<8x32xf32>
    %35 = arith.truncf %34 : vector<8x32xf32> to vector<8x32xbf16>
    %c0_18 = arith.constant 0 : index
    %c0_19 = arith.constant 0 : index
    %36 = vector.load %arg11[%c0_18, %c0_19] : memref<32x32xbf16, #tpu.memory_space<vmem>>, vector<32x32xbf16>
    %cst_20 = arith.constant dense<0.000000e+00> : vector<8x32xf32>
    %37 = tpu.matmul %35, %36, %cst_20 {dimension_numbers = #tpu.dot_dimension_numbers<[1], [0], [0], [1], [0, 0, 1, 1], [], []>} : vector<8x32xbf16>, vector<32x32xbf16>, vector<8x32xf32> -> vector<8x32xf32>
    %c0_21 = arith.constant 0 : index
    %c0_22 = arith.constant 0 : index
    %38 = vector.load %arg12[%c0_21, %c0_22] : memref<1x32xf32, #tpu.memory_space<vmem>>, vector<1x32xf32>
    %39 = vector.broadcast %38 : vector<1x32xf32> to vector<8x32xf32>
    %40 = arith.addf %37, %39 : vector<8x32xf32>
    %41 = arith.truncf %34 : vector<8x32xf32> to vector<8x32xbf16>
    %c0_23 = arith.constant 0 : index
    %c0_24 = arith.constant 0 : index
    %42 = vector.load %arg13[%c0_23, %c0_24] : memref<32x32xbf16, #tpu.memory_space<vmem>>, vector<32x32xbf16>
    %cst_25 = arith.constant dense<0.000000e+00> : vector<8x32xf32>
    %43 = tpu.matmul %41, %42, %cst_25 {dimension_numbers = #tpu.dot_dimension_numbers<[1], [0], [0], [1], [0, 0, 1, 1], [], []>} : vector<8x32xbf16>, vector<32x32xbf16>, vector<8x32xf32> -> vector<8x32xf32>
    %c0_26 = arith.constant 0 : index
    %c0_27 = arith.constant 0 : index
    %44 = vector.load %arg14[%c0_26, %c0_27] : memref<1x32xf32, #tpu.memory_space<vmem>>, vector<1x32xf32>
    %45 = vector.broadcast %44 : vector<1x32xf32> to vector<8x32xf32>
    %46 = arith.addf %43, %45 : vector<8x32xf32>
    %47 = vector.extract_strided_slice %40 {offsets = [0, 0], sizes = [8, 8], strides = [1, 1]} : vector<8x32xf32> to vector<8x8xf32>
    %48 = vector.extract_strided_slice %40 {offsets = [0, 8], sizes = [8, 8], strides = [1, 1]} : vector<8x32xf32> to vector<8x8xf32>
    %49 = vector.extract_strided_slice %40 {offsets = [0, 16], sizes = [8, 8], strides = [1, 1]} : vector<8x32xf32> to vector<8x8xf32>
    %50 = vector.extract_strided_slice %40 {offsets = [0, 24], sizes = [8, 8], strides = [1, 1]} : vector<8x32xf32> to vector<8x8xf32>
    %51 = vector.shape_cast %47 : vector<8x8xf32> to vector<1x8x8xf32>
    %52 = vector.shape_cast %48 : vector<8x8xf32> to vector<1x8x8xf32>
    %53 = vector.shape_cast %49 : vector<8x8xf32> to vector<1x8x8xf32>
    %54 = vector.shape_cast %50 : vector<8x8xf32> to vector<1x8x8xf32>
    %55 = tpu.concatenate %51, %52, %53, %54 in 0 : vector<1x8x8xf32>, vector<1x8x8xf32>, vector<1x8x8xf32>, vector<1x8x8xf32> -> vector<4x8x8xf32>
    %56 = vector.extract_strided_slice %46 {offsets = [0, 0], sizes = [8, 8], strides = [1, 1]} : vector<8x32xf32> to vector<8x8xf32>
    %57 = vector.extract_strided_slice %46 {offsets = [0, 8], sizes = [8, 8], strides = [1, 1]} : vector<8x32xf32> to vector<8x8xf32>
    %58 = vector.extract_strided_slice %46 {offsets = [0, 16], sizes = [8, 8], strides = [1, 1]} : vector<8x32xf32> to vector<8x8xf32>
    %59 = vector.extract_strided_slice %46 {offsets = [0, 24], sizes = [8, 8], strides = [1, 1]} : vector<8x32xf32> to vector<8x8xf32>
    %60 = vector.shape_cast %56 : vector<8x8xf32> to vector<1x8x8xf32>
    %61 = vector.shape_cast %57 : vector<8x8xf32> to vector<1x8x8xf32>
    %62 = vector.shape_cast %58 : vector<8x8xf32> to vector<1x8x8xf32>
    %63 = vector.shape_cast %59 : vector<8x8xf32> to vector<1x8x8xf32>
    %64 = tpu.concatenate %60, %61, %62, %63 in 0 : vector<1x8x8xf32>, vector<1x8x8xf32>, vector<1x8x8xf32>, vector<1x8x8xf32> -> vector<4x8x8xf32>
    %c0_28 = arith.constant 0 : index
    %c0_29 = arith.constant 0 : index
    %65 = vector.load %arg5[%c0_28, %c0_29] : memref<8x8xf32, #tpu.memory_space<vmem>>, vector<8x8xf32>
    %c0_30 = arith.constant 0 : index
    %c0_31 = arith.constant 0 : index
    %66 = vector.load %arg6[%c0_30, %c0_31] : memref<8x8xf32, #tpu.memory_space<vmem>>, vector<8x8xf32>
    %67 = vector.shape_cast %65 : vector<8x8xf32> to vector<1x8x8xf32>
    %68 = vector.broadcast %67 : vector<1x8x8xf32> to vector<4x8x8xf32>
    %69 = arith.mulf %55, %68 : vector<4x8x8xf32>
    %70 = vector.extract_strided_slice %55 {offsets = [0, 0, 4], sizes = [4, 8, 4], strides = [1, 1, 1]} : vector<4x8x8xf32> to vector<4x8x4xf32>
    %71 = vector.extract_strided_slice %55 {offsets = [0, 0, 0], sizes = [4, 8, 4], strides = [1, 1, 1]} : vector<4x8x8xf32> to vector<4x8x4xf32>
    %72 = tpu.concatenate %70, %71 in 2 : vector<4x8x4xf32>, vector<4x8x4xf32> -> vector<4x8x8xf32>
    %73 = vector.shape_cast %66 : vector<8x8xf32> to vector<1x8x8xf32>
    %74 = vector.broadcast %73 : vector<1x8x8xf32> to vector<4x8x8xf32>
    %75 = arith.mulf %72, %74 : vector<4x8x8xf32>
    %76 = arith.addf %69, %75 : vector<4x8x8xf32>
    %77 = arith.truncf %29 : vector<4x8x8xf32> to vector<4x8x8xbf16>
    %78 = arith.truncf %76 : vector<4x8x8xf32> to vector<4x8x8xbf16>
    "tpu.trace_start"() <{level = 10 : i32, message = "hqd,hkd->hqk"}> : () -> ()
    %cst_32 = arith.constant dense<0.000000e+00> : vector<4x8x8xf32>
    %79 = tpu.matmul %77, %78, %cst_32 {dimension_numbers = #tpu.dot_dimension_numbers<[2], [2], [1], [1], [0, 0, 0, 1, 1, 1], [0], [0]>} : vector<4x8x8xbf16>, vector<4x8x8xbf16>, vector<4x8x8xf32> -> vector<4x8x8xf32>
    "tpu.trace_stop"() : () -> ()
    %80 = vector.shape_cast %4 : vector<8x8xf32> to vector<1x8x8xf32>
    %81 = vector.broadcast %80 : vector<1x8x8xf32> to vector<4x8x8xf32>
    %82 = arith.addf %79, %81 : vector<4x8x8xf32>
    %cst_33 = arith.constant dense<0xFF800000> : vector<4x8xf32>
    %83 = vector.multi_reduction <maximumf>, %82, %cst_33 [2] : vector<4x8x8xf32> to vector<4x8xf32>
    %84 = vector.shape_cast %83 : vector<4x8xf32> to vector<4x8x1xf32>
    %85 = arith.maximumf %30, %84 : vector<4x8x1xf32>
    %86 = arith.subf %30, %85 : vector<4x8x1xf32>
    %87 = math.exp %86 : vector<4x8x1xf32>
    %88 = vector.broadcast %85 : vector<4x8x1xf32> to vector<4x8x8xf32>
    %89 = arith.subf %82, %88 : vector<4x8x8xf32>
    %90 = math.exp %89 : vector<4x8x8xf32>
    %91 = arith.mulf %87, %31 : vector<4x8x1xf32>
    %cst_34 = arith.constant dense<0.000000e+00> : vector<4x8xf32>
    %92 = vector.multi_reduction <add>, %90, %cst_34 [2] : vector<4x8x8xf32> to vector<4x8xf32>
    %93 = vector.shape_cast %92 : vector<4x8xf32> to vector<4x8x1xf32>
    %94 = arith.addf %91, %93 : vector<4x8x1xf32>
    %95 = vector.broadcast %87 : vector<4x8x1xf32> to vector<4x8x8xf32>
    %96 = arith.mulf %95, %32 : vector<4x8x8xf32>
    %97 = arith.truncf %90 : vector<4x8x8xf32> to vector<4x8x8xbf16>
    %98 = arith.truncf %64 : vector<4x8x8xf32> to vector<4x8x8xbf16>
    "tpu.trace_start"() <{level = 10 : i32, message = "hqk,hkd->hqd"}> : () -> ()
    %cst_35 = arith.constant dense<0.000000e+00> : vector<4x8x8xf32>
    %99 = tpu.matmul %97, %98, %cst_35 {dimension_numbers = #tpu.dot_dimension_numbers<[2], [1], [1], [2], [0, 0, 0, 1, 1, 2], [0], [0]>} : vector<4x8x8xbf16>, vector<4x8x8xbf16>, vector<4x8x8xf32> -> vector<4x8x8xf32>
    "tpu.trace_stop"() : () -> ()
    %100 = arith.addf %96, %99 : vector<4x8x8xf32>
    %101 = tpu.reciprocal %94 {approx = true} : vector<4x8x1xf32> -> vector<4x8x1xf32>
    %102 = vector.broadcast %101 : vector<4x8x1xf32> to vector<4x8x8xf32>
    %103 = arith.mulf %100, %102 : vector<4x8x8xf32>
    %104 = vector.extract_strided_slice %103 {offsets = [0, 0, 0], sizes = [1, 8, 8], strides = [1, 1, 1]} : vector<4x8x8xf32> to vector<1x8x8xf32>
    %105 = vector.shape_cast %104 : vector<1x8x8xf32> to vector<8x8xf32>
    %106 = vector.extract_strided_slice %103 {offsets = [1, 0, 0], sizes = [1, 8, 8], strides = [1, 1, 1]} : vector<4x8x8xf32> to vector<1x8x8xf32>
    %107 = vector.shape_cast %106 : vector<1x8x8xf32> to vector<8x8xf32>
    %108 = vector.extract_strided_slice %103 {offsets = [2, 0, 0], sizes = [1, 8, 8], strides = [1, 1, 1]} : vector<4x8x8xf32> to vector<1x8x8xf32>
    %109 = vector.shape_cast %108 : vector<1x8x8xf32> to vector<8x8xf32>
    %110 = vector.extract_strided_slice %103 {offsets = [3, 0, 0], sizes = [1, 8, 8], strides = [1, 1, 1]} : vector<4x8x8xf32> to vector<1x8x8xf32>
    %111 = vector.shape_cast %110 : vector<1x8x8xf32> to vector<8x8xf32>
    %112 = tpu.concatenate %105, %107, %109, %111 in 1 : vector<8x8xf32>, vector<8x8xf32>, vector<8x8xf32>, vector<8x8xf32> -> vector<8x32xf32>
    %113 = arith.truncf %112 : vector<8x32xf32> to vector<8x32xbf16>
    %c0_36 = arith.constant 0 : index
    %c0_37 = arith.constant 0 : index
    %114 = vector.load %arg15[%c0_36, %c0_37] : memref<32x32xbf16, #tpu.memory_space<vmem>>, vector<32x32xbf16>
    %cst_38 = arith.constant dense<0.000000e+00> : vector<8x32xf32>
    %115 = tpu.matmul %113, %114, %cst_38 {dimension_numbers = #tpu.dot_dimension_numbers<[1], [0], [0], [1], [0, 0, 1, 1], [], []>} : vector<8x32xbf16>, vector<32x32xbf16>, vector<8x32xf32> -> vector<8x32xf32>
    %c0_39 = arith.constant 0 : index
    %c0_40 = arith.constant 0 : index
    %116 = vector.load %arg16[%c0_39, %c0_40] : memref<1x32xf32, #tpu.memory_space<vmem>>, vector<1x32xf32>
    %117 = vector.broadcast %116 : vector<1x32xf32> to vector<8x32xf32>
    %118 = arith.addf %115, %117 : vector<8x32xf32>
    %119 = arith.addf %118, %1 : vector<8x32xf32>
    %c0_41 = arith.constant 0 : index
    %c0_42 = arith.constant 0 : index
    %120 = vector.load %arg29[%c0_41, %c0_42] : memref<1x32xf32, #tpu.memory_space<vmem>>, vector<1x32xf32>
    %c0_43 = arith.constant 0 : index
    %c0_44 = arith.constant 0 : index
    %121 = vector.load %arg30[%c0_43, %c0_44] : memref<1x32xf32, #tpu.memory_space<vmem>>, vector<1x32xf32>
    %cst_45 = arith.constant dense<0.000000e+00> : vector<8xf32>
    %122 = vector.multi_reduction <add>, %119, %cst_45 [1] : vector<8x32xf32> to vector<8xf32>
    %123 = vector.shape_cast %122 : vector<8xf32> to vector<8x1xf32>
    %cst_46 = arith.constant 3.200000e+01 : f32
    %124 = vector.broadcast %cst_46 : f32 to vector<8x1xf32>
    %125 = arith.divf %123, %124 : vector<8x1xf32>
    %126 = vector.broadcast %125 : vector<8x1xf32> to vector<8x32xf32>
    %127 = arith.subf %119, %126 : vector<8x32xf32>
    %128 = arith.mulf %127, %127 : vector<8x32xf32>
    %cst_47 = arith.constant dense<0.000000e+00> : vector<8xf32>
    %129 = vector.multi_reduction <add>, %128, %cst_47 [1] : vector<8x32xf32> to vector<8xf32>
    %130 = vector.shape_cast %129 : vector<8xf32> to vector<8x1xf32>
    %cst_48 = arith.constant 3.200000e+01 : f32
    %131 = vector.broadcast %cst_48 : f32 to vector<8x1xf32>
    %132 = arith.divf %130, %131 : vector<8x1xf32>
    %133 = vector.broadcast %125 : vector<8x1xf32> to vector<8x32xf32>
    %134 = arith.subf %119, %133 : vector<8x32xf32>
    %cst_49 = arith.constant 9.99999974E-6 : f32
    %135 = vector.broadcast %cst_49 : f32 to vector<8x1xf32>
    %136 = arith.addf %132, %135 : vector<8x1xf32>
    %137 = math.rsqrt %136 : vector<8x1xf32>
    %138 = vector.broadcast %137 : vector<8x1xf32> to vector<8x32xf32>
    %139 = arith.mulf %134, %138 : vector<8x32xf32>
    %140 = vector.broadcast %120 : vector<1x32xf32> to vector<8x32xf32>
    %141 = arith.mulf %139, %140 : vector<8x32xf32>
    %142 = vector.broadcast %121 : vector<1x32xf32> to vector<8x32xf32>
    %143 = arith.addf %141, %142 : vector<8x32xf32>
    %c0_50 = arith.constant 0 : index
    %c0_51 = arith.constant 0 : index
    %c0_52 = arith.constant 0 : index
    %144 = vector.load %arg8[%c0_50, %c0_51, %c0_52] : memref<1x1x8xf32, #tpu.memory_space<vmem>>, vector<1x1x8xf32>
    %145 = vector.shape_cast %144 : vector<1x1x8xf32> to vector<1x8xf32>
    %146 = arith.truncf %143 : vector<8x32xf32> to vector<8x32xbf16>
    %c0_53 = arith.constant 0 : index
    %c0_54 = arith.constant 0 : index
    %147 = vector.load %arg17[%c0_53, %c0_54] : memref<32x32xbf16, #tpu.memory_space<vmem>>, vector<32x32xbf16>
    %cst_55 = arith.constant dense<0.000000e+00> : vector<8x32xf32>
    %148 = tpu.matmul %146, %147, %cst_55 {dimension_numbers = #tpu.dot_dimension_numbers<[1], [0], [0], [1], [0, 0, 1, 1], [], []>} : vector<8x32xbf16>, vector<32x32xbf16>, vector<8x32xf32> -> vector<8x32xf32>
    %c0_56 = arith.constant 0 : index
    %c0_57 = arith.constant 0 : index
    %149 = vector.load %arg18[%c0_56, %c0_57] : memref<1x32xf32, #tpu.memory_space<vmem>>, vector<1x32xf32>
    %150 = vector.broadcast %149 : vector<1x32xf32> to vector<8x32xf32>
    %151 = arith.addf %148, %150 : vector<8x32xf32>
    %152 = vector.extract_strided_slice %151 {offsets = [0, 0], sizes = [8, 8], strides = [1, 1]} : vector<8x32xf32> to vector<8x8xf32>
    %153 = vector.extract_strided_slice %151 {offsets = [0, 8], sizes = [8, 8], strides = [1, 1]} : vector<8x32xf32> to vector<8x8xf32>
    %154 = vector.extract_strided_slice %151 {offsets = [0, 16], sizes = [8, 8], strides = [1, 1]} : vector<8x32xf32> to vector<8x8xf32>
    %155 = vector.extract_strided_slice %151 {offsets = [0, 24], sizes = [8, 8], strides = [1, 1]} : vector<8x32xf32> to vector<8x8xf32>
    %156 = vector.shape_cast %152 : vector<8x8xf32> to vector<1x8x8xf32>
    %157 = vector.shape_cast %153 : vector<8x8xf32> to vector<1x8x8xf32>
    %158 = vector.shape_cast %154 : vector<8x8xf32> to vector<1x8x8xf32>
    %159 = vector.shape_cast %155 : vector<8x8xf32> to vector<1x8x8xf32>
    %160 = tpu.concatenate %156, %157, %158, %159 in 0 : vector<1x8x8xf32>, vector<1x8x8xf32>, vector<1x8x8xf32>, vector<1x8x8xf32> -> vector<4x8x8xf32>
    %cst_58 = arith.constant -1.000000e+30 : f32
    %161 = vector.broadcast %cst_58 : f32 to vector<4x8x1xf32>
    %cst_59 = arith.constant 0.000000e+00 : f32
    %162 = vector.broadcast %cst_59 : f32 to vector<4x8x1xf32>
    %cst_60 = arith.constant 0.000000e+00 : f32
    %163 = vector.broadcast %cst_60 : f32 to vector<4x8x8xf32>
    %c0_61 = arith.constant 0 : index
    %c0_62 = arith.constant 0 : index
    %c0_63 = arith.constant 0 : index
    %164 = vector.load %arg4[%c0_61, %c0_62, %c0_63] : memref<1x8x32xf32, #tpu.memory_space<vmem>>, vector<1x8x32xf32>
    %165 = vector.shape_cast %164 : vector<1x8x32xf32> to vector<8x32xf32>
    %166 = arith.truncf %165 : vector<8x32xf32> to vector<8x32xbf16>
    %c0_64 = arith.constant 0 : index
    %c0_65 = arith.constant 0 : index
    %167 = vector.load %arg19[%c0_64, %c0_65] : memref<32x32xbf16, #tpu.memory_space<vmem>>, vector<32x32xbf16>
    %cst_66 = arith.constant dense<0.000000e+00> : vector<8x32xf32>
    %168 = tpu.matmul %166, %167, %cst_66 {dimension_numbers = #tpu.dot_dimension_numbers<[1], [0], [0], [1], [0, 0, 1, 1], [], []>} : vector<8x32xbf16>, vector<32x32xbf16>, vector<8x32xf32> -> vector<8x32xf32>
    %c0_67 = arith.constant 0 : index
    %c0_68 = arith.constant 0 : index
    %169 = vector.load %arg20[%c0_67, %c0_68] : memref<1x32xf32, #tpu.memory_space<vmem>>, vector<1x32xf32>
    %170 = vector.broadcast %169 : vector<1x32xf32> to vector<8x32xf32>
    %171 = arith.addf %168, %170 : vector<8x32xf32>
    %172 = arith.truncf %165 : vector<8x32xf32> to vector<8x32xbf16>
    %c0_69 = arith.constant 0 : index
    %c0_70 = arith.constant 0 : index
    %173 = vector.load %arg21[%c0_69, %c0_70] : memref<32x32xbf16, #tpu.memory_space<vmem>>, vector<32x32xbf16>
    %cst_71 = arith.constant dense<0.000000e+00> : vector<8x32xf32>
    %174 = tpu.matmul %172, %173, %cst_71 {dimension_numbers = #tpu.dot_dimension_numbers<[1], [0], [0], [1], [0, 0, 1, 1], [], []>} : vector<8x32xbf16>, vector<32x32xbf16>, vector<8x32xf32> -> vector<8x32xf32>
    %c0_72 = arith.constant 0 : index
    %c0_73 = arith.constant 0 : index
    %175 = vector.load %arg22[%c0_72, %c0_73] : memref<1x32xf32, #tpu.memory_space<vmem>>, vector<1x32xf32>
    %176 = vector.broadcast %175 : vector<1x32xf32> to vector<8x32xf32>
    %177 = arith.addf %174, %176 : vector<8x32xf32>
    %178 = vector.extract_strided_slice %171 {offsets = [0, 0], sizes = [8, 8], strides = [1, 1]} : vector<8x32xf32> to vector<8x8xf32>
    %179 = vector.extract_strided_slice %171 {offsets = [0, 8], sizes = [8, 8], strides = [1, 1]} : vector<8x32xf32> to vector<8x8xf32>
    %180 = vector.extract_strided_slice %171 {offsets = [0, 16], sizes = [8, 8], strides = [1, 1]} : vector<8x32xf32> to vector<8x8xf32>
    %181 = vector.extract_strided_slice %171 {offsets = [0, 24], sizes = [8, 8], strides = [1, 1]} : vector<8x32xf32> to vector<8x8xf32>
    %182 = vector.shape_cast %178 : vector<8x8xf32> to vector<1x8x8xf32>
    %183 = vector.shape_cast %179 : vector<8x8xf32> to vector<1x8x8xf32>
    %184 = vector.shape_cast %180 : vector<8x8xf32> to vector<1x8x8xf32>
    %185 = vector.shape_cast %181 : vector<8x8xf32> to vector<1x8x8xf32>
    %186 = tpu.concatenate %182, %183, %184, %185 in 0 : vector<1x8x8xf32>, vector<1x8x8xf32>, vector<1x8x8xf32>, vector<1x8x8xf32> -> vector<4x8x8xf32>
    %187 = vector.extract_strided_slice %177 {offsets = [0, 0], sizes = [8, 8], strides = [1, 1]} : vector<8x32xf32> to vector<8x8xf32>
    %188 = vector.extract_strided_slice %177 {offsets = [0, 8], sizes = [8, 8], strides = [1, 1]} : vector<8x32xf32> to vector<8x8xf32>
    %189 = vector.extract_strided_slice %177 {offsets = [0, 16], sizes = [8, 8], strides = [1, 1]} : vector<8x32xf32> to vector<8x8xf32>
    %190 = vector.extract_strided_slice %177 {offsets = [0, 24], sizes = [8, 8], strides = [1, 1]} : vector<8x32xf32> to vector<8x8xf32>
    %191 = vector.shape_cast %187 : vector<8x8xf32> to vector<1x8x8xf32>
    %192 = vector.shape_cast %188 : vector<8x8xf32> to vector<1x8x8xf32>
    %193 = vector.shape_cast %189 : vector<8x8xf32> to vector<1x8x8xf32>
    %194 = vector.shape_cast %190 : vector<8x8xf32> to vector<1x8x8xf32>
    %195 = tpu.concatenate %191, %192, %193, %194 in 0 : vector<1x8x8xf32>, vector<1x8x8xf32>, vector<1x8x8xf32>, vector<1x8x8xf32> -> vector<4x8x8xf32>
    %196 = arith.truncf %160 : vector<4x8x8xf32> to vector<4x8x8xbf16>
    %197 = arith.truncf %186 : vector<4x8x8xf32> to vector<4x8x8xbf16>
    "tpu.trace_start"() <{level = 10 : i32, message = "hqd,hkd->hqk"}> : () -> ()
    %cst_74 = arith.constant dense<0.000000e+00> : vector<4x8x8xf32>
    %198 = tpu.matmul %196, %197, %cst_74 {dimension_numbers = #tpu.dot_dimension_numbers<[2], [2], [1], [1], [0, 0, 0, 1, 1, 1], [0], [0]>} : vector<4x8x8xbf16>, vector<4x8x8xbf16>, vector<4x8x8xf32> -> vector<4x8x8xf32>
    "tpu.trace_stop"() : () -> ()
    %199 = vector.shape_cast %145 : vector<1x8xf32> to vector<1x1x8xf32>
    %200 = vector.broadcast %199 : vector<1x1x8xf32> to vector<4x8x8xf32>
    %201 = arith.addf %198, %200 : vector<4x8x8xf32>
    %cst_75 = arith.constant dense<0xFF800000> : vector<4x8xf32>
    %202 = vector.multi_reduction <maximumf>, %201, %cst_75 [2] : vector<4x8x8xf32> to vector<4x8xf32>
    %203 = vector.shape_cast %202 : vector<4x8xf32> to vector<4x8x1xf32>
    %204 = arith.maximumf %161, %203 : vector<4x8x1xf32>
    %205 = arith.subf %161, %204 : vector<4x8x1xf32>
    %206 = math.exp %205 : vector<4x8x1xf32>
    %207 = vector.broadcast %204 : vector<4x8x1xf32> to vector<4x8x8xf32>
    %208 = arith.subf %201, %207 : vector<4x8x8xf32>
    %209 = math.exp %208 : vector<4x8x8xf32>
    %210 = arith.mulf %206, %162 : vector<4x8x1xf32>
    %cst_76 = arith.constant dense<0.000000e+00> : vector<4x8xf32>
    %211 = vector.multi_reduction <add>, %209, %cst_76 [2] : vector<4x8x8xf32> to vector<4x8xf32>
    %212 = vector.shape_cast %211 : vector<4x8xf32> to vector<4x8x1xf32>
    %213 = arith.addf %210, %212 : vector<4x8x1xf32>
    %214 = vector.broadcast %206 : vector<4x8x1xf32> to vector<4x8x8xf32>
    %215 = arith.mulf %214, %163 : vector<4x8x8xf32>
    %216 = arith.truncf %209 : vector<4x8x8xf32> to vector<4x8x8xbf16>
    %217 = arith.truncf %195 : vector<4x8x8xf32> to vector<4x8x8xbf16>
    "tpu.trace_start"() <{level = 10 : i32, message = "hqk,hkd->hqd"}> : () -> ()
    %cst_77 = arith.constant dense<0.000000e+00> : vector<4x8x8xf32>
    %218 = tpu.matmul %216, %217, %cst_77 {dimension_numbers = #tpu.dot_dimension_numbers<[2], [1], [1], [2], [0, 0, 0, 1, 1, 2], [0], [0]>} : vector<4x8x8xbf16>, vector<4x8x8xbf16>, vector<4x8x8xf32> -> vector<4x8x8xf32>
    "tpu.trace_stop"() : () -> ()
    %219 = arith.addf %215, %218 : vector<4x8x8xf32>
    %220 = tpu.reciprocal %213 {approx = true} : vector<4x8x1xf32> -> vector<4x8x1xf32>
    %221 = vector.broadcast %220 : vector<4x8x1xf32> to vector<4x8x8xf32>
    %222 = arith.mulf %219, %221 : vector<4x8x8xf32>
    %223 = vector.extract_strided_slice %222 {offsets = [0, 0, 0], sizes = [1, 8, 8], strides = [1, 1, 1]} : vector<4x8x8xf32> to vector<1x8x8xf32>
    %224 = vector.shape_cast %223 : vector<1x8x8xf32> to vector<8x8xf32>
    %225 = vector.extract_strided_slice %222 {offsets = [1, 0, 0], sizes = [1, 8, 8], strides = [1, 1, 1]} : vector<4x8x8xf32> to vector<1x8x8xf32>
    %226 = vector.shape_cast %225 : vector<1x8x8xf32> to vector<8x8xf32>
    %227 = vector.extract_strided_slice %222 {offsets = [2, 0, 0], sizes = [1, 8, 8], strides = [1, 1, 1]} : vector<4x8x8xf32> to vector<1x8x8xf32>
    %228 = vector.shape_cast %227 : vector<1x8x8xf32> to vector<8x8xf32>
    %229 = vector.extract_strided_slice %222 {offsets = [3, 0, 0], sizes = [1, 8, 8], strides = [1, 1, 1]} : vector<4x8x8xf32> to vector<1x8x8xf32>
    %230 = vector.shape_cast %229 : vector<1x8x8xf32> to vector<8x8xf32>
    %231 = tpu.concatenate %224, %226, %228, %230 in 1 : vector<8x8xf32>, vector<8x8xf32>, vector<8x8xf32>, vector<8x8xf32> -> vector<8x32xf32>
    %232 = arith.truncf %231 : vector<8x32xf32> to vector<8x32xbf16>
    %c0_78 = arith.constant 0 : index
    %c0_79 = arith.constant 0 : index
    %233 = vector.load %arg23[%c0_78, %c0_79] : memref<32x32xbf16, #tpu.memory_space<vmem>>, vector<32x32xbf16>
    %cst_80 = arith.constant dense<0.000000e+00> : vector<8x32xf32>
    %234 = tpu.matmul %232, %233, %cst_80 {dimension_numbers = #tpu.dot_dimension_numbers<[1], [0], [0], [1], [0, 0, 1, 1], [], []>} : vector<8x32xbf16>, vector<32x32xbf16>, vector<8x32xf32> -> vector<8x32xf32>
    %c0_81 = arith.constant 0 : index
    %c0_82 = arith.constant 0 : index
    %235 = vector.load %arg24[%c0_81, %c0_82] : memref<1x32xf32, #tpu.memory_space<vmem>>, vector<1x32xf32>
    %236 = vector.broadcast %235 : vector<1x32xf32> to vector<8x32xf32>
    %237 = arith.addf %234, %236 : vector<8x32xf32>
    %238 = arith.addf %237, %143 : vector<8x32xf32>
    %c0_83 = arith.constant 0 : index
    %c0_84 = arith.constant 0 : index
    %239 = vector.load %arg31[%c0_83, %c0_84] : memref<1x32xf32, #tpu.memory_space<vmem>>, vector<1x32xf32>
    %c0_85 = arith.constant 0 : index
    %c0_86 = arith.constant 0 : index
    %240 = vector.load %arg32[%c0_85, %c0_86] : memref<1x32xf32, #tpu.memory_space<vmem>>, vector<1x32xf32>
    %cst_87 = arith.constant dense<0.000000e+00> : vector<8xf32>
    %241 = vector.multi_reduction <add>, %238, %cst_87 [1] : vector<8x32xf32> to vector<8xf32>
    %242 = vector.shape_cast %241 : vector<8xf32> to vector<8x1xf32>
    %cst_88 = arith.constant 3.200000e+01 : f32
    %243 = vector.broadcast %cst_88 : f32 to vector<8x1xf32>
    %244 = arith.divf %242, %243 : vector<8x1xf32>
    %245 = vector.broadcast %244 : vector<8x1xf32> to vector<8x32xf32>
    %246 = arith.subf %238, %245 : vector<8x32xf32>
    %247 = arith.mulf %246, %246 : vector<8x32xf32>
    %cst_89 = arith.constant dense<0.000000e+00> : vector<8xf32>
    %248 = vector.multi_reduction <add>, %247, %cst_89 [1] : vector<8x32xf32> to vector<8xf32>
    %249 = vector.shape_cast %248 : vector<8xf32> to vector<8x1xf32>
    %cst_90 = arith.constant 3.200000e+01 : f32
    %250 = vector.broadcast %cst_90 : f32 to vector<8x1xf32>
    %251 = arith.divf %249, %250 : vector<8x1xf32>
    %252 = vector.broadcast %244 : vector<8x1xf32> to vector<8x32xf32>
    %253 = arith.subf %238, %252 : vector<8x32xf32>
    %cst_91 = arith.constant 9.99999974E-6 : f32
    %254 = vector.broadcast %cst_91 : f32 to vector<8x1xf32>
    %255 = arith.addf %251, %254 : vector<8x1xf32>
    %256 = math.rsqrt %255 : vector<8x1xf32>
    %257 = vector.broadcast %256 : vector<8x1xf32> to vector<8x32xf32>
    %258 = arith.mulf %253, %257 : vector<8x32xf32>
    %259 = vector.broadcast %239 : vector<1x32xf32> to vector<8x32xf32>
    %260 = arith.mulf %258, %259 : vector<8x32xf32>
    %261 = vector.broadcast %240 : vector<1x32xf32> to vector<8x32xf32>
    %262 = arith.addf %260, %261 : vector<8x32xf32>
    %263 = arith.truncf %262 : vector<8x32xf32> to vector<8x32xbf16>
    %cst_92 = arith.constant 0.000000e+00 : f32
    %264 = vector.broadcast %cst_92 : f32 to vector<8x32xf32>
    %c0_93 = arith.constant 0 : index
    %c0_94 = arith.constant 0 : index
    %265 = vector.load %arg25[%c0_93, %c0_94] : memref<32x128xbf16, #tpu.memory_space<vmem>>, vector<32x128xbf16>
    %cst_95 = arith.constant dense<0.000000e+00> : vector<8x128xf32>
    %266 = tpu.matmul %263, %265, %cst_95 {dimension_numbers = #tpu.dot_dimension_numbers<[1], [0], [0], [1], [0, 0, 1, 1], [], []>} : vector<8x32xbf16>, vector<32x128xbf16>, vector<8x128xf32> -> vector<8x128xf32>
    %c0_96 = arith.constant 0 : index
    %c0_97 = arith.constant 0 : index
    %267 = vector.load %arg26[%c0_96, %c0_97] : memref<1x128xf32, #tpu.memory_space<vmem>>, vector<1x128xf32>
    %268 = vector.broadcast %267 : vector<1x128xf32> to vector<8x128xf32>
    %269 = arith.addf %266, %268 : vector<8x128xf32>
    %cst_98 = arith.constant 5.000000e-01 : f32
    %270 = vector.broadcast %cst_98 : f32 to vector<8x128xf32>
    %271 = arith.mulf %270, %269 : vector<8x128xf32>
    %cst_99 = arith.constant 0.707106769 : f32
    %272 = vector.broadcast %cst_99 : f32 to vector<8x128xf32>
    %273 = arith.mulf %269, %272 : vector<8x128xf32>
    %274 = math.erf %273 : vector<8x128xf32>
    %cst_100 = arith.constant 1.000000e+00 : f32
    %275 = vector.broadcast %cst_100 : f32 to vector<8x128xf32>
    %276 = arith.addf %275, %274 : vector<8x128xf32>
    %277 = arith.mulf %271, %276 : vector<8x128xf32>
    %278 = arith.truncf %277 : vector<8x128xf32> to vector<8x128xbf16>
    %c0_101 = arith.constant 0 : index
    %c0_102 = arith.constant 0 : index
    %279 = vector.load %arg27[%c0_101, %c0_102] : memref<128x32xbf16, #tpu.memory_space<vmem>>, vector<128x32xbf16>
    %cst_103 = arith.constant dense<0.000000e+00> : vector<8x32xf32>
    %280 = tpu.matmul %278, %279, %cst_103 {dimension_numbers = #tpu.dot_dimension_numbers<[1], [0], [0], [1], [0, 0, 1, 1], [], []>} : vector<8x128xbf16>, vector<128x32xbf16>, vector<8x32xf32> -> vector<8x32xf32>
    %281 = arith.addf %264, %280 : vector<8x32xf32>
    %c0_104 = arith.constant 0 : index
    %c0_105 = arith.constant 0 : index
    %282 = vector.load %arg28[%c0_104, %c0_105] : memref<1x32xf32, #tpu.memory_space<vmem>>, vector<1x32xf32>
    %283 = vector.broadcast %282 : vector<1x32xf32> to vector<8x32xf32>
    %284 = arith.addf %281, %283 : vector<8x32xf32>
    %285 = arith.addf %284, %262 : vector<8x32xf32>
    %c0_106 = arith.constant 0 : index
    %c0_107 = arith.constant 0 : index
    %286 = vector.load %arg33[%c0_106, %c0_107] : memref<1x32xf32, #tpu.memory_space<vmem>>, vector<1x32xf32>
    %c0_108 = arith.constant 0 : index
    %c0_109 = arith.constant 0 : index
    %287 = vector.load %arg34[%c0_108, %c0_109] : memref<1x32xf32, #tpu.memory_space<vmem>>, vector<1x32xf32>
    %cst_110 = arith.constant dense<0.000000e+00> : vector<8xf32>
    %288 = vector.multi_reduction <add>, %285, %cst_110 [1] : vector<8x32xf32> to vector<8xf32>
    %289 = vector.shape_cast %288 : vector<8xf32> to vector<8x1xf32>
    %cst_111 = arith.constant 3.200000e+01 : f32
    %290 = vector.broadcast %cst_111 : f32 to vector<8x1xf32>
    %291 = arith.divf %289, %290 : vector<8x1xf32>
    %292 = vector.broadcast %291 : vector<8x1xf32> to vector<8x32xf32>
    %293 = arith.subf %285, %292 : vector<8x32xf32>
    %294 = arith.mulf %293, %293 : vector<8x32xf32>
    %cst_112 = arith.constant dense<0.000000e+00> : vector<8xf32>
    %295 = vector.multi_reduction <add>, %294, %cst_112 [1] : vector<8x32xf32> to vector<8xf32>
    %296 = vector.shape_cast %295 : vector<8xf32> to vector<8x1xf32>
    %cst_113 = arith.constant 3.200000e+01 : f32
    %297 = vector.broadcast %cst_113 : f32 to vector<8x1xf32>
    %298 = arith.divf %296, %297 : vector<8x1xf32>
    %299 = vector.broadcast %291 : vector<8x1xf32> to vector<8x32xf32>
    %300 = arith.subf %285, %299 : vector<8x32xf32>
    %cst_114 = arith.constant 9.99999974E-6 : f32
    %301 = vector.broadcast %cst_114 : f32 to vector<8x1xf32>
    %302 = arith.addf %298, %301 : vector<8x1xf32>
    %303 = math.rsqrt %302 : vector<8x1xf32>
    %304 = vector.broadcast %303 : vector<8x1xf32> to vector<8x32xf32>
    %305 = arith.mulf %300, %304 : vector<8x32xf32>
    %306 = vector.broadcast %286 : vector<1x32xf32> to vector<8x32xf32>
    %307 = arith.mulf %305, %306 : vector<8x32xf32>
    %308 = vector.broadcast %287 : vector<1x32xf32> to vector<8x32xf32>
    %309 = arith.addf %307, %308 : vector<8x32xf32>
    %c0_115 = arith.constant 0 : index
    %c0_116 = arith.constant 0 : index
    %c0_117 = arith.constant 0 : index
    %310 = vector.load %arg35[%c0_115, %c0_116, %c0_117] : memref<1x8x32xf32, #tpu.memory_space<vmem>>, vector<1x8x32xf32>
    %311 = vector.shape_cast %310 : vector<1x8x32xf32> to vector<8x32xf32>
    %312 = vector.shape_cast %309 : vector<8x32xf32> to vector<1x8x32xf32>
    tpu.vector_store %arg35[%c0_115, %c0_116, %c0_117], %312 {strides = array<i32>} : memref<1x8x32xf32, #tpu.memory_space<vmem>>, vector<1x8x32xf32>,
    return
  }
  func.func @transform_0(%arg0: i32, %arg1: i32) -> (i32, i32, i32) {
    %c0_i32 = arith.constant 0 : i32
    %c0_i32_0 = arith.constant 0 : i32
    return %arg0, %arg1, %c0_i32 : i32, i32, i32
  }
  func.func @transform_1(%arg0: i32, %arg1: i32) -> (i32, i32, i32) {
    %c0_i32 = arith.constant 0 : i32
    %c0_i32_0 = arith.constant 0 : i32
    %c0_i32_1 = arith.constant 0 : i32
    return %arg0, %c0_i32, %c0_i32_0 : i32, i32, i32
  }
  func.func @transform_2(%arg0: i32, %arg1: i32) -> (i32, i32, i32) {
    %c0_i32 = arith.constant 0 : i32
    %c0_i32_0 = arith.constant 0 : i32
    %c0_i32_1 = arith.constant 0 : i32
    return %arg0, %c0_i32, %c0_i32_0 : i32, i32, i32
  }
  func.func @transform_3(%arg0: i32, %arg1: i32) -> (i32, i32) {
    %c0_i32 = arith.constant 0 : i32
    %c0_i32_0 = arith.constant 0 : i32
    %c0_i32_1 = arith.constant 0 : i32
    return %c0_i32, %c0_i32_0 : i32, i32
  }
  func.func @transform_4(%arg0: i32, %arg1: i32) -> (i32, i32) {
    %c0_i32 = arith.constant 0 : i32
    %c0_i32_0 = arith.constant 0 : i32
    %c0_i32_1 = arith.constant 0 : i32
    return %c0_i32, %c0_i32_0 : i32, i32
  }
  func.func @transform_5(%arg0: i32, %arg1: i32) -> (i32, i32) {
    %c0_i32 = arith.constant 0 : i32
    %c0_i32_0 = arith.constant 0 : i32
    return %arg1, %c0_i32 : i32, i32
  }
  func.func @transform_6(%arg0: i32, %arg1: i32) -> (i32, i32, i32) {
    %c0_i32 = arith.constant 0 : i32
    %c0_i32_0 = arith.constant 0 : i32
    %c0_i32_1 = arith.constant 0 : i32
    return %arg0, %c0_i32, %c0_i32_0 : i32, i32, i32
  }
  func.func @transform_7(%arg0: i32, %arg1: i32) -> (i32, i32) {
    %c0_i32 = arith.constant 0 : i32
    %c0_i32_0 = arith.constant 0 : i32
    %c0_i32_1 = arith.constant 0 : i32
    return %c0_i32, %c0_i32_0 : i32, i32
  }
  func.func @transform_8(%arg0: i32, %arg1: i32) -> (i32, i32) {
    %c0_i32 = arith.constant 0 : i32
    %c0_i32_0 = arith.constant 0 : i32
    %c0_i32_1 = arith.constant 0 : i32
    return %c0_i32, %c0_i32_0 : i32, i32
  }
  func.func @transform_9(%arg0: i32, %arg1: i32) -> (i32, i32) {
    %c0_i32 = arith.constant 0 : i32
    %c0_i32_0 = arith.constant 0 : i32
    %c0_i32_1 = arith.constant 0 : i32
    return %c0_i32, %c0_i32_0 : i32, i32
  }
  func.func @transform_10(%arg0: i32, %arg1: i32) -> (i32, i32) {
    %c0_i32 = arith.constant 0 : i32
    %c0_i32_0 = arith.constant 0 : i32
    %c0_i32_1 = arith.constant 0 : i32
    return %c0_i32, %c0_i32_0 : i32, i32
  }
  func.func @transform_11(%arg0: i32, %arg1: i32) -> (i32, i32) {
    %c0_i32 = arith.constant 0 : i32
    %c0_i32_0 = arith.constant 0 : i32
    %c0_i32_1 = arith.constant 0 : i32
    return %c0_i32, %c0_i32_0 : i32, i32
  }
  func.func @transform_12(%arg0: i32, %arg1: i32) -> (i32, i32) {
    %c0_i32 = arith.constant 0 : i32
    %c0_i32_0 = arith.constant 0 : i32
    %c0_i32_1 = arith.constant 0 : i32
    return %c0_i32, %c0_i32_0 : i32, i32
  }
  func.func @transform_13(%arg0: i32, %arg1: i32) -> (i32, i32) {
    %c0_i32 = arith.constant 0 : i32
    %c0_i32_0 = arith.constant 0 : i32
    %c0_i32_1 = arith.constant 0 : i32
    return %c0_i32, %c0_i32_0 : i32, i32
  }
  func.func @transform_14(%arg0: i32, %arg1: i32) -> (i32, i32) {
    %c0_i32 = arith.constant 0 : i32
    %c0_i32_0 = arith.constant 0 : i32
    %c0_i32_1 = arith.constant 0 : i32
    return %c0_i32, %c0_i32_0 : i32, i32
  }
  func.func @transform_15(%arg0: i32, %arg1: i32) -> (i32, i32) {
    %c0_i32 = arith.constant 0 : i32
    %c0_i32_0 = arith.constant 0 : i32
    %c0_i32_1 = arith.constant 0 : i32
    return %c0_i32, %c0_i32_0 : i32, i32
  }
  func.func @transform_16(%arg0: i32, %arg1: i32) -> (i32, i32) {
    %c0_i32 = arith.constant 0 : i32
    %c0_i32_0 = arith.constant 0 : i32
    %c0_i32_1 = arith.constant 0 : i32
    return %c0_i32, %c0_i32_0 : i32, i32
  }
  func.func @transform_17(%arg0: i32, %arg1: i32) -> (i32, i32) {
    %c0_i32 = arith.constant 0 : i32
    %c0_i32_0 = arith.constant 0 : i32
    %c0_i32_1 = arith.constant 0 : i32
    return %c0_i32, %c0_i32_0 : i32, i32
  }
  func.func @transform_18(%arg0: i32, %arg1: i32) -> (i32, i32) {
    %c0_i32 = arith.constant 0 : i32
    %c0_i32_0 = arith.constant 0 : i32
    %c0_i32_1 = arith.constant 0 : i32
    return %c0_i32, %c0_i32_0 : i32, i32
  }
  func.func @transform_19(%arg0: i32, %arg1: i32) -> (i32, i32) {
    %c0_i32 = arith.constant 0 : i32
    %c0_i32_0 = arith.constant 0 : i32
    %c0_i32_1 = arith.constant 0 : i32
    return %c0_i32, %c0_i32_0 : i32, i32
  }
  func.func @transform_20(%arg0: i32, %arg1: i32) -> (i32, i32) {
    %c0_i32 = arith.constant 0 : i32
    %c0_i32_0 = arith.constant 0 : i32
    %c0_i32_1 = arith.constant 0 : i32
    return %c0_i32, %c0_i32_0 : i32, i32
  }
  func.func @transform_21(%arg0: i32, %arg1: i32) -> (i32, i32) {
    %c0_i32 = arith.constant 0 : i32
    %c0_i32_0 = arith.constant 0 : i32
    %c0_i32_1 = arith.constant 0 : i32
    return %c0_i32, %c0_i32_0 : i32, i32
  }
  func.func @transform_22(%arg0: i32, %arg1: i32) -> (i32, i32) {
    %c0_i32 = arith.constant 0 : i32
    %c0_i32_0 = arith.constant 0 : i32
    %c0_i32_1 = arith.constant 0 : i32
    return %c0_i32, %c0_i32_0 : i32, i32
  }
  func.func @transform_23(%arg0: i32, %arg1: i32) -> (i32, i32) {
    %c0_i32 = arith.constant 0 : i32
    %c0_i32_0 = arith.constant 0 : i32
    %c0_i32_1 = arith.constant 0 : i32
    return %c0_i32, %c0_i32_0 : i32, i32
  }
  func.func @transform_24(%arg0: i32, %arg1: i32) -> (i32, i32) {
    %c0_i32 = arith.constant 0 : i32
    %c0_i32_0 = arith.constant 0 : i32
    %c0_i32_1 = arith.constant 0 : i32
    return %c0_i32, %c0_i32_0 : i32, i32
  }
  func.func @transform_25(%arg0: i32, %arg1: i32) -> (i32, i32) {
    %c0_i32 = arith.constant 0 : i32
    %c0_i32_0 = arith.constant 0 : i32
    %c0_i32_1 = arith.constant 0 : i32
    return %c0_i32, %c0_i32_0 : i32, i32
  }
  func.func @transform_26(%arg0: i32, %arg1: i32) -> (i32, i32) {
    %c0_i32 = arith.constant 0 : i32
    %c0_i32_0 = arith.constant 0 : i32
    %c0_i32_1 = arith.constant 0 : i32
    return %c0_i32, %c0_i32_0 : i32, i32
  }
  func.func @transform_27(%arg0: i32, %arg1: i32) -> (i32, i32) {
    %c0_i32 = arith.constant 0 : i32
    %c0_i32_0 = arith.constant 0 : i32
    %c0_i32_1 = arith.constant 0 : i32
    return %c0_i32, %c0_i32_0 : i32, i32
  }
  func.func @transform_28(%arg0: i32, %arg1: i32) -> (i32, i32) {
    %c0_i32 = arith.constant 0 : i32
    %c0_i32_0 = arith.constant 0 : i32
    %c0_i32_1 = arith.constant 0 : i32
    return %c0_i32, %c0_i32_0 : i32, i32
  }
  func.func @transform_29(%arg0: i32, %arg1: i32) -> (i32, i32) {
    %c0_i32 = arith.constant 0 : i32
    %c0_i32_0 = arith.constant 0 : i32
    %c0_i32_1 = arith.constant 0 : i32
    return %c0_i32, %c0_i32_0 : i32, i32
  }
  func.func @transform_30(%arg0: i32, %arg1: i32) -> (i32, i32) {
    %c0_i32 = arith.constant 0 : i32
    %c0_i32_0 = arith.constant 0 : i32
    %c0_i32_1 = arith.constant 0 : i32
    return %c0_i32, %c0_i32_0 : i32, i32
  }
  func.func @transform_31(%arg0: i32, %arg1: i32) -> (i32, i32) {
    %c0_i32 = arith.constant 0 : i32
    %c0_i32_0 = arith.constant 0 : i32
    %c0_i32_1 = arith.constant 0 : i32
    return %c0_i32, %c0_i32_0 : i32, i32
  }
  func.func @transform_32(%arg0: i32, %arg1: i32) -> (i32, i32) {
    %c0_i32 = arith.constant 0 : i32
    %c0_i32_0 = arith.constant 0 : i32
    %c0_i32_1 = arith.constant 0 : i32
    return %c0_i32, %c0_i32_0 : i32, i32
  }
  func.func @transform_33(%arg0: i32, %arg1: i32) -> (i32, i32, i32) {
    %c0_i32 = arith.constant 0 : i32
    %c0_i32_0 = arith.constant 0 : i32
    return %arg0, %arg1, %c0_i32 : i32, i32, i32
  }
}

</mosaic_0001>

<llo_original>
// kernel: tpu_custom_call.1
$region0: #{tpu_custom_call.1}
  #allocation0 [shape = 'u32[]', space=smem, size = 0x4, offset = 0x4, fixed_abs, tag = 'smem constant byte address 0x4 - core index']
  #allocation1 [shape = 'u32[144,128]{1,0:T(1,128)}', space=vmem, size = 0x12000, scoped, tag = 'internal scratch']
  %s0 = inlined_call_operand.smem [shape: u32[34], index: -1, kind: input, shape index: {}]
  %s1 = sld [smem:[%s0]]
  %s2 = scalar_lea.smem %s0, 1
  %s3 = sld [smem:[%s2]]
  %s4 = scalar_lea.smem %s0, 2
  %s5 = sld [smem:[%s4]]
  %s6 = scalar_lea.smem %s0, 3
  %s7 = sld [smem:[%s6]]
  %s8 = scalar_lea.smem %s0, 4
  %s9 = sld [smem:[%s8]]
  %s10 = scalar_lea.smem %s0, 5
  %s11 = sld [smem:[%s10]]
  %s12 = scalar_lea.smem %s0, 6
  %s13 = sld [smem:[%s12]]
  %s14 = scalar_lea.smem %s0, 7
  %s15 = sld [smem:[%s14]]
  %s16 = scalar_lea.smem %s0, 8
  %s17 = sld [smem:[%s16]]
  %s18 = scalar_lea.smem %s0, 9
  %s19 = sld [smem:[%s18]]
  %s20 = scalar_lea.smem %s0, 10
  %s21 = sld [smem:[%s20]]
  %s22 = scalar_lea.smem %s0, 11
  %s23 = sld [smem:[%s22]]
  %s24 = scalar_lea.smem %s0, 12
  %s25 = sld [smem:[%s24]]
  %s26 = scalar_lea.smem %s0, 13
  %s27 = sld [smem:[%s26]]
  %s28 = scalar_lea.smem %s0, 14
  %s29 = sld [smem:[%s28]]
  %s30 = scalar_lea.smem %s0, 15
  %s31 = sld [smem:[%s30]]
  %s32 = scalar_lea.smem %s0, 16
  %s33 = sld [smem:[%s32]]
  %s34 = scalar_lea.smem %s0, 17
  %s35 = sld [smem:[%s34]]
  %s36 = scalar_lea.smem %s0, 18
  %s37 = sld [smem:[%s36]]
  %s38 = scalar_lea.smem %s0, 19
  %s39 = sld [smem:[%s38]]
  %s40 = scalar_lea.smem %s0, 20
  %s41 = sld [smem:[%s40]]
  %s42 = scalar_lea.smem %s0, 21
  %s43 = sld [smem:[%s42]]
  %s44 = scalar_lea.smem %s0, 22
  %s45 = sld [smem:[%s44]]
  %s46 = scalar_lea.smem %s0, 23
  %s47 = sld [smem:[%s46]]
  %s48 = scalar_lea.smem %s0, 24
  %s49 = sld [smem:[%s48]]
  %s50 = scalar_lea.smem %s0, 25
  %s51 = sld [smem:[%s50]]
  %s52 = scalar_lea.smem %s0, 26
  %s53 = sld [smem:[%s52]]
  %s54 = scalar_lea.smem %s0, 27
  %s55 = sld [smem:[%s54]]
  %s56 = scalar_lea.smem %s0, 28
  %s57 = sld [smem:[%s56]]
  %s58 = scalar_lea.smem %s0, 29
  %s59 = sld [smem:[%s58]]
  %s60 = scalar_lea.smem %s0, 30
  %s61 = sld [smem:[%s60]]
  %s62 = scalar_lea.smem %s0, 31
  %s63 = sld [smem:[%s62]]
  %s64 = scalar_lea.smem %s0, 32
  %s65 = sld [smem:[%s64]]
  %s66 = scalar_lea.smem %s0, 33
  %s67 = sld [smem:[%s66]]
  %s68 = sld [smem:[#allocation0]]
  $region297: #{tpu_custom_call.1} parent=0
    _
  %s70 = ssub.s32 1, %s68
  %s71 = scalar_select 0, %s70, %s68
  $region1: #{tpu_custom_call.1} parent=0
    #allocation2 [shape = 'u8[8192]{0}', space=vmem, size = 0x2000, scoped, tag = 'input window, operand 0']
    #allocation3 [shape = 's32[2]{0}', space=sflag, size = 0x8, scoped, tag = 'scoped memory for tpu_custom_call.1']
    #allocation4 [shape = 's32[2]{0}', space=sflag, size = 0x8, scoped, tag = 'scoped memory for tpu_custom_call.1']
    #allocation5 [shape = 'u8[8192]{0}', space=vmem, size = 0x2000, scoped, tag = 'input window, operand 1']
    #allocation6 [shape = 's32[2]{0}', space=sflag, size = 0x8, scoped, tag = 'scoped memory for tpu_custom_call.1']
    #allocation7 [shape = 'u8[8192]{0}', space=vmem, size = 0x2000, scoped, tag = 'input window, operand 2']
    #allocation8 [shape = 'u8[4096]{0}', space=vmem, size = 0x1000, scoped, tag = 'input window, operand 3, single buffered']
    #allocation9 [shape = 's32[1]{0}', space=sflag, size = 0x4, scoped, tag = 'scoped memory for tpu_custom_call.1']
    #allocation10 [shape = 'u8[4096]{0}', space=vmem, size = 0x1000, scoped, tag = 'input window, operand 4, single buffered']
    #allocation11 [shape = 'u8[4096]{0}', space=vmem, size = 0x1000, scoped, tag = 'input window, operand 5, single buffered']
    #allocation12 [shape = 's32[1]{0}', space=sflag, size = 0x4, scoped, tag = 'scoped memory for tpu_custom_call.1']
    #allocation13 [shape = 'u8[1024]{0}', space=vmem, size = 0x400, scoped, tag = 'input window, operand 6']
    #allocation14 [shape = 'u8[8192]{0}', space=vmem, size = 0x2000, scoped, tag = 'input window, operand 7, single buffered']
    #allocation15 [shape = 'u8[512]{0}', space=vmem, size = 0x400, scoped, tag = 'input window, operand 8, single buffered']
    #allocation16 [shape = 'u8[8192]{0}', space=vmem, size = 0x2000, scoped, tag = 'input window, operand 9, single buffered']
    #allocation17 [shape = 'u8[512]{0}', space=vmem, size = 0x400, scoped, tag = 'input window, operand 10, single buffered']
    #allocation18 [shape = 's32[1]{0}', space=sflag, size = 0x4, scoped, tag = 'scoped memory for tpu_custom_call.1']
    #allocation19 [shape = 'u8[8192]{0}', space=vmem, size = 0x2000, scoped, tag = 'input window, operand 11, single buffered']
    #allocation20 [shape = 'u8[512]{0}', space=vmem, size = 0x400, scoped, tag = 'input window, operand 12, single buffered']
    #allocation21 [shape = 's32[1]{0}', space=sflag, size = 0x4, scoped, tag = 'scoped memory for tpu_custom_call.1']
    #allocation22 [shape = 'u8[8192]{0}', space=vmem, size = 0x2000, scoped, tag = 'input window, operand 13, single buffered']
    #allocation23 [shape = 'u8[512]{0}', space=vmem, size = 0x400, scoped, tag = 'input window, operand 14, single buffered']
    #allocation24 [shape = 's32[1]{0}', space=sflag, size = 0x4, scoped, tag = 'scoped memory for tpu_custom_call.1']
    #allocation25 [shape = 'u8[8192]{0}', space=vmem, size = 0x2000, scoped, tag = 'input window, operand 15, single buffered']
    #allocation26 [shape = 'u8[512]{0}', space=vmem, size = 0x400, scoped, tag = 'input window, operand 16, single buffered']
    #allocation27 [shape = 's32[1]{0}', space=sflag, size = 0x4, scoped, tag = 'scoped memory for tpu_custom_call.1']
    #allocation28 [shape = 'u8[8192]{0}', space=vmem, size = 0x2000, scoped, tag = 'input window, operand 17, single buffered']
    #allocation29 [shape = 'u8[512]{0}', space=vmem, size = 0x400, scoped, tag = 'input window, operand 18, single buffered']
    #allocation30 [shape = 's32[1]{0}', space=sflag, size = 0x4, scoped, tag = 'scoped memory for tpu_custom_call.1']
    #allocation31 [shape = 'u8[8192]{0}', space=vmem, size = 0x2000, scoped, tag = 'input window, operand 19, single buffered']
    #allocation32 [shape = 'u8[512]{0}', space=vmem, size = 0x400, scoped, tag = 'input window, operand 20, single buffered']
    #allocation33 [shape = 's32[1]{0}', space=sflag, size = 0x4, scoped, tag = 'scoped memory for tpu_custom_call.1']
    #allocation34 [shape = 'u8[8192]{0}', space=vmem, size = 0x2000, scoped, tag = 'input window, operand 21, single buffered']
    #allocation35 [shape = 'u8[512]{0}', space=vmem, size = 0x400, scoped, tag = 'input window, operand 22, single buffered']
    #allocation36 [shape = 's32[1]{0}', space=sflag, size = 0x4, scoped, tag = 'scoped memory for tpu_custom_call.1']
    #allocation37 [shape = 'u8[8192]{0}', space=vmem, size = 0x2000, scoped, tag = 'input window, operand 23, single buffered']
    #allocation38 [shape = 'u8[512]{0}', space=vmem, size = 0x400, scoped, tag = 'input window, operand 24, single buffered']
    #allocation39 [shape = 's32[1]{0}', space=sflag, size = 0x4, scoped, tag = 'scoped memory for tpu_custom_call.1']
    #allocation40 [shape = 'u8[32768]{0}', space=vmem, size = 0x8000, scoped, tag = 'input window, operand 25, single buffered']
    #allocation41 [shape = 'u8[512]{0}', space=vmem, size = 0x400, scoped, tag = 'input window, operand 26, single buffered']
    #allocation42 [shape = 's32[1]{0}', space=sflag, size = 0x4, scoped, tag = 'scoped memory for tpu_custom_call.1']
    #allocation43 [shape = 'u8[512]{0}', space=vmem, size = 0x400, scoped, tag = 'input window, operand 27, single buffered']
    #allocation44 [shape = 'u8[512]{0}', space=vmem, size = 0x400, scoped, tag = 'input window, operand 28, single buffered']
    #allocation45 [shape = 's32[1]{0}', space=sflag, size = 0x4, scoped, tag = 'scoped memory for tpu_custom_call.1']
    #allocation46 [shape = 'u8[512]{0}', space=vmem, size = 0x400, scoped, tag = 'input window, operand 29, single buffered']
    #allocation47 [shape = 'u8[512]{0}', space=vmem, size = 0x400, scoped, tag = 'input window, operand 30, single buffered']
    #allocation48 [shape = 's32[1]{0}', space=sflag, size = 0x4, scoped, tag = 'scoped memory for tpu_custom_call.1']
    #allocation49 [shape = 'u8[512]{0}', space=vmem, size = 0x400, scoped, tag = 'input window, operand 31, single buffered']
    #allocation50 [shape = 'u8[512]{0}', space=vmem, size = 0x400, scoped, tag = 'input window, operand 32, single buffered']
    #allocation51 [shape = 's32[1]{0}', space=sflag, size = 0x4, scoped, tag = 'scoped memory for tpu_custom_call.1']
    #allocation52 [shape = 'u8[8192]{0}', space=vmem, size = 0x2000, scoped, tag = 'output window, operand 0']
    %72 = vsyncpa [#allocation3], 0
    %s73 = scalar_lea.sflag [#allocation3], 1
    %74 = vsyncpa %s73, 0
    %75 = vsyncpa [#allocation6], 0
    %s76 = scalar_lea.sflag [#allocation6], 1
    %77 = vsyncpa %s76, 0
    %78 = vsyncpa [#allocation9], 0
    %79 = vsyncpa [#allocation12], 0
    %80 = vsyncpa [#allocation18], 0
    %81 = vsyncpa [#allocation21], 0
    %82 = vsyncpa [#allocation24], 0
    %83 = vsyncpa [#allocation27], 0
    %84 = vsyncpa [#allocation30], 0
    %85 = vsyncpa [#allocation33], 0
    %86 = vsyncpa [#allocation36], 0
    %87 = vsyncpa [#allocation39], 0
    %88 = vsyncpa [#allocation42], 0
    %89 = vsyncpa [#allocation45], 0
    %90 = vsyncpa [#allocation48], 0
    %91 = vsyncpa [#allocation51], 0
    %92 = vsyncpa [#allocation4], 0
    %s93 = scalar_lea.sflag [#allocation4], 1
    %94 = vsyncpa %s93, 0
    loop: start=0, step=1, limit=4
    $region2: #{tpu_custom_call.1} parent=1 // loop_pre_header
      _
    $region3: #{tpu_custom_call.1} parent=1 // loop_header
      %s96 = sphi 0, %s100
      %p97 = scmp.ge.s32.totalorder %s96, 4
      %s103 = sphi 0, %s115
      %s104 = sphi 0, %s111
      %s105 = sphi 0, %s103
      %s106 = sphi 0, %s104
      %s107 = sphi 0, %s105
      %s108 = sphi 0, %s106
      %s120 = sphi 0, %s122
      %s123 = sphi 0, %s120
      %s124 = sphi 0, %s123
      %s140 = sphi 0, %s124
      %s146 = sphi 0, %s148
      %s149 = sphi 0, %s146
      %s150 = sphi 0, %s149
      %s166 = sphi 0, %s150
      %s172 = sphi 0, %s174
      %s175 = sphi 0, %s172
      %s176 = sphi 0, %s175
      %s192 = sphi 0, %s176
      %s196 = sphi 0, %s196
      %s198 = sphi 0, %s196
      %s199 = sphi 0, %s198
      %s213 = sphi 0, %s199
      %s217 = sphi 0, %s217
      %s219 = sphi 0, %s217
      %s220 = sphi 0, %s219
      %s234 = sphi 0, %s220
      %s240 = sphi 0, %s242
      %s243 = sphi 0, %s240
      %s244 = sphi 0, %s243
      %s260 = sphi 0, %s244
      %s266 = sphi 0, %s268
      %s269 = sphi 0, %s266
      %s270 = sphi 0, %s269
      %s286 = sphi 0, %s270
      %s290 = sphi 0, %s290
      %s292 = sphi 0, %s290
      %s293 = sphi 0, %s292
      %s307 = sphi 0, %s293
      %s311 = sphi 0, %s311
      %s313 = sphi 0, %s311
      %s314 = sphi 0, %s313
      %s328 = sphi 0, %s314
      %s332 = sphi 0, %s332
      %s334 = sphi 0, %s332
      %s335 = sphi 0, %s334
      %s349 = sphi 0, %s335
      %s353 = sphi 0, %s353
      %s355 = sphi 0, %s353
      %s356 = sphi 0, %s355
      %s370 = sphi 0, %s356
      %s374 = sphi 0, %s374
      %s376 = sphi 0, %s374
      %s377 = sphi 0, %s376
      %s391 = sphi 0, %s377
      %s395 = sphi 0, %s395
      %s397 = sphi 0, %s395
      %s398 = sphi 0, %s397
      %s412 = sphi 0, %s398
      %s416 = sphi 0, %s416
      %s418 = sphi 0, %s416
      %s419 = sphi 0, %s418
      %s433 = sphi 0, %s419
      %s437 = sphi 0, %s437
      %s439 = sphi 0, %s437
      %s440 = sphi 0, %s439
      %s454 = sphi 0, %s440
      %s458 = sphi 0, %s458
      %s460 = sphi 0, %s458
      %s461 = sphi 0, %s460
      %s475 = sphi 0, %s461
      %s479 = sphi 0, %s479
      %s481 = sphi 0, %s479
      %s482 = sphi 0, %s481
      %s496 = sphi 0, %s482
      %s500 = sphi 0, %s500
      %s502 = sphi 0, %s500
      %s503 = sphi 0, %s502
      %s517 = sphi 0, %s503
      %s521 = sphi 0, %s521
      %s523 = sphi 0, %s521
      %s524 = sphi 0, %s523
      %s538 = sphi 0, %s524
      %s542 = sphi 0, %s542
      %s544 = sphi 0, %s542
      %s545 = sphi 0, %s544
      %s559 = sphi 0, %s545
      %s563 = sphi 0, %s563
      %s565 = sphi 0, %s563
      %s566 = sphi 0, %s565
      %s580 = sphi 0, %s566
      %s584 = sphi 0, %s584
      %s586 = sphi 0, %s584
      %s587 = sphi 0, %s586
      %s601 = sphi 0, %s587
      %s605 = sphi 0, %s605
      %s607 = sphi 0, %s605
      %s608 = sphi 0, %s607
      %s622 = sphi 0, %s608
      %s626 = sphi 0, %s626
      %s628 = sphi 0, %s626
      %s629 = sphi 0, %s628
      %s643 = sphi 0, %s629
      %s647 = sphi 0, %s647
      %s649 = sphi 0, %s647
      %s650 = sphi 0, %s649
      %s664 = sphi 0, %s650
      %s668 = sphi 0, %s668
      %s670 = sphi 0, %s668
      %s671 = sphi 0, %s670
      %s685 = sphi 0, %s671
      %s689 = sphi 0, %s689
      %s691 = sphi 0, %s689
      %s692 = sphi 0, %s691
      %s706 = sphi 0, %s692
      %s710 = sphi 0, %s710
      %s712 = sphi 0, %s710
      %s713 = sphi 0, %s712
      %s727 = sphi 0, %s713
      %s731 = sphi 0, %s731
      %s733 = sphi 0, %s731
      %s734 = sphi 0, %s733
      %s748 = sphi 0, %s734
      %s752 = sphi 0, %s752
      %s754 = sphi 0, %s752
      %s755 = sphi 0, %s754
      %s769 = sphi 0, %s755
      %s773 = sphi 0, %s773
      %s775 = sphi 0, %s773
      %s776 = sphi 0, %s775
      %s790 = sphi 0, %s776
      %s794 = sphi 0, %s794
      %s796 = sphi 0, %s794
      %s797 = sphi 0, %s796
      %s811 = sphi 0, %s797
      %s815 = sphi 0, %s815
      %s817 = sphi 0, %s815
      %s818 = sphi 0, %s817
      %s832 = sphi 0, %s818
      %s840 = sphi 0, %s842
      %s843 = sphi 0, %s840
      %s844 = sphi 0, %s843
      %s860 = sphi 0, %s844
    $region4: #{tpu_custom_call.1} parent=1 // loop_header_branch
      %99 = sbr.rel (%p97) target = $region8
    $region5: #{tpu_custom_call.1} parent=1 // loop_body
      %s101 = ssub.s32 %s96, 1
      %s102 = ssub.s32 %s96, 2
      %s109 = sadd.s32 1, %s104
      %p110 = scmp.ge.s32.totalorder %s109, 1
      %s111 = scalar_select %p110, 0, %s109
      %s112 = sadd.s32 1, %s103
      %s113 = scalar_select %p110, %s112, %s103
      %p114 = scmp.ge.s32.totalorder %s113, 2
      %s115 = scalar_select %p114, 0, %s113
      %s116 = ssub.s32 %s103, %s115
      %s117 = ssub.s32 %s104, %s111
      %s118 = sor.u32 %s116, %s117
      %p119 = scmp.eq.s32.totalorder %s118, 0
      %s121 = sadd.s32 %s120, 1
      %s122 = scalar_select %p119, %s120, %s121
      %p125 = pneg %p119
      %p126 = scmp.eq.s32.totalorder %s96, 1
      %p127 = por %p125, %p126
      %p128 = scmp.ne.s32.totalorder %s120, %s123
      %p129 = scmp.eq.s32.totalorder %s96, 0
      %p130 = por %p128, %p129
      %p131 = scmp.ne.s32.totalorder %s120, %s123
      %p132 = scmp.eq.s32.totalorder %s101, 1
      %p133 = por %p131, %p132
      %p134 = scmp.ne.s32.totalorder %s123, %s124
      %p135 = scmp.eq.s32.totalorder %s101, 0
      %p136 = por %p134, %p135
      %p137 = scmp.ne.s32.totalorder %s123, %s124
      %p138 = scmp.eq.s32.totalorder %s102, 1
      %p139 = por %p137, %p138
      %p141 = scmp.ne.s32.totalorder %s124, %s140
      %p142 = scmp.eq.s32.totalorder %s102, 0
      %p143 = por %p141, %p142
      %s144 = ssub.s32 %s103, %s115
      %p145 = scmp.eq.s32.totalorder %s144, 0
      %s147 = sadd.s32 %s146, 1
      %s148 = scalar_select %p145, %s146, %s147
      %p151 = pneg %p145
      %p152 = scmp.eq.s32.totalorder %s96, 1
      %p153 = por %p151, %p152
      %p154 = scmp.ne.s32.totalorder %s146, %s149
      %p155 = scmp.eq.s32.totalorder %s96, 0
      %p156 = por %p154, %p155
      %p157 = scmp.ne.s32.totalorder %s146, %s149
      %p158 = scmp.eq.s32.totalorder %s101, 1
      %p159 = por %p157, %p158
      %p160 = scmp.ne.s32.totalorder %s149, %s150
      %p161 = scmp.eq.s32.totalorder %s101, 0
      %p162 = por %p160, %p161
      %p163 = scmp.ne.s32.totalorder %s149, %s150
      %p164 = scmp.eq.s32.totalorder %s102, 1
      %p165 = por %p163, %p164
      %p167 = scmp.ne.s32.totalorder %s150, %s166
      %p168 = scmp.eq.s32.totalorder %s102, 0
      %p169 = por %p167, %p168
      %s170 = ssub.s32 %s103, %s115
      %p171 = scmp.eq.s32.totalorder %s170, 0
      %s173 = sadd.s32 %s172, 1
      %s174 = scalar_select %p171, %s172, %s173
      %p177 = pneg %p171
      %p178 = scmp.eq.s32.totalorder %s96, 1
      %p179 = por %p177, %p178
      %p180 = scmp.ne.s32.totalorder %s172, %s175
      %p181 = scmp.eq.s32.totalorder %s96, 0
      %p182 = por %p180, %p181
      %p183 = scmp.ne.s32.totalorder %s172, %s175
      %p184 = scmp.eq.s32.totalorder %s101, 1
      %p185 = por %p183, %p184
      %p186 = scmp.ne.s32.totalorder %s175, %s176
      %p187 = scmp.eq.s32.totalorder %s101, 0
      %p188 = por %p186, %p187
      %p189 = scmp.ne.s32.totalorder %s175, %s176
      %p190 = scmp.eq.s32.totalorder %s102, 1
      %p191 = por %p189, %p190
      %p193 = scmp.ne.s32.totalorder %s176, %s192
      %p194 = scmp.eq.s32.totalorder %s102, 0
      %p195 = por %p193, %p194
      %s197 = sadd.s32 %s196, 1
      %p200 = scmp.eq.s32.totalorder %s96, 1
      %p201 = scmp.ne.s32.totalorder %s196, %s198
      %p202 = scmp.eq.s32.totalorder %s96, 0
      %p203 = por %p201, %p202
      %p204 = scmp.ne.s32.totalorder %s196, %s198
      %p205 = scmp.eq.s32.totalorder %s101, 1
      %p206 = por %p204, %p205
      %p207 = scmp.ne.s32.totalorder %s198, %s199
      %p208 = scmp.eq.s32.totalorder %s101, 0
      %p209 = por %p207, %p208
      %p210 = scmp.ne.s32.totalorder %s198, %s199
      %p211 = scmp.eq.s32.totalorder %s102, 1
      %p212 = por %p210, %p211
      %p214 = scmp.ne.s32.totalorder %s199, %s213
      %p215 = scmp.eq.s32.totalorder %s102, 0
      %p216 = por %p214, %p215
      %s218 = sadd.s32 %s217, 1
      %p221 = scmp.eq.s32.totalorder %s96, 1
      %p222 = scmp.ne.s32.totalorder %s217, %s219
      %p223 = scmp.eq.s32.totalorder %s96, 0
      %p224 = por %p222, %p223
      %p225 = scmp.ne.s32.totalorder %s217, %s219
      %p226 = scmp.eq.s32.totalorder %s101, 1
      %p227 = por %p225, %p226
      %p228 = scmp.ne.s32.totalorder %s219, %s220
      %p229 = scmp.eq.s32.totalorder %s101, 0
      %p230 = por %p228, %p229
      %p231 = scmp.ne.s32.totalorder %s219, %s220
      %p232 = scmp.eq.s32.totalorder %s102, 1
      %p233 = por %p231, %p232
      %p235 = scmp.ne.s32.totalorder %s220, %s234
      %p236 = scmp.eq.s32.totalorder %s102, 0
      %p237 = por %p235, %p236
      %s238 = ssub.s32 %s104, %s111
      %p239 = scmp.eq.s32.totalorder %s238, 0
      %s241 = sadd.s32 %s240, 1
      %s242 = scalar_select %p239, %s240, %s241
      %p245 = pneg %p239
      %p246 = scmp.eq.s32.totalorder %s96, 1
      %p247 = por %p245, %p246
      %p248 = scmp.ne.s32.totalorder %s240, %s243
      %p249 = scmp.eq.s32.totalorder %s96, 0
      %p250 = por %p248, %p249
      %p251 = scmp.ne.s32.totalorder %s240, %s243
      %p252 = scmp.eq.s32.totalorder %s101, 1
      %p253 = por %p251, %p252
      %p254 = scmp.ne.s32.totalorder %s243, %s244
      %p255 = scmp.eq.s32.totalorder %s101, 0
      %p256 = por %p254, %p255
      %p257 = scmp.ne.s32.totalorder %s243, %s244
      %p258 = scmp.eq.s32.totalorder %s102, 1
      %p259 = por %p257, %p258
      %p261 = scmp.ne.s32.totalorder %s244, %s260
      %p262 = scmp.eq.s32.totalorder %s102, 0
      %p263 = por %p261, %p262
      %s264 = ssub.s32 %s103, %s115
      %p265 = scmp.eq.s32.totalorder %s264, 0
      %s267 = sadd.s32 %s266, 1
      %s268 = scalar_select %p265, %s266, %s267
      %p271 = pneg %p265
      %p272 = scmp.eq.s32.totalorder %s96, 1
      %p273 = por %p271, %p272
      %p274 = scmp.ne.s32.totalorder %s266, %s269
      %p275 = scmp.eq.s32.totalorder %s96, 0
      %p276 = por %p274, %p275
      %p277 = scmp.ne.s32.totalorder %s266, %s269
      %p278 = scmp.eq.s32.totalorder %s101, 1
      %p279 = por %p277, %p278
      %p280 = scmp.ne.s32.totalorder %s269, %s270
      %p281 = scmp.eq.s32.totalorder %s101, 0
      %p282 = por %p280, %p281
      %p283 = scmp.ne.s32.totalorder %s269, %s270
      %p284 = scmp.eq.s32.totalorder %s102, 1
      %p285 = por %p283, %p284
      %p287 = scmp.ne.s32.totalorder %s270, %s286
      %p288 = scmp.eq.s32.totalorder %s102, 0
      %p289 = por %p287, %p288
      %s291 = sadd.s32 %s290, 1
      %p294 = scmp.eq.s32.totalorder %s96, 1
      %p295 = scmp.ne.s32.totalorder %s290, %s292
      %p296 = scmp.eq.s32.totalorder %s96, 0
      %p297 = por %p295, %p296
      %p298 = scmp.ne.s32.totalorder %s290, %s292
      %p299 = scmp.eq.s32.totalorder %s101, 1
      %p300 = por %p298, %p299
      %p301 = scmp.ne.s32.totalorder %s292, %s293
      %p302 = scmp.eq.s32.totalorder %s101, 0
      %p303 = por %p301, %p302
      %p304 = scmp.ne.s32.totalorder %s292, %s293
      %p305 = scmp.eq.s32.totalorder %s102, 1
      %p306 = por %p304, %p305
      %p308 = scmp.ne.s32.totalorder %s293, %s307
      %p309 = scmp.eq.s32.totalorder %s102, 0
      %p310 = por %p308, %p309
      %s312 = sadd.s32 %s311, 1
      %p315 = scmp.eq.s32.totalorder %s96, 1
      %p316 = scmp.ne.s32.totalorder %s311, %s313
      %p317 = scmp.eq.s32.totalorder %s96, 0
      %p318 = por %p316, %p317
      %p319 = scmp.ne.s32.totalorder %s311, %s313
      %p320 = scmp.eq.s32.totalorder %s101, 1
      %p321 = por %p319, %p320
      %p322 = scmp.ne.s32.totalorder %s313, %s314
      %p323 = scmp.eq.s32.totalorder %s101, 0
      %p324 = por %p322, %p323
      %p325 = scmp.ne.s32.totalorder %s313, %s314
      %p326 = scmp.eq.s32.totalorder %s102, 1
      %p327 = por %p325, %p326
      %p329 = scmp.ne.s32.totalorder %s314, %s328
      %p330 = scmp.eq.s32.totalorder %s102, 0
      %p331 = por %p329, %p330
      %s333 = sadd.s32 %s332, 1
      %p336 = scmp.eq.s32.totalorder %s96, 1
      %p337 = scmp.ne.s32.totalorder %s332, %s334
      %p338 = scmp.eq.s32.totalorder %s96, 0
      %p339 = por %p337, %p338
      %p340 = scmp.ne.s32.totalorder %s332, %s334
      %p341 = scmp.eq.s32.totalorder %s101, 1
      %p342 = por %p340, %p341
      %p343 = scmp.ne.s32.totalorder %s334, %s335
      %p344 = scmp.eq.s32.totalorder %s101, 0
      %p345 = por %p343, %p344
      %p346 = scmp.ne.s32.totalorder %s334, %s335
      %p347 = scmp.eq.s32.totalorder %s102, 1
      %p348 = por %p346, %p347
      %p350 = scmp.ne.s32.totalorder %s335, %s349
      %p351 = scmp.eq.s32.totalorder %s102, 0
      %p352 = por %p350, %p351
      %s354 = sadd.s32 %s353, 1
      %p357 = scmp.eq.s32.totalorder %s96, 1
      %p358 = scmp.ne.s32.totalorder %s353, %s355
      %p359 = scmp.eq.s32.totalorder %s96, 0
      %p360 = por %p358, %p359
      %p361 = scmp.ne.s32.totalorder %s353, %s355
      %p362 = scmp.eq.s32.totalorder %s101, 1
      %p363 = por %p361, %p362
      %p364 = scmp.ne.s32.totalorder %s355, %s356
      %p365 = scmp.eq.s32.totalorder %s101, 0
      %p366 = por %p364, %p365
      %p367 = scmp.ne.s32.totalorder %s355, %s356
      %p368 = scmp.eq.s32.totalorder %s102, 1
      %p369 = por %p367, %p368
      %p371 = scmp.ne.s32.totalorder %s356, %s370
      %p372 = scmp.eq.s32.totalorder %s102, 0
      %p373 = por %p371, %p372
      %s375 = sadd.s32 %s374, 1
      %p378 = scmp.eq.s32.totalorder %s96, 1
      %p379 = scmp.ne.s32.totalorder %s374, %s376
      %p380 = scmp.eq.s32.totalorder %s96, 0
      %p381 = por %p379, %p380
      %p382 = scmp.ne.s32.totalorder %s374, %s376
      %p383 = scmp.eq.s32.totalorder %s101, 1
      %p384 = por %p382, %p383
      %p385 = scmp.ne.s32.totalorder %s376, %s377
      %p386 = scmp.eq.s32.totalorder %s101, 0
      %p387 = por %p385, %p386
      %p388 = scmp.ne.s32.totalorder %s376, %s377
      %p389 = scmp.eq.s32.totalorder %s102, 1
      %p390 = por %p388, %p389
      %p392 = scmp.ne.s32.totalorder %s377, %s391
      %p393 = scmp.eq.s32.totalorder %s102, 0
      %p394 = por %p392, %p393
      %s396 = sadd.s32 %s395, 1
      %p399 = scmp.eq.s32.totalorder %s96, 1
      %p400 = scmp.ne.s32.totalorder %s395, %s397
      %p401 = scmp.eq.s32.totalorder %s96, 0
      %p402 = por %p400, %p401
      %p403 = scmp.ne.s32.totalorder %s395, %s397
      %p404 = scmp.eq.s32.totalorder %s101, 1
      %p405 = por %p403, %p404
      %p406 = scmp.ne.s32.totalorder %s397, %s398
      %p407 = scmp.eq.s32.totalorder %s101, 0
      %p408 = por %p406, %p407
      %p409 = scmp.ne.s32.totalorder %s397, %s398
      %p410 = scmp.eq.s32.totalorder %s102, 1
      %p411 = por %p409, %p410
      %p413 = scmp.ne.s32.totalorder %s398, %s412
      %p414 = scmp.eq.s32.totalorder %s102, 0
      %p415 = por %p413, %p414
      %s417 = sadd.s32 %s416, 1
      %p420 = scmp.eq.s32.totalorder %s96, 1
      %p421 = scmp.ne.s32.totalorder %s416, %s418
      %p422 = scmp.eq.s32.totalorder %s96, 0
      %p423 = por %p421, %p422
      %p424 = scmp.ne.s32.totalorder %s416, %s418
      %p425 = scmp.eq.s32.totalorder %s101, 1
      %p426 = por %p424, %p425
      %p427 = scmp.ne.s32.totalorder %s418, %s419
      %p428 = scmp.eq.s32.totalorder %s101, 0
      %p429 = por %p427, %p428
      %p430 = scmp.ne.s32.totalorder %s418, %s419
      %p431 = scmp.eq.s32.totalorder %s102, 1
      %p432 = por %p430, %p431
      %p434 = scmp.ne.s32.totalorder %s419, %s433
      %p435 = scmp.eq.s32.totalorder %s102, 0
      %p436 = por %p434, %p435
      %s438 = sadd.s32 %s437, 1
      %p441 = scmp.eq.s32.totalorder %s96, 1
      %p442 = scmp.ne.s32.totalorder %s437, %s439
      %p443 = scmp.eq.s32.totalorder %s96, 0
      %p444 = por %p442, %p443
      %p445 = scmp.ne.s32.totalorder %s437, %s439
      %p446 = scmp.eq.s32.totalorder %s101, 1
      %p447 = por %p445, %p446
      %p448 = scmp.ne.s32.totalorder %s439, %s440
      %p449 = scmp.eq.s32.totalorder %s101, 0
      %p450 = por %p448, %p449
      %p451 = scmp.ne.s32.totalorder %s439, %s440
      %p452 = scmp.eq.s32.totalorder %s102, 1
      %p453 = por %p451, %p452
      %p455 = scmp.ne.s32.totalorder %s440, %s454
      %p456 = scmp.eq.s32.totalorder %s102, 0
      %p457 = por %p455, %p456
      %s459 = sadd.s32 %s458, 1
      %p462 = scmp.eq.s32.totalorder %s96, 1
      %p463 = scmp.ne.s32.totalorder %s458, %s460
      %p464 = scmp.eq.s32.totalorder %s96, 0
      %p465 = por %p463, %p464
      %p466 = scmp.ne.s32.totalorder %s458, %s460
      %p467 = scmp.eq.s32.totalorder %s101, 1
      %p468 = por %p466, %p467
      %p469 = scmp.ne.s32.totalorder %s460, %s461
      %p470 = scmp.eq.s32.totalorder %s101, 0
      %p471 = por %p469, %p470
      %p472 = scmp.ne.s32.totalorder %s460, %s461
      %p473 = scmp.eq.s32.totalorder %s102, 1
      %p474 = por %p472, %p473
      %p476 = scmp.ne.s32.totalorder %s461, %s475
      %p477 = scmp.eq.s32.totalorder %s102, 0
      %p478 = por %p476, %p477
      %s480 = sadd.s32 %s479, 1
      %p483 = scmp.eq.s32.totalorder %s96, 1
      %p484 = scmp.ne.s32.totalorder %s479, %s481
      %p485 = scmp.eq.s32.totalorder %s96, 0
      %p486 = por %p484, %p485
      %p487 = scmp.ne.s32.totalorder %s479, %s481
      %p488 = scmp.eq.s32.totalorder %s101, 1
      %p489 = por %p487, %p488
      %p490 = scmp.ne.s32.totalorder %s481, %s482
      %p491 = scmp.eq.s32.totalorder %s101, 0
      %p492 = por %p490, %p491
      %p493 = scmp.ne.s32.totalorder %s481, %s482
      %p494 = scmp.eq.s32.totalorder %s102, 1
      %p495 = por %p493, %p494
      %p497 = scmp.ne.s32.totalorder %s482, %s496
      %p498 = scmp.eq.s32.totalorder %s102, 0
      %p499 = por %p497, %p498
      %s501 = sadd.s32 %s500, 1
      %p504 = scmp.eq.s32.totalorder %s96, 1
      %p505 = scmp.ne.s32.totalorder %s500, %s502
      %p506 = scmp.eq.s32.totalorder %s96, 0
      %p507 = por %p505, %p506
      %p508 = scmp.ne.s32.totalorder %s500, %s502
      %p509 = scmp.eq.s32.totalorder %s101, 1
      %p510 = por %p508, %p509
      %p511 = scmp.ne.s32.totalorder %s502, %s503
      %p512 = scmp.eq.s32.totalorder %s101, 0
      %p513 = por %p511, %p512
      %p514 = scmp.ne.s32.totalorder %s502, %s503
      %p515 = scmp.eq.s32.totalorder %s102, 1
      %p516 = por %p514, %p515
      %p518 = scmp.ne.s32.totalorder %s503, %s517
      %p519 = scmp.eq.s32.totalorder %s102, 0
      %p520 = por %p518, %p519
      %s522 = sadd.s32 %s521, 1
      %p525 = scmp.eq.s32.totalorder %s96, 1
      %p526 = scmp.ne.s32.totalorder %s521, %s523
      %p527 = scmp.eq.s32.totalorder %s96, 0
      %p528 = por %p526, %p527
      %p529 = scmp.ne.s32.totalorder %s521, %s523
      %p530 = scmp.eq.s32.totalorder %s101, 1
      %p531 = por %p529, %p530
      %p532 = scmp.ne.s32.totalorder %s523, %s524
      %p533 = scmp.eq.s32.totalorder %s101, 0
      %p534 = por %p532, %p533
      %p535 = scmp.ne.s32.totalorder %s523, %s524
      %p536 = scmp.eq.s32.totalorder %s102, 1
      %p537 = por %p535, %p536
      %p539 = scmp.ne.s32.totalorder %s524, %s538
      %p540 = scmp.eq.s32.totalorder %s102, 0
      %p541 = por %p539, %p540
      %s543 = sadd.s32 %s542, 1
      %p546 = scmp.eq.s32.totalorder %s96, 1
      %p547 = scmp.ne.s32.totalorder %s542, %s544
      %p548 = scmp.eq.s32.totalorder %s96, 0
      %p549 = por %p547, %p548
      %p550 = scmp.ne.s32.totalorder %s542, %s544
      %p551 = scmp.eq.s32.totalorder %s101, 1
      %p552 = por %p550, %p551
      %p553 = scmp.ne.s32.totalorder %s544, %s545
      %p554 = scmp.eq.s32.totalorder %s101, 0
      %p555 = por %p553, %p554
      %p556 = scmp.ne.s32.totalorder %s544, %s545
      %p557 = scmp.eq.s32.totalorder %s102, 1
      %p558 = por %p556, %p557
      %p560 = scmp.ne.s32.totalorder %s545, %s559
      %p561 = scmp.eq.s32.totalorder %s102, 0
      %p562 = por %p560, %p561
      %s564 = sadd.s32 %s563, 1
      %p567 = scmp.eq.s32.totalorder %s96, 1
      %p568 = scmp.ne.s32.totalorder %s563, %s565
      %p569 = scmp.eq.s32.totalorder %s96, 0
      %p570 = por %p568, %p569
      %p571 = scmp.ne.s32.totalorder %s563, %s565
      %p572 = scmp.eq.s32.totalorder %s101, 1
      %p573 = por %p571, %p572
      %p574 = scmp.ne.s32.totalorder %s565, %s566
      %p575 = scmp.eq.s32.totalorder %s101, 0
      %p576 = por %p574, %p575
      %p577 = scmp.ne.s32.totalorder %s565, %s566
      %p578 = scmp.eq.s32.totalorder %s102, 1
      %p579 = por %p577, %p578
      %p581 = scmp.ne.s32.totalorder %s566, %s580
      %p582 = scmp.eq.s32.totalorder %s102, 0
      %p583 = por %p581, %p582
      %s585 = sadd.s32 %s584, 1
      %p588 = scmp.eq.s32.totalorder %s96, 1
      %p589 = scmp.ne.s32.totalorder %s584, %s586
      %p590 = scmp.eq.s32.totalorder %s96, 0
      %p591 = por %p589, %p590
      %p592 = scmp.ne.s32.totalorder %s584, %s586
      %p593 = scmp.eq.s32.totalorder %s101, 1
      %p594 = por %p592, %p593
      %p595 = scmp.ne.s32.totalorder %s586, %s587
      %p596 = scmp.eq.s32.totalorder %s101, 0
      %p597 = por %p595, %p596
      %p598 = scmp.ne.s32.totalorder %s586, %s587
      %p599 = scmp.eq.s32.totalorder %s102, 1
      %p600 = por %p598, %p599
      %p602 = scmp.ne.s32.totalorder %s587, %s601
      %p603 = scmp.eq.s32.totalorder %s102, 0
      %p604 = por %p602, %p603
      %s606 = sadd.s32 %s605, 1
      %p609 = scmp.eq.s32.totalorder %s96, 1
      %p610 = scmp.ne.s32.totalorder %s605, %s607
      %p611 = scmp.eq.s32.totalorder %s96, 0
      %p612 = por %p610, %p611
      %p613 = scmp.ne.s32.totalorder %s605, %s607
      %p614 = scmp.eq.s32.totalorder %s101, 1
      %p615 = por %p613, %p614
      %p616 = scmp.ne.s32.totalorder %s607, %s608
      %p617 = scmp.eq.s32.totalorder %s101, 0
      %p618 = por %p616, %p617
      %p619 = scmp.ne.s32.totalorder %s607, %s608
      %p620 = scmp.eq.s32.totalorder %s102, 1
      %p621 = por %p619, %p620
      %p623 = scmp.ne.s32.totalorder %s608, %s622
      %p624 = scmp.eq.s32.totalorder %s102, 0
      %p625 = por %p623, %p624
      %s627 = sadd.s32 %s626, 1
      %p630 = scmp.eq.s32.totalorder %s96, 1
      %p631 = scmp.ne.s32.totalorder %s626, %s628
      %p632 = scmp.eq.s32.totalorder %s96, 0
      %p633 = por %p631, %p632
      %p634 = scmp.ne.s32.totalorder %s626, %s628
      %p635 = scmp.eq.s32.totalorder %s101, 1
      %p636 = por %p634, %p635
      %p637 = scmp.ne.s32.totalorder %s628, %s629
      %p638 = scmp.eq.s32.totalorder %s101, 0
      %p639 = por %p637, %p638
      %p640 = scmp.ne.s32.totalorder %s628, %s629
      %p641 = scmp.eq.s32.totalorder %s102, 1
      %p642 = por %p640, %p641
      %p644 = scmp.ne.s32.totalorder %s629, %s643
      %p645 = scmp.eq.s32.totalorder %s102, 0
      %p646 = por %p644, %p645
      %s648 = sadd.s32 %s647, 1
      %p651 = scmp.eq.s32.totalorder %s96, 1
      %p652 = scmp.ne.s32.totalorder %s647, %s649
      %p653 = scmp.eq.s32.totalorder %s96, 0
      %p654 = por %p652, %p653
      %p655 = scmp.ne.s32.totalorder %s647, %s649
      %p656 = scmp.eq.s32.totalorder %s101, 1
      %p657 = por %p655, %p656
      %p658 = scmp.ne.s32.totalorder %s649, %s650
      %p659 = scmp.eq.s32.totalorder %s101, 0
      %p660 = por %p658, %p659
      %p661 = scmp.ne.s32.totalorder %s649, %s650
      %p662 = scmp.eq.s32.totalorder %s102, 1
      %p663 = por %p661, %p662
      %p665 = scmp.ne.s32.totalorder %s650, %s664
      %p666 = scmp.eq.s32.totalorder %s102, 0
      %p667 = por %p665, %p666
      %s669 = sadd.s32 %s668, 1
      %p672 = scmp.eq.s32.totalorder %s96, 1
      %p673 = scmp.ne.s32.totalorder %s668, %s670
      %p674 = scmp.eq.s32.totalorder %s96, 0
      %p675 = por %p673, %p674
      %p676 = scmp.ne.s32.totalorder %s668, %s670
      %p677 = scmp.eq.s32.totalorder %s101, 1
      %p678 = por %p676, %p677
      %p679 = scmp.ne.s32.totalorder %s670, %s671
      %p680 = scmp.eq.s32.totalorder %s101, 0
      %p681 = por %p679, %p680
      %p682 = scmp.ne.s32.totalorder %s670, %s671
      %p683 = scmp.eq.s32.totalorder %s102, 1
      %p684 = por %p682, %p683
      %p686 = scmp.ne.s32.totalorder %s671, %s685
      %p687 = scmp.eq.s32.totalorder %s102, 0
      %p688 = por %p686, %p687
      %s690 = sadd.s32 %s689, 1
      %p693 = scmp.eq.s32.totalorder %s96, 1
      %p694 = scmp.ne.s32.totalorder %s689, %s691
      %p695 = scmp.eq.s32.totalorder %s96, 0
      %p696 = por %p694, %p695
      %p697 = scmp.ne.s32.totalorder %s689, %s691
      %p698 = scmp.eq.s32.totalorder %s101, 1
      %p699 = por %p697, %p698
      %p700 = scmp.ne.s32.totalorder %s691, %s692
      %p701 = scmp.eq.s32.totalorder %s101, 0
      %p702 = por %p700, %p701
      %p703 = scmp.ne.s32.totalorder %s691, %s692
      %p704 = scmp.eq.s32.totalorder %s102, 1
      %p705 = por %p703, %p704
      %p707 = scmp.ne.s32.totalorder %s692, %s706
      %p708 = scmp.eq.s32.totalorder %s102, 0
      %p709 = por %p707, %p708
      %s711 = sadd.s32 %s710, 1
      %p714 = scmp.eq.s32.totalorder %s96, 1
      %p715 = scmp.ne.s32.totalorder %s710, %s712
      %p716 = scmp.eq.s32.totalorder %s96, 0
      %p717 = por %p715, %p716
      %p718 = scmp.ne.s32.totalorder %s710, %s712
      %p719 = scmp.eq.s32.totalorder %s101, 1
      %p720 = por %p718, %p719
      %p721 = scmp.ne.s32.totalorder %s712, %s713
      %p722 = scmp.eq.s32.totalorder %s101, 0
      %p723 = por %p721, %p722
      %p724 = scmp.ne.s32.totalorder %s712, %s713
      %p725 = scmp.eq.s32.totalorder %s102, 1
      %p726 = por %p724, %p725
      %p728 = scmp.ne.s32.totalorder %s713, %s727
      %p729 = scmp.eq.s32.totalorder %s102, 0
      %p730 = por %p728, %p729
      %s732 = sadd.s32 %s731, 1
      %p735 = scmp.eq.s32.totalorder %s96, 1
      %p736 = scmp.ne.s32.totalorder %s731, %s733
      %p737 = scmp.eq.s32.totalorder %s96, 0
      %p738 = por %p736, %p737
      %p739 = scmp.ne.s32.totalorder %s731, %s733
      %p740 = scmp.eq.s32.totalorder %s101, 1
      %p741 = por %p739, %p740
      %p742 = scmp.ne.s32.totalorder %s733, %s734
      %p743 = scmp.eq.s32.totalorder %s101, 0
      %p744 = por %p742, %p743
      %p745 = scmp.ne.s32.totalorder %s733, %s734
      %p746 = scmp.eq.s32.totalorder %s102, 1
      %p747 = por %p745, %p746
      %p749 = scmp.ne.s32.totalorder %s734, %s748
      %p750 = scmp.eq.s32.totalorder %s102, 0
      %p751 = por %p749, %p750
      %s753 = sadd.s32 %s752, 1
      %p756 = scmp.eq.s32.totalorder %s96, 1
      %p757 = scmp.ne.s32.totalorder %s752, %s754
      %p758 = scmp.eq.s32.totalorder %s96, 0
      %p759 = por %p757, %p758
      %p760 = scmp.ne.s32.totalorder %s752, %s754
      %p761 = scmp.eq.s32.totalorder %s101, 1
      %p762 = por %p760, %p761
      %p763 = scmp.ne.s32.totalorder %s754, %s755
      %p764 = scmp.eq.s32.totalorder %s101, 0
      %p765 = por %p763, %p764
      %p766 = scmp.ne.s32.totalorder %s754, %s755
      %p767 = scmp.eq.s32.totalorder %s102, 1
      %p768 = por %p766, %p767
      %p770 = scmp.ne.s32.totalorder %s755, %s769
      %p771 = scmp.eq.s32.totalorder %s102, 0
      %p772 = por %p770, %p771
      %s774 = sadd.s32 %s773, 1
      %p777 = scmp.eq.s32.totalorder %s96, 1
      %p778 = scmp.ne.s32.totalorder %s773, %s775
      %p779 = scmp.eq.s32.totalorder %s96, 0
      %p780 = por %p778, %p779
      %p781 = scmp.ne.s32.totalorder %s773, %s775
      %p782 = scmp.eq.s32.totalorder %s101, 1
      %p783 = por %p781, %p782
      %p784 = scmp.ne.s32.totalorder %s775, %s776
      %p785 = scmp.eq.s32.totalorder %s101, 0
      %p786 = por %p784, %p785
      %p787 = scmp.ne.s32.totalorder %s775, %s776
      %p788 = scmp.eq.s32.totalorder %s102, 1
      %p789 = por %p787, %p788
      %p791 = scmp.ne.s32.totalorder %s776, %s790
      %p792 = scmp.eq.s32.totalorder %s102, 0
      %p793 = por %p791, %p792
      %s795 = sadd.s32 %s794, 1
      %p798 = scmp.eq.s32.totalorder %s96, 1
      %p799 = scmp.ne.s32.totalorder %s794, %s796
      %p800 = scmp.eq.s32.totalorder %s96, 0
      %p801 = por %p799, %p800
      %p802 = scmp.ne.s32.totalorder %s794, %s796
      %p803 = scmp.eq.s32.totalorder %s101, 1
      %p804 = por %p802, %p803
      %p805 = scmp.ne.s32.totalorder %s796, %s797
      %p806 = scmp.eq.s32.totalorder %s101, 0
      %p807 = por %p805, %p806
      %p808 = scmp.ne.s32.totalorder %s796, %s797
      %p809 = scmp.eq.s32.totalorder %s102, 1
      %p810 = por %p808, %p809
      %p812 = scmp.ne.s32.totalorder %s797, %s811
      %p813 = scmp.eq.s32.totalorder %s102, 0
      %p814 = por %p812, %p813
      %s816 = sadd.s32 %s815, 1
      %p819 = scmp.eq.s32.totalorder %s96, 1
      %p820 = scmp.ne.s32.totalorder %s815, %s817
      %p821 = scmp.eq.s32.totalorder %s96, 0
      %p822 = por %p820, %p821
      %p823 = scmp.ne.s32.totalorder %s815, %s817
      %p824 = scmp.eq.s32.totalorder %s101, 1
      %p825 = por %p823, %p824
      %p826 = scmp.ne.s32.totalorder %s817, %s818
      %p827 = scmp.eq.s32.totalorder %s101, 0
      %p828 = por %p826, %p827
      %p829 = scmp.ne.s32.totalorder %s817, %s818
      %p830 = scmp.eq.s32.totalorder %s102, 1
      %p831 = por %p829, %p830
      %p833 = scmp.ne.s32.totalorder %s818, %s832
      %p834 = scmp.eq.s32.totalorder %s102, 0
      %p835 = por %p833, %p834
      %s836 = ssub.s32 %s103, %s115
      %s837 = ssub.s32 %s104, %s111
      %s838 = sor.u32 %s836, %s837
      %p839 = scmp.eq.s32.totalorder %s838, 0
      %s841 = sadd.s32 %s840, 1
      %s842 = scalar_select %p839, %s840, %s841
      %p845 = pneg %p839
      %p846 = scmp.eq.s32.totalorder %s96, 1
      %p847 = por %p845, %p846
      %p848 = scmp.ne.s32.totalorder %s840, %s843
      %p849 = scmp.eq.s32.totalorder %s96, 0
      %p850 = por %p848, %p849
      %p851 = scmp.ne.s32.totalorder %s840, %s843
      %p852 = scmp.eq.s32.totalorder %s101, 1
      %p853 = por %p851, %p852
      %p854 = scmp.ne.s32.totalorder %s843, %s844
      %p855 = scmp.eq.s32.totalorder %s101, 0
      %p856 = por %p854, %p855
      %p857 = scmp.ne.s32.totalorder %s843, %s844
      %p858 = scmp.eq.s32.totalorder %s102, 1
      %p859 = por %p857, %p858
      %p861 = scmp.ne.s32.totalorder %s844, %s860
      %p862 = scmp.eq.s32.totalorder %s102, 0
      %p863 = por %p861, %p862
      %p864 = scmp.le.s32.totalorder 1, %s96
      %p865 = scmp.lt.s32.totalorder %s96, 3
      %p866 = pnand %p864, %p865
      %p867 = pneg %p866
      // Predicated region
      $region9: #{tpu_custom_call.1} parent=5 // pred_check
        _
      $region10: #{tpu_custom_call.1} parent=5 // pred_check_branch
        %869 = sbr.rel (%p866) target = $region12
      $region11: #{tpu_custom_call.1} parent=5 // pred_region
        %s870 = ssub.s32 %s96, 1
        // Predicated region
        $region13: #{tpu_custom_call.1} parent=11 // pred_check
          %p871 = pneg %p209
        $region14: #{tpu_custom_call.1} parent=11 // pred_check_branch
          %873 = sbr.rel (%p871) target = $region16
        $region15: #{tpu_custom_call.1} parent=11 // pred_region
          %s875 = ssub.s32 128, 128
          %876 = vsyncadd [#allocation9], %s875
          %s878 = sshll.u32 [#allocation8], 4
          %s879 = int_to_ptr.vmem [resolvable:$true] %s878
          %881 = dma.hbm_to_vmem [thread:$0]  %s7, 128, %s879, [#allocation9]
        $region16: #{tpu_custom_call.1} parent=11 // pred_fallthru
          _
        // Predicated region
        $region17: #{tpu_custom_call.1} parent=11 // pred_check
          %p882 = pneg %p230
        $region18: #{tpu_custom_call.1} parent=11 // pred_check_branch
          %884 = sbr.rel (%p882) target = $region20
        $region19: #{tpu_custom_call.1} parent=11 // pred_region
          %s886 = ssub.s32 128, 128
          %887 = vsyncadd [#allocation9], %s886
          %s889 = sshll.u32 [#allocation10], 4
          %s890 = int_to_ptr.vmem [resolvable:$true] %s889
          %892 = dma.hbm_to_vmem [thread:$0]  %s9, 128, %s890, [#allocation9]
        $region20: #{tpu_custom_call.1} parent=11 // pred_fallthru
          _
        // Predicated region
        $region21: #{tpu_custom_call.1} parent=11 // pred_check
          %p893 = pneg %p256
        $region22: #{tpu_custom_call.1} parent=11 // pred_check_branch
          %895 = sbr.rel (%p893) target = $region24
        $region23: #{tpu_custom_call.1} parent=11 // pred_region
          %s897 = ssub.s32 128, 128
          %898 = vsyncadd [#allocation12], %s897
          %s899 = smul.addr %s106, 128
          %s900 = scalar_lea.hbm %s11, %s899
          %s902 = sshll.u32 [#allocation11], 4
          %s903 = int_to_ptr.vmem [resolvable:$true] %s902
          %905 = dma.hbm_to_vmem [thread:$0]  %s900, 128, %s903, [#allocation12]
        $region24: #{tpu_custom_call.1} parent=11 // pred_fallthru
          _
        // Predicated region
        $region25: #{tpu_custom_call.1} parent=11 // pred_check
          %p906 = pneg %p303
        $region26: #{tpu_custom_call.1} parent=11 // pred_check_branch
          %908 = sbr.rel (%p906) target = $region28
        $region27: #{tpu_custom_call.1} parent=11 // pred_region
          %s910 = ssub.s32 256, 256
          %911 = vsyncadd [#allocation6], %s910
          %s912 = sshll.u32 [#allocation14], 4
          %s913 = int_to_ptr.vmem [resolvable:$true] %s912
          %918 = dma.hbm_to_vmem [thread:$0]  %s15, 256, %s913, [#allocation6], 64, 64, 4
        $region28: #{tpu_custom_call.1} parent=11 // pred_fallthru
          _
        // Predicated region
        $region29: #{tpu_custom_call.1} parent=11 // pred_check
          %p919 = pneg %p324
        $region30: #{tpu_custom_call.1} parent=11 // pred_check_branch
          %921 = sbr.rel (%p919) target = $region32
        $region31: #{tpu_custom_call.1} parent=11 // pred_region
          %s923 = ssub.s32 16, 16
          %924 = vsyncadd [#allocation9], %s923
          %s926 = sshll.u32 [#allocation15], 4
          %s927 = int_to_ptr.vmem [resolvable:$true] %s926
          %929 = dma.hbm_to_vmem [thread:$0]  %s17, 16, %s927, [#allocation9]
        $region32: #{tpu_custom_call.1} parent=11 // pred_fallthru
          _
        // Predicated region
        $region33: #{tpu_custom_call.1} parent=11 // pred_check
          %p930 = pneg %p345
        $region34: #{tpu_custom_call.1} parent=11 // pred_check_branch
          %932 = sbr.rel (%p930) target = $region36
        $region35: #{tpu_custom_call.1} parent=11 // pred_region
          %s934 = ssub.s32 256, 256
          %935 = vsyncadd [#allocation12], %s934
          %s936 = sshll.u32 [#allocation16], 4
          %s937 = int_to_ptr.vmem [resolvable:$true] %s936
          %942 = dma.hbm_to_vmem [thread:$0]  %s19, 256, %s937, [#allocation12], 64, 64, 4
        $region36: #{tpu_custom_call.1} parent=11 // pred_fallthru
          _
        // Predicated region
        $region37: #{tpu_custom_call.1} parent=11 // pred_check
          %p943 = pneg %p366
        $region38: #{tpu_custom_call.1} parent=11 // pred_check_branch
          %945 = sbr.rel (%p943) target = $region40
        $region39: #{tpu_custom_call.1} parent=11 // pred_region
          %s947 = ssub.s32 16, 16
          %948 = vsyncadd [#allocation18], %s947
          %s950 = sshll.u32 [#allocation17], 4
          %s951 = int_to_ptr.vmem [resolvable:$true] %s950
          %953 = dma.hbm_to_vmem [thread:$0]  %s21, 16, %s951, [#allocation18]
        $region40: #{tpu_custom_call.1} parent=11 // pred_fallthru
          _
        // Predicated region
        $region41: #{tpu_custom_call.1} parent=11 // pred_check
          %p954 = pneg %p387
        $region42: #{tpu_custom_call.1} parent=11 // pred_check_branch
          %956 = sbr.rel (%p954) target = $region44
        $region43: #{tpu_custom_call.1} parent=11 // pred_region
          %s958 = ssub.s32 256, 256
          %959 = vsyncadd [#allocation18], %s958
          %s960 = sshll.u32 [#allocation19], 4
          %s961 = int_to_ptr.vmem [resolvable:$true] %s960
          %966 = dma.hbm_to_vmem [thread:$0]  %s23, 256, %s961, [#allocation18], 64, 64, 4
        $region44: #{tpu_custom_call.1} parent=11 // pred_fallthru
          _
        // Predicated region
        $region45: #{tpu_custom_call.1} parent=11 // pred_check
          %p967 = pneg %p408
        $region46: #{tpu_custom_call.1} parent=11 // pred_check_branch
          %969 = sbr.rel (%p967) target = $region48
        $region47: #{tpu_custom_call.1} parent=11 // pred_region
          %s971 = ssub.s32 16, 16
          %972 = vsyncadd [#allocation21], %s971
          %s974 = sshll.u32 [#allocation20], 4
          %s975 = int_to_ptr.vmem [resolvable:$true] %s974
          %977 = dma.hbm_to_vmem [thread:$0]  %s25, 16, %s975, [#allocation21]
        $region48: #{tpu_custom_call.1} parent=11 // pred_fallthru
          _
        // Predicated region
        $region49: #{tpu_custom_call.1} parent=11 // pred_check
          %p978 = pneg %p429
        $region50: #{tpu_custom_call.1} parent=11 // pred_check_branch
          %980 = sbr.rel (%p978) target = $region52
        $region51: #{tpu_custom_call.1} parent=11 // pred_region
          %s982 = ssub.s32 256, 256
          %983 = vsyncadd [#allocation21], %s982
          %s984 = sshll.u32 [#allocation22], 4
          %s985 = int_to_ptr.vmem [resolvable:$true] %s984
          %990 = dma.hbm_to_vmem [thread:$0]  %s27, 256, %s985, [#allocation21], 64, 64, 4
        $region52: #{tpu_custom_call.1} parent=11 // pred_fallthru
          _
        // Predicated region
        $region53: #{tpu_custom_call.1} parent=11 // pred_check
          %p991 = pneg %p450
        $region54: #{tpu_custom_call.1} parent=11 // pred_check_branch
          %993 = sbr.rel (%p991) target = $region56
        $region55: #{tpu_custom_call.1} parent=11 // pred_region
          %s995 = ssub.s32 16, 16
          %996 = vsyncadd [#allocation24], %s995
          %s998 = sshll.u32 [#allocation23], 4
          %s999 = int_to_ptr.vmem [resolvable:$true] %s998
          %1001 = dma.hbm_to_vmem [thread:$0]  %s29, 16, %s999, [#allocation24]
        $region56: #{tpu_custom_call.1} parent=11 // pred_fallthru
          _
        // Predicated region
        $region57: #{tpu_custom_call.1} parent=11 // pred_check
          %p1002 = pneg %p471
        $region58: #{tpu_custom_call.1} parent=11 // pred_check_branch
          %1004 = sbr.rel (%p1002) target = $region60
        $region59: #{tpu_custom_call.1} parent=11 // pred_region
          %s1006 = ssub.s32 256, 256
          %1007 = vsyncadd [#allocation24], %s1006
          %s1008 = sshll.u32 [#allocation25], 4
          %s1009 = int_to_ptr.vmem [resolvable:$true] %s1008
          %1014 = dma.hbm_to_vmem [thread:$0]  %s31, 256, %s1009, [#allocation24], 64, 64, 4
        $region60: #{tpu_custom_call.1} parent=11 // pred_fallthru
          _
        // Predicated region
        $region61: #{tpu_custom_call.1} parent=11 // pred_check
          %p1015 = pneg %p492
        $region62: #{tpu_custom_call.1} parent=11 // pred_check_branch
          %1017 = sbr.rel (%p1015) target = $region64
        $region63: #{tpu_custom_call.1} parent=11 // pred_region
          %s1019 = ssub.s32 16, 16
          %1020 = vsyncadd [#allocation27], %s1019
          %s1022 = sshll.u32 [#allocation26], 4
          %s1023 = int_to_ptr.vmem [resolvable:$true] %s1022
          %1025 = dma.hbm_to_vmem [thread:$0]  %s33, 16, %s1023, [#allocation27]
        $region64: #{tpu_custom_call.1} parent=11 // pred_fallthru
          _
        // Predicated region
        $region65: #{tpu_custom_call.1} parent=11 // pred_check
          %p1026 = pneg %p513
        $region66: #{tpu_custom_call.1} parent=11 // pred_check_branch
          %1028 = sbr.rel (%p1026) target = $region68
        $region67: #{tpu_custom_call.1} parent=11 // pred_region
          %s1030 = ssub.s32 256, 256
          %1031 = vsyncadd [#allocation27], %s1030
          %s1032 = sshll.u32 [#allocation28], 4
          %s1033 = int_to_ptr.vmem [resolvable:$true] %s1032
          %1038 = dma.hbm_to_vmem [thread:$0]  %s35, 256, %s1033, [#allocation27], 64, 64, 4
        $region68: #{tpu_custom_call.1} parent=11 // pred_fallthru
          _
        // Predicated region
        $region69: #{tpu_custom_call.1} parent=11 // pred_check
          %p1039 = pneg %p534
        $region70: #{tpu_custom_call.1} parent=11 // pred_check_branch
          %1041 = sbr.rel (%p1039) target = $region72
        $region71: #{tpu_custom_call.1} parent=11 // pred_region
          %s1043 = ssub.s32 16, 16
          %1044 = vsyncadd [#allocation30], %s1043
          %s1046 = sshll.u32 [#allocation29], 4
          %s1047 = int_to_ptr.vmem [resolvable:$true] %s1046
          %1049 = dma.hbm_to_vmem [thread:$0]  %s37, 16, %s1047, [#allocation30]
        $region72: #{tpu_custom_call.1} parent=11 // pred_fallthru
          _
        // Predicated region
        $region73: #{tpu_custom_call.1} parent=11 // pred_check
          %p1050 = pneg %p555
        $region74: #{tpu_custom_call.1} parent=11 // pred_check_branch
          %1052 = sbr.rel (%p1050) target = $region76
        $region75: #{tpu_custom_call.1} parent=11 // pred_region
          %s1054 = ssub.s32 256, 256
          %1055 = vsyncadd [#allocation30], %s1054
          %s1056 = sshll.u32 [#allocation31], 4
          %s1057 = int_to_ptr.vmem [resolvable:$true] %s1056
          %1062 = dma.hbm_to_vmem [thread:$0]  %s39, 256, %s1057, [#allocation30], 64, 64, 4
        $region76: #{tpu_custom_call.1} parent=11 // pred_fallthru
          _
        // Predicated region
        $region77: #{tpu_custom_call.1} parent=11 // pred_check
          %p1063 = pneg %p576
        $region78: #{tpu_custom_call.1} parent=11 // pred_check_branch
          %1065 = sbr.rel (%p1063) target = $region80
        $region79: #{tpu_custom_call.1} parent=11 // pred_region
          %s1067 = ssub.s32 16, 16
          %1068 = vsyncadd [#allocation33], %s1067
          %s1070 = sshll.u32 [#allocation32], 4
          %s1071 = int_to_ptr.vmem [resolvable:$true] %s1070
          %1073 = dma.hbm_to_vmem [thread:$0]  %s41, 16, %s1071, [#allocation33]
        $region80: #{tpu_custom_call.1} parent=11 // pred_fallthru
          _
        // Predicated region
        $region81: #{tpu_custom_call.1} parent=11 // pred_check
          %p1074 = pneg %p597
        $region82: #{tpu_custom_call.1} parent=11 // pred_check_branch
          %1076 = sbr.rel (%p1074) target = $region84
        $region83: #{tpu_custom_call.1} parent=11 // pred_region
          %s1078 = ssub.s32 256, 256
          %1079 = vsyncadd [#allocation33], %s1078
          %s1080 = sshll.u32 [#allocation34], 4
          %s1081 = int_to_ptr.vmem [resolvable:$true] %s1080
          %1086 = dma.hbm_to_vmem [thread:$0]  %s43, 256, %s1081, [#allocation33], 64, 64, 4
        $region84: #{tpu_custom_call.1} parent=11 // pred_fallthru
          _
        // Predicated region
        $region85: #{tpu_custom_call.1} parent=11 // pred_check
          %p1087 = pneg %p618
        $region86: #{tpu_custom_call.1} parent=11 // pred_check_branch
          %1089 = sbr.rel (%p1087) target = $region88
        $region87: #{tpu_custom_call.1} parent=11 // pred_region
          %s1091 = ssub.s32 16, 16
          %1092 = vsyncadd [#allocation36], %s1091
          %s1094 = sshll.u32 [#allocation35], 4
          %s1095 = int_to_ptr.vmem [resolvable:$true] %s1094
          %1097 = dma.hbm_to_vmem [thread:$0]  %s45, 16, %s1095, [#allocation36]
        $region88: #{tpu_custom_call.1} parent=11 // pred_fallthru
          _
        // Predicated region
        $region89: #{tpu_custom_call.1} parent=11 // pred_check
          %p1098 = pneg %p639
        $region90: #{tpu_custom_call.1} parent=11 // pred_check_branch
          %1100 = sbr.rel (%p1098) target = $region92
        $region91: #{tpu_custom_call.1} parent=11 // pred_region
          %s1102 = ssub.s32 256, 256
          %1103 = vsyncadd [#allocation36], %s1102
          %s1104 = sshll.u32 [#allocation37], 4
          %s1105 = int_to_ptr.vmem [resolvable:$true] %s1104
          %1110 = dma.hbm_to_vmem [thread:$0]  %s47, 256, %s1105, [#allocation36], 64, 64, 4
        $region92: #{tpu_custom_call.1} parent=11 // pred_fallthru
          _
        // Predicated region
        $region93: #{tpu_custom_call.1} parent=11 // pred_check
          %p1111 = pneg %p660
        $region94: #{tpu_custom_call.1} parent=11 // pred_check_branch
          %1113 = sbr.rel (%p1111) target = $region96
        $region95: #{tpu_custom_call.1} parent=11 // pred_region
          %s1115 = ssub.s32 16, 16
          %1116 = vsyncadd [#allocation39], %s1115
          %s1118 = sshll.u32 [#allocation38], 4
          %s1119 = int_to_ptr.vmem [resolvable:$true] %s1118
          %1121 = dma.hbm_to_vmem [thread:$0]  %s49, 16, %s1119, [#allocation39]
        $region96: #{tpu_custom_call.1} parent=11 // pred_fallthru
          _
        // Predicated region
        $region97: #{tpu_custom_call.1} parent=11 // pred_check
          %p1122 = pneg %p681
        $region98: #{tpu_custom_call.1} parent=11 // pred_check_branch
          %1124 = sbr.rel (%p1122) target = $region100
        $region99: #{tpu_custom_call.1} parent=11 // pred_region
          %s1126 = ssub.s32 1024, 1024
          %1127 = vsyncadd [#allocation39], %s1126
          %s1128 = sshll.u32 [#allocation40], 4
          %s1129 = int_to_ptr.vmem [resolvable:$true] %s1128
          %1134 = dma.hbm_to_vmem [thread:$0]  %s51, 1024, %s1129, [#allocation39], 64, 64, 4
        $region100: #{tpu_custom_call.1} parent=11 // pred_fallthru
          _
        // Predicated region
        $region101: #{tpu_custom_call.1} parent=11 // pred_check
          %p1135 = pneg %p702
        $region102: #{tpu_custom_call.1} parent=11 // pred_check_branch
          %1137 = sbr.rel (%p1135) target = $region104
        $region103: #{tpu_custom_call.1} parent=11 // pred_region
          %s1139 = ssub.s32 16, 16
          %1140 = vsyncadd [#allocation42], %s1139
          %s1142 = sshll.u32 [#allocation41], 4
          %s1143 = int_to_ptr.vmem [resolvable:$true] %s1142
          %1145 = dma.hbm_to_vmem [thread:$0]  %s53, 16, %s1143, [#allocation42]
        $region104: #{tpu_custom_call.1} parent=11 // pred_fallthru
          _
        // Predicated region
        $region105: #{tpu_custom_call.1} parent=11 // pred_check
          %p1146 = pneg %p723
        $region106: #{tpu_custom_call.1} parent=11 // pred_check_branch
          %1148 = sbr.rel (%p1146) target = $region108
        $region107: #{tpu_custom_call.1} parent=11 // pred_region
          %s1150 = ssub.s32 16, 16
          %1151 = vsyncadd [#allocation42], %s1150
          %s1153 = sshll.u32 [#allocation43], 4
          %s1154 = int_to_ptr.vmem [resolvable:$true] %s1153
          %1156 = dma.hbm_to_vmem [thread:$0]  %s55, 16, %s1154, [#allocation42]
        $region108: #{tpu_custom_call.1} parent=11 // pred_fallthru
          _
        // Predicated region
        $region109: #{tpu_custom_call.1} parent=11 // pred_check
          %p1157 = pneg %p744
        $region110: #{tpu_custom_call.1} parent=11 // pred_check_branch
          %1159 = sbr.rel (%p1157) target = $region112
        $region111: #{tpu_custom_call.1} parent=11 // pred_region
          %s1161 = ssub.s32 16, 16
          %1162 = vsyncadd [#allocation45], %s1161
          %s1164 = sshll.u32 [#allocation44], 4
          %s1165 = int_to_ptr.vmem [resolvable:$true] %s1164
          %1167 = dma.hbm_to_vmem [thread:$0]  %s57, 16, %s1165, [#allocation45]
        $region112: #{tpu_custom_call.1} parent=11 // pred_fallthru
          _
        // Predicated region
        $region113: #{tpu_custom_call.1} parent=11 // pred_check
          %p1168 = pneg %p765
        $region114: #{tpu_custom_call.1} parent=11 // pred_check_branch
          %1170 = sbr.rel (%p1168) target = $region116
        $region115: #{tpu_custom_call.1} parent=11 // pred_region
          %s1172 = ssub.s32 16, 16
          %1173 = vsyncadd [#allocation45], %s1172
          %s1175 = sshll.u32 [#allocation46], 4
          %s1176 = int_to_ptr.vmem [resolvable:$true] %s1175
          %1178 = dma.hbm_to_vmem [thread:$0]  %s59, 16, %s1176, [#allocation45]
        $region116: #{tpu_custom_call.1} parent=11 // pred_fallthru
          _
        // Predicated region
        $region117: #{tpu_custom_call.1} parent=11 // pred_check
          %p1179 = pneg %p786
        $region118: #{tpu_custom_call.1} parent=11 // pred_check_branch
          %1181 = sbr.rel (%p1179) target = $region120
        $region119: #{tpu_custom_call.1} parent=11 // pred_region
          %s1183 = ssub.s32 16, 16
          %1184 = vsyncadd [#allocation48], %s1183
          %s1186 = sshll.u32 [#allocation47], 4
          %s1187 = int_to_ptr.vmem [resolvable:$true] %s1186
          %1189 = dma.hbm_to_vmem [thread:$0]  %s61, 16, %s1187, [#allocation48]
        $region120: #{tpu_custom_call.1} parent=11 // pred_fallthru
          _
        // Predicated region
        $region121: #{tpu_custom_call.1} parent=11 // pred_check
          %p1190 = pneg %p807
        $region122: #{tpu_custom_call.1} parent=11 // pred_check_branch
          %1192 = sbr.rel (%p1190) target = $region124
        $region123: #{tpu_custom_call.1} parent=11 // pred_region
          %s1194 = ssub.s32 16, 16
          %1195 = vsyncadd [#allocation48], %s1194
          %s1197 = sshll.u32 [#allocation49], 4
          %s1198 = int_to_ptr.vmem [resolvable:$true] %s1197
          %1200 = dma.hbm_to_vmem [thread:$0]  %s63, 16, %s1198, [#allocation48]
        $region124: #{tpu_custom_call.1} parent=11 // pred_fallthru
          _
        // Predicated region
        $region125: #{tpu_custom_call.1} parent=11 // pred_check
          %p1201 = pneg %p828
        $region126: #{tpu_custom_call.1} parent=11 // pred_check_branch
          %1203 = sbr.rel (%p1201) target = $region128
        $region127: #{tpu_custom_call.1} parent=11 // pred_region
          %s1205 = ssub.s32 16, 16
          %1206 = vsyncadd [#allocation51], %s1205
          %s1208 = sshll.u32 [#allocation50], 4
          %s1209 = int_to_ptr.vmem [resolvable:$true] %s1208
          %1211 = dma.hbm_to_vmem [thread:$0]  %s65, 16, %s1209, [#allocation51]
        $region128: #{tpu_custom_call.1} parent=11 // pred_fallthru
          _
      $region12: #{tpu_custom_call.1} parent=5 // pred_fallthru
        _
      %p1212 = scmp.lt.s32.totalorder %s96, 2
      // Predicated region
      $region129: #{tpu_custom_call.1} parent=5 // pred_check
        %p1213 = pneg %p1212
      $region130: #{tpu_custom_call.1} parent=5 // pred_check_branch
        %1215 = sbr.rel (%p1213) target = $region132
      $region131: #{tpu_custom_call.1} parent=5 // pred_region
        // Predicated region
        $region133: #{tpu_custom_call.1} parent=131 // pred_check
          %p1216 = pneg %p130
        $region134: #{tpu_custom_call.1} parent=131 // pred_check_branch
          %1218 = sbr.rel (%p1216) target = $region136
        $region135: #{tpu_custom_call.1} parent=131 // pred_region
          %s1219 = sand.u32 %s96, 1
          %s1220 = scalar_lea.sflag [#allocation3], %s1219
          %s1221 = sand.u32 %s120, 1
          %s1222 = smul.addr %s1221, 8
          %s1223 = scalar_lea.vmem [#allocation2], %s1222
          %s1225 = ssub.s32 128, 128
          %1226 = vsyncadd %s1220, %s1225
          %s1227 = sadd.s32 %s104, %s103
          %s1228 = smul.addr %s1227, 128
          %s1229 = scalar_lea.hbm %s1, %s1228
          %s1231 = sshll.u32 %s1223, 4
          %s1232 = int_to_ptr.vmem [resolvable:$true] %s1231
          %1234 = dma.hbm_to_vmem [thread:$0]  %s1229, 128, %s1232, %s1220
        $region136: #{tpu_custom_call.1} parent=131 // pred_fallthru
          _
        // Predicated region
        $region137: #{tpu_custom_call.1} parent=131 // pred_check
          %p1235 = pneg %p156
        $region138: #{tpu_custom_call.1} parent=131 // pred_check_branch
          %1237 = sbr.rel (%p1235) target = $region140
        $region139: #{tpu_custom_call.1} parent=131 // pred_region
          %s1238 = sand.u32 %s96, 1
          %s1239 = scalar_lea.sflag [#allocation6], %s1238
          %s1240 = sand.u32 %s146, 1
          %s1241 = smul.addr %s1240, 8
          %s1242 = scalar_lea.vmem [#allocation5], %s1241
          %s1244 = ssub.s32 128, 128
          %1245 = vsyncadd %s1239, %s1244
          %s1246 = smul.addr %s103, 128
          %s1247 = scalar_lea.hbm %s3, %s1246
          %s1249 = sshll.u32 %s1242, 4
          %s1250 = int_to_ptr.vmem [resolvable:$true] %s1249
          %1252 = dma.hbm_to_vmem [thread:$0]  %s1247, 128, %s1250, %s1239
        $region140: #{tpu_custom_call.1} parent=131 // pred_fallthru
          _
        // Predicated region
        $region141: #{tpu_custom_call.1} parent=131 // pred_check
          %p1253 = pneg %p182
        $region142: #{tpu_custom_call.1} parent=131 // pred_check_branch
          %1255 = sbr.rel (%p1253) target = $region144
        $region143: #{tpu_custom_call.1} parent=131 // pred_region
          %s1256 = sand.u32 %s96, 1
          %s1257 = scalar_lea.sflag [#allocation6], %s1256
          %s1258 = sand.u32 %s172, 1
          %s1259 = smul.addr %s1258, 8
          %s1260 = scalar_lea.vmem [#allocation7], %s1259
          %s1262 = ssub.s32 128, 128
          %1263 = vsyncadd %s1257, %s1262
          %s1264 = smul.addr %s103, 128
          %s1265 = scalar_lea.hbm %s5, %s1264
          %s1267 = sshll.u32 %s1260, 4
          %s1268 = int_to_ptr.vmem [resolvable:$true] %s1267
          %1270 = dma.hbm_to_vmem [thread:$0]  %s1265, 128, %s1268, %s1257
        $region144: #{tpu_custom_call.1} parent=131 // pred_fallthru
          _
        // Predicated region
        $region145: #{tpu_custom_call.1} parent=131 // pred_check
          %p1271 = pneg %p276
        $region146: #{tpu_custom_call.1} parent=131 // pred_check_branch
          %1273 = sbr.rel (%p1271) target = $region148
        $region147: #{tpu_custom_call.1} parent=131 // pred_region
          %s1274 = sand.u32 %s96, 1
          %s1275 = scalar_lea.sflag [#allocation3], %s1274
          %s1276 = sand.u32 %s266, 1
          %s1277 = scalar_lea.vmem [#allocation13], %s1276
          %s1279 = ssub.s32 16, 16
          %1280 = vsyncadd %s1275, %s1279
          %s1281 = smul.addr %s103, 16
          %s1282 = scalar_lea.hbm %s13, %s1281
          %s1284 = sshll.u32 %s1277, 4
          %s1285 = int_to_ptr.vmem [resolvable:$true] %s1284
          %1287 = dma.hbm_to_vmem [thread:$0]  %s1282, 16, %s1285, %s1275
        $region148: #{tpu_custom_call.1} parent=131 // pred_fallthru
          _
      $region132: #{tpu_custom_call.1} parent=5 // pred_fallthru
        _
      %p1288 = scmp.le.s32.totalorder 1, %s96
      %p1289 = scmp.lt.s32.totalorder %s96, 3
      %p1290 = pnand %p1288, %p1289
      %p1291 = pneg %p1290
      // Predicated region
      $region149: #{tpu_custom_call.1} parent=5 // pred_check
        _
      $region150: #{tpu_custom_call.1} parent=5 // pred_check_branch
        %1293 = sbr.rel (%p1290) target = $region152
      $region151: #{tpu_custom_call.1} parent=5 // pred_region
        %s1294 = ssub.s32 %s96, 1
        %s1295 = sand.u32 %s101, 1
        %s1296 = scalar_lea.sflag [#allocation3], %s1295
        %s1297 = sand.u32 %s123, 1
        %s1298 = smul.addr %s1297, 8
        %s1299 = scalar_lea.vmem [#allocation2], %s1298
        // Predicated region
        $region153: #{tpu_custom_call.1} parent=151 // pred_check
          %p1300 = pneg %p136
        $region154: #{tpu_custom_call.1} parent=151 // pred_check_branch
          %1302 = sbr.rel (%p1300) target = $region156
        $region155: #{tpu_custom_call.1} parent=151 // pred_region
          %1303 = dma.done %s1296, 128
        $region156: #{tpu_custom_call.1} parent=151 // pred_fallthru
          _
        %s1304 = sand.u32 %s101, 1
        %s1305 = scalar_lea.sflag [#allocation6], %s1304
        %s1306 = sand.u32 %s149, 1
        %s1307 = smul.addr %s1306, 8
        %s1308 = scalar_lea.vmem [#allocation5], %s1307
        // Predicated region
        $region157: #{tpu_custom_call.1} parent=151 // pred_check
          %p1309 = pneg %p162
        $region158: #{tpu_custom_call.1} parent=151 // pred_check_branch
          %1311 = sbr.rel (%p1309) target = $region160
        $region159: #{tpu_custom_call.1} parent=151 // pred_region
          %1312 = dma.done %s1305, 128
        $region160: #{tpu_custom_call.1} parent=151 // pred_fallthru
          _
        %s1313 = sand.u32 %s101, 1
        %s1314 = scalar_lea.sflag [#allocation6], %s1313
        %s1315 = sand.u32 %s175, 1
        %s1316 = smul.addr %s1315, 8
        %s1317 = scalar_lea.vmem [#allocation7], %s1316
        // Predicated region
        $region161: #{tpu_custom_call.1} parent=151 // pred_check
          %p1318 = pneg %p188
        $region162: #{tpu_custom_call.1} parent=151 // pred_check_branch
          %1320 = sbr.rel (%p1318) target = $region164
        $region163: #{tpu_custom_call.1} parent=151 // pred_region
          %1321 = dma.done %s1314, 128
        $region164: #{tpu_custom_call.1} parent=151 // pred_fallthru
          _
        // Predicated region
        $region165: #{tpu_custom_call.1} parent=151 // pred_check
          %p1322 = pneg %p209
        $region166: #{tpu_custom_call.1} parent=151 // pred_check_branch
          %1324 = sbr.rel (%p1322) target = $region168
        $region167: #{tpu_custom_call.1} parent=151 // pred_region
          %1325 = dma.done [#allocation9], 128
        $region168: #{tpu_custom_call.1} parent=151 // pred_fallthru
          _
        // Predicated region
        $region169: #{tpu_custom_call.1} parent=151 // pred_check
          %p1326 = pneg %p230
        $region170: #{tpu_custom_call.1} parent=151 // pred_check_branch
          %1328 = sbr.rel (%p1326) target = $region172
        $region171: #{tpu_custom_call.1} parent=151 // pred_region
          %1329 = dma.done [#allocation9], 128
        $region172: #{tpu_custom_call.1} parent=151 // pred_fallthru
          _
        // Predicated region
        $region173: #{tpu_custom_call.1} parent=151 // pred_check
          %p1330 = pneg %p256
        $region174: #{tpu_custom_call.1} parent=151 // pred_check_branch
          %1332 = sbr.rel (%p1330) target = $region176
        $region175: #{tpu_custom_call.1} parent=151 // pred_region
          %1333 = dma.done [#allocation12], 128
        $region176: #{tpu_custom_call.1} parent=151 // pred_fallthru
          _
        %s1334 = sand.u32 %s101, 1
        %s1335 = scalar_lea.sflag [#allocation3], %s1334
        %s1336 = sand.u32 %s269, 1
        %s1337 = scalar_lea.vmem [#allocation13], %s1336
        // Predicated region
        $region177: #{tpu_custom_call.1} parent=151 // pred_check
          %p1338 = pneg %p282
        $region178: #{tpu_custom_call.1} parent=151 // pred_check_branch
          %1340 = sbr.rel (%p1338) target = $region180
        $region179: #{tpu_custom_call.1} parent=151 // pred_region
          %1341 = dma.done %s1335, 16
        $region180: #{tpu_custom_call.1} parent=151 // pred_fallthru
          _
        // Predicated region
        $region181: #{tpu_custom_call.1} parent=151 // pred_check
          %p1342 = pneg %p303
        $region182: #{tpu_custom_call.1} parent=151 // pred_check_branch
          %1344 = sbr.rel (%p1342) target = $region184
        $region183: #{tpu_custom_call.1} parent=151 // pred_region
          %1345 = dma.done [#allocation6], 256
        $region184: #{tpu_custom_call.1} parent=151 // pred_fallthru
          _
        // Predicated region
        $region185: #{tpu_custom_call.1} parent=151 // pred_check
          %p1346 = pneg %p324
        $region186: #{tpu_custom_call.1} parent=151 // pred_check_branch
          %1348 = sbr.rel (%p1346) target = $region188
        $region187: #{tpu_custom_call.1} parent=151 // pred_region
          %1349 = dma.done [#allocation9], 16
        $region188: #{tpu_custom_call.1} parent=151 // pred_fallthru
          _
        // Predicated region
        $region189: #{tpu_custom_call.1} parent=151 // pred_check
          %p1350 = pneg %p345
        $region190: #{tpu_custom_call.1} parent=151 // pred_check_branch
          %1352 = sbr.rel (%p1350) target = $region192
        $region191: #{tpu_custom_call.1} parent=151 // pred_region
          %1353 = dma.done [#allocation12], 256
        $region192: #{tpu_custom_call.1} parent=151 // pred_fallthru
          _
        // Predicated region
        $region193: #{tpu_custom_call.1} parent=151 // pred_check
          %p1354 = pneg %p366
        $region194: #{tpu_custom_call.1} parent=151 // pred_check_branch
          %1356 = sbr.rel (%p1354) target = $region196
        $region195: #{tpu_custom_call.1} parent=151 // pred_region
          %1357 = dma.done [#allocation18], 16
        $region196: #{tpu_custom_call.1} parent=151 // pred_fallthru
          _
        // Predicated region
        $region197: #{tpu_custom_call.1} parent=151 // pred_check
          %p1358 = pneg %p387
        $region198: #{tpu_custom_call.1} parent=151 // pred_check_branch
          %1360 = sbr.rel (%p1358) target = $region200
        $region199: #{tpu_custom_call.1} parent=151 // pred_region
          %1361 = dma.done [#allocation18], 256
        $region200: #{tpu_custom_call.1} parent=151 // pred_fallthru
          _
        // Predicated region
        $region201: #{tpu_custom_call.1} parent=151 // pred_check
          %p1362 = pneg %p408
        $region202: #{tpu_custom_call.1} parent=151 // pred_check_branch
          %1364 = sbr.rel (%p1362) target = $region204
        $region203: #{tpu_custom_call.1} parent=151 // pred_region
          %1365 = dma.done [#allocation21], 16
        $region204: #{tpu_custom_call.1} parent=151 // pred_fallthru
          _
        // Predicated region
        $region205: #{tpu_custom_call.1} parent=151 // pred_check
          %p1366 = pneg %p429
        $region206: #{tpu_custom_call.1} parent=151 // pred_check_branch
          %1368 = sbr.rel (%p1366) target = $region208
        $region207: #{tpu_custom_call.1} parent=151 // pred_region
          %1369 = dma.done [#allocation21], 256
        $region208: #{tpu_custom_call.1} parent=151 // pred_fallthru
          _
        // Predicated region
        $region209: #{tpu_custom_call.1} parent=151 // pred_check
          %p1370 = pneg %p450
        $region210: #{tpu_custom_call.1} parent=151 // pred_check_branch
          %1372 = sbr.rel (%p1370) target = $region212
        $region211: #{tpu_custom_call.1} parent=151 // pred_region
          %1373 = dma.done [#allocation24], 16
        $region212: #{tpu_custom_call.1} parent=151 // pred_fallthru
          _
        // Predicated region
        $region213: #{tpu_custom_call.1} parent=151 // pred_check
          %p1374 = pneg %p471
        $region214: #{tpu_custom_call.1} parent=151 // pred_check_branch
          %1376 = sbr.rel (%p1374) target = $region216
        $region215: #{tpu_custom_call.1} parent=151 // pred_region
          %1377 = dma.done [#allocation24], 256
        $region216: #{tpu_custom_call.1} parent=151 // pred_fallthru
          _
        // Predicated region
        $region217: #{tpu_custom_call.1} parent=151 // pred_check
          %p1378 = pneg %p492
        $region218: #{tpu_custom_call.1} parent=151 // pred_check_branch
          %1380 = sbr.rel (%p1378) target = $region220
        $region219: #{tpu_custom_call.1} parent=151 // pred_region
          %1381 = dma.done [#allocation27], 16
        $region220: #{tpu_custom_call.1} parent=151 // pred_fallthru
          _
        // Predicated region
        $region221: #{tpu_custom_call.1} parent=151 // pred_check
          %p1382 = pneg %p513
        $region222: #{tpu_custom_call.1} parent=151 // pred_check_branch
          %1384 = sbr.rel (%p1382) target = $region224
        $region223: #{tpu_custom_call.1} parent=151 // pred_region
          %1385 = dma.done [#allocation27], 256
        $region224: #{tpu_custom_call.1} parent=151 // pred_fallthru
          _
        // Predicated region
        $region225: #{tpu_custom_call.1} parent=151 // pred_check
          %p1386 = pneg %p534
        $region226: #{tpu_custom_call.1} parent=151 // pred_check_branch
          %1388 = sbr.rel (%p1386) target = $region228
        $region227: #{tpu_custom_call.1} parent=151 // pred_region
          %1389 = dma.done [#allocation30], 16
        $region228: #{tpu_custom_call.1} parent=151 // pred_fallthru
          _
        // Predicated region
        $region229: #{tpu_custom_call.1} parent=151 // pred_check
          %p1390 = pneg %p555
        $region230: #{tpu_custom_call.1} parent=151 // pred_check_branch
          %1392 = sbr.rel (%p1390) target = $region232
        $region231: #{tpu_custom_call.1} parent=151 // pred_region
          %1393 = dma.done [#allocation30], 256
        $region232: #{tpu_custom_call.1} parent=151 // pred_fallthru
          _
        // Predicated region
        $region233: #{tpu_custom_call.1} parent=151 // pred_check
          %p1394 = pneg %p576
        $region234: #{tpu_custom_call.1} parent=151 // pred_check_branch
          %1396 = sbr.rel (%p1394) target = $region236
        $region235: #{tpu_custom_call.1} parent=151 // pred_region
          %1397 = dma.done [#allocation33], 16
        $region236: #{tpu_custom_call.1} parent=151 // pred_fallthru
          _
        // Predicated region
        $region237: #{tpu_custom_call.1} parent=151 // pred_check
          %p1398 = pneg %p597
        $region238: #{tpu_custom_call.1} parent=151 // pred_check_branch
          %1400 = sbr.rel (%p1398) target = $region240
        $region239: #{tpu_custom_call.1} parent=151 // pred_region
          %1401 = dma.done [#allocation33], 256
        $region240: #{tpu_custom_call.1} parent=151 // pred_fallthru
          _
        // Predicated region
        $region241: #{tpu_custom_call.1} parent=151 // pred_check
          %p1402 = pneg %p618
        $region242: #{tpu_custom_call.1} parent=151 // pred_check_branch
          %1404 = sbr.rel (%p1402) target = $region244
        $region243: #{tpu_custom_call.1} parent=151 // pred_region
          %1405 = dma.done [#allocation36], 16
        $region244: #{tpu_custom_call.1} parent=151 // pred_fallthru
          _
        // Predicated region
        $region245: #{tpu_custom_call.1} parent=151 // pred_check
          %p1406 = pneg %p639
        $region246: #{tpu_custom_call.1} parent=151 // pred_check_branch
          %1408 = sbr.rel (%p1406) target = $region248
        $region247: #{tpu_custom_call.1} parent=151 // pred_region
          %1409 = dma.done [#allocation36], 256
        $region248: #{tpu_custom_call.1} parent=151 // pred_fallthru
          _
        // Predicated region
        $region249: #{tpu_custom_call.1} parent=151 // pred_check
          %p1410 = pneg %p660
        $region250: #{tpu_custom_call.1} parent=151 // pred_check_branch
          %1412 = sbr.rel (%p1410) target = $region252
        $region251: #{tpu_custom_call.1} parent=151 // pred_region
          %1413 = dma.done [#allocation39], 16
        $region252: #{tpu_custom_call.1} parent=151 // pred_fallthru
          _
        // Predicated region
        $region253: #{tpu_custom_call.1} parent=151 // pred_check
          %p1414 = pneg %p681
        $region254: #{tpu_custom_call.1} parent=151 // pred_check_branch
          %1416 = sbr.rel (%p1414) target = $region256
        $region255: #{tpu_custom_call.1} parent=151 // pred_region
          %1417 = dma.done [#allocation39], 1024
        $region256: #{tpu_custom_call.1} parent=151 // pred_fallthru
          _
        // Predicated region
        $region257: #{tpu_custom_call.1} parent=151 // pred_check
          %p1418 = pneg %p702
        $region258: #{tpu_custom_call.1} parent=151 // pred_check_branch
          %1420 = sbr.rel (%p1418) target = $region260
        $region259: #{tpu_custom_call.1} parent=151 // pred_region
          %1421 = dma.done [#allocation42], 16
        $region260: #{tpu_custom_call.1} parent=151 // pred_fallthru
          _
        // Predicated region
        $region261: #{tpu_custom_call.1} parent=151 // pred_check
          %p1422 = pneg %p723
        $region262: #{tpu_custom_call.1} parent=151 // pred_check_branch
          %1424 = sbr.rel (%p1422) target = $region264
        $region263: #{tpu_custom_call.1} parent=151 // pred_region
          %1425 = dma.done [#allocation42], 16
        $region264: #{tpu_custom_call.1} parent=151 // pred_fallthru
          _
        // Predicated region
        $region265: #{tpu_custom_call.1} parent=151 // pred_check
          %p1426 = pneg %p744
        $region266: #{tpu_custom_call.1} parent=151 // pred_check_branch
          %1428 = sbr.rel (%p1426) target = $region268
        $region267: #{tpu_custom_call.1} parent=151 // pred_region
          %1429 = dma.done [#allocation45], 16
        $region268: #{tpu_custom_call.1} parent=151 // pred_fallthru
          _
        // Predicated region
        $region269: #{tpu_custom_call.1} parent=151 // pred_check
          %p1430 = pneg %p765
        $region270: #{tpu_custom_call.1} parent=151 // pred_check_branch
          %1432 = sbr.rel (%p1430) target = $region272
        $region271: #{tpu_custom_call.1} parent=151 // pred_region
          %1433 = dma.done [#allocation45], 16
        $region272: #{tpu_custom_call.1} parent=151 // pred_fallthru
          _
        // Predicated region
        $region273: #{tpu_custom_call.1} parent=151 // pred_check
          %p1434 = pneg %p786
        $region274: #{tpu_custom_call.1} parent=151 // pred_check_branch
          %1436 = sbr.rel (%p1434) target = $region276
        $region275: #{tpu_custom_call.1} parent=151 // pred_region
          %1437 = dma.done [#allocation48], 16
        $region276: #{tpu_custom_call.1} parent=151 // pred_fallthru
          _
        // Predicated region
        $region277: #{tpu_custom_call.1} parent=151 // pred_check
          %p1438 = pneg %p807
        $region278: #{tpu_custom_call.1} parent=151 // pred_check_branch
          %1440 = sbr.rel (%p1438) target = $region280
        $region279: #{tpu_custom_call.1} parent=151 // pred_region
          %1441 = dma.done [#allocation48], 16
        $region280: #{tpu_custom_call.1} parent=151 // pred_fallthru
          _
        // Predicated region
        $region281: #{tpu_custom_call.1} parent=151 // pred_check
          %p1442 = pneg %p828
        $region282: #{tpu_custom_call.1} parent=151 // pred_check_branch
          %1444 = sbr.rel (%p1442) target = $region284
        $region283: #{tpu_custom_call.1} parent=151 // pred_region
          %1445 = dma.done [#allocation51], 16
        $region284: #{tpu_custom_call.1} parent=151 // pred_fallthru
          _
        %s1446 = sand.u32 %s101, 1
        %s1447 = scalar_lea.sflag [#allocation3], %s1446
        %s1448 = sand.u32 %s123, 1
        %s1449 = smul.addr %s1448, 8
        %s1450 = scalar_lea.vmem [#allocation2], %s1449
        %p1451 = pneg %p136
        %p1452 = pneg %p133
        %s1453 = sand.u32 %s101, 1
        %s1454 = scalar_lea.sflag [#allocation6], %s1453
        %s1455 = sand.u32 %s149, 1
        %s1456 = smul.addr %s1455, 8
        %s1457 = scalar_lea.vmem [#allocation5], %s1456
        %p1458 = pneg %p162
        %p1459 = pneg %p159
        %s1460 = sand.u32 %s101, 1
        %s1461 = scalar_lea.sflag [#allocation6], %s1460
        %s1462 = sand.u32 %s175, 1
        %s1463 = smul.addr %s1462, 8
        %s1464 = scalar_lea.vmem [#allocation7], %s1463
        %p1465 = pneg %p188
        %p1466 = pneg %p185
        %p1467 = pneg %p209
        %p1468 = pneg %p206
        %p1469 = pneg %p230
        %p1470 = pneg %p227
        %p1471 = pneg %p256
        %p1472 = pneg %p253
        %s1473 = sand.u32 %s101, 1
        %s1474 = scalar_lea.sflag [#allocation3], %s1473
        %s1475 = sand.u32 %s269, 1
        %s1476 = scalar_lea.vmem [#allocation13], %s1475
        %p1477 = pneg %p282
        %p1478 = pneg %p279
        %p1479 = pneg %p303
        %p1480 = pneg %p300
        %p1481 = pneg %p324
        %p1482 = pneg %p321
        %p1483 = pneg %p345
        %p1484 = pneg %p342
        %p1485 = pneg %p366
        %p1486 = pneg %p363
        %p1487 = pneg %p387
        %p1488 = pneg %p384
        %p1489 = pneg %p408
        %p1490 = pneg %p405
        %p1491 = pneg %p429
        %p1492 = pneg %p426
        %p1493 = pneg %p450
        %p1494 = pneg %p447
        %p1495 = pneg %p471
        %p1496 = pneg %p468
        %p1497 = pneg %p492
        %p1498 = pneg %p489
        %p1499 = pneg %p513
        %p1500 = pneg %p510
        %p1501 = pneg %p534
        %p1502 = pneg %p531
        %p1503 = pneg %p555
        %p1504 = pneg %p552
        %p1505 = pneg %p576
        %p1506 = pneg %p573
        %p1507 = pneg %p597
        %p1508 = pneg %p594
        %p1509 = pneg %p618
        %p1510 = pneg %p615
        %p1511 = pneg %p639
        %p1512 = pneg %p636
        %p1513 = pneg %p660
        %p1514 = pneg %p657
        %p1515 = pneg %p681
        %p1516 = pneg %p678
        %p1517 = pneg %p702
        %p1518 = pneg %p699
        %p1519 = pneg %p723
        %p1520 = pneg %p720
        %p1521 = pneg %p744
        %p1522 = pneg %p741
        %p1523 = pneg %p765
        %p1524 = pneg %p762
        %p1525 = pneg %p786
        %p1526 = pneg %p783
        %p1527 = pneg %p807
        %p1528 = pneg %p804
        %p1529 = pneg %p828
        %p1530 = pneg %p825
        %p1531 = pneg %p856
        %p1532 = pneg %p853
        %s1533 = sand.u32 %s843, 1
        %s1534 = scalar_lea.sflag [#allocation4], %s1533
        %s1535 = sand.u32 %s843, 1
        %s1536 = smul.addr %s1535, 8
        %s1537 = scalar_lea.vmem [#allocation52], %s1536
        %v1539 = vld [vmem:[%s1299] sm:$0xff]
        %v1540 = vld [vmem:[#allocation8] sm:$0xff]
        %v1541 = vld [vmem:[#allocation10] sm:$0xff]
        %v1542 = vld [vmem:[#allocation11] sm:$0xff]
        %v1543 = vpack.c.bf16 %v1539, %v1539
        %v1544 = vld [vmem:[#allocation14] sm:$0xf]
        %v1545 = vld [vmem:[#allocation14 + $0x4] sm:$0xf]
        %v1546 = vld [vmem:[#allocation14 + $0x8] sm:$0xf]
        %v1547 = vld [vmem:[#allocation14 + $0xc] sm:$0xf]
        %v1548 = vld [vmem:[#allocation15] sm:$0x1]
        %v1550 = vlaneseq
        %v1551 = vshrl.u32 %v1550, 7
        %v1552 = vsub.s32 0, %v1551
        %v1553 = vrot.slane %v1548, %v1552
        %v1559 = vunpack.c.l.b16 %v1544
        %v1560 = vunpack.c.l.b16 %v1545
        %v1561 = vunpack.c.l.b16 %v1546
        %v1562 = vunpack.c.l.b16 %v1547
        %v1563 = vpack.c.b16 %v1560, %v1559
        %v1564 = vpack.c.b16 %v1562, %v1561
        %vm1567 = vcmask 261120
        %v1569 = vsel %vm1567, %v1543, 0
        %1571 = vmatprep.subr.bf16.mxu0 0
        %1572 = vmatpush1.bf16.msra.mxu0 %v1563
        %1573 = vmatprep.subr.bf16.mxu0 0
        %1574 = vmatpush1.bf16.msra.mxu0 %v1564
        %1575 = vmatprep.subr.bf16.mxu0 0
        %1576 = vmatpush1.bf16.msra.mxu0 0
        %1577 = vmatprep.subr.bf16.mxu0 0
        %1578 = vmatpush1.bf16.msra.mxu0 0
        %1579 = vmatprep.subr.bf16.mxu0 0
        %1580 = vmatpush1.bf16.msra.mxu0 0
        %1581 = vmatprep.subr.bf16.mxu0 0
        %1582 = vmatpush1.bf16.msra.mxu0 0
        %1583 = vmatprep.subr.bf16.mxu0 0
        %1584 = vmatpush1.bf16.msra.mxu0 0
        %1585 = vmatprep.subr.bf16.mxu0 0
        %1586 = vmatpush1.bf16.msra.mxu0 0
        %1587 = vmatprep.subr.bf16.mxu0 0
        %1588 = vmatpush1.bf16.msra.mxu0 0
        %1589 = vmatprep.subr.bf16.mxu0 0
        %1590 = vmatpush1.bf16.msra.mxu0 0
        %1591 = vmatprep.subr.bf16.mxu0 0
        %1592 = vmatpush1.bf16.msra.mxu0 0
        %1593 = vmatprep.subr.bf16.mxu0 0
        %1594 = vmatpush1.bf16.msra.mxu0 0
        %1595 = vmatprep.subr.bf16.mxu0 0
        %1596 = vmatpush1.bf16.msra.mxu0 0
        %1597 = vmatprep.subr.bf16.mxu0 0
        %1598 = vmatpush1.bf16.msra.mxu0 0
        %1599 = vmatprep.subr.bf16.mxu0 0
        %1600 = vmatpush1.bf16.msra.mxu0 0
        %1601 = vmatprep.subr.bf16.mxu0 0
        %1602 = vmatpush1.bf16.msra.mxu0 0
        %1603 = vmatprep.mubr.bf16.mxu0 0
        %1604 = vmatmul.mubr.bf16.gmra.mrb[0].mxu0 %v1569
        %v1605 = vpop.f32.mrb[0].mxu0
        %v1606 = vadd.f32 %v1553, %v1605
        %v1607 = vpop.f32.mrb[0].mxu0
        %v1608 = vpop.f32.mrb[0].mxu0
        %v1609 = vpop.f32.mrb[0].mxu0
        %1610 = vdwg.mxu0
        %1612 = vrot.lane.b32.xlu0 %v1606, 120
        %v1613 = vpop.permute.xlu0 %1612
        %1615 = vrot.lane.b32.xlu0 %v1606, 112
        %v1616 = vpop.permute.xlu0 %1615
        %1618 = vrot.lane.b32.xlu0 %v1606, 104
        %v1619 = vpop.permute.xlu0 %1618
        %v1621 = vmul.f32 %v1606, %v1540
        %v1622 = vmul.f32 %v1613, %v1540
        %v1623 = vmul.f32 %v1616, %v1540
        %v1624 = vmul.f32 %v1619, %v1540
        %1625 = vrot.lane.b32.xlu0 %v1606, 124
        %v1626 = vpop.permute.xlu0 %1625
        %1627 = vrot.lane.b32.xlu0 %v1613, 124
        %v1628 = vpop.permute.xlu0 %1627
        %1629 = vrot.lane.b32.xlu0 %v1616, 124
        %v1630 = vpop.permute.xlu0 %1629
        %1631 = vrot.lane.b32.xlu0 %v1619, 124
        %v1632 = vpop.permute.xlu0 %1631
        %1637 = vrot.lane.b32.xlu0 %v1606, 4
        %v1638 = vpop.permute.xlu0 %1637
        %1639 = vrot.lane.b32.xlu0 %v1613, 4
        %v1640 = vpop.permute.xlu0 %1639
        %1641 = vrot.lane.b32.xlu0 %v1616, 4
        %v1642 = vpop.permute.xlu0 %1641
        %1643 = vrot.lane.b32.xlu0 %v1619, 4
        %v1644 = vpop.permute.xlu0 %1643
        %vm1649 = vcmask 31744
        %v1650 = vsel %vm1649, %v1626, %v1638
        %v1651 = vsel %vm1649, %v1628, %v1640
        %v1652 = vsel %vm1649, %v1630, %v1642
        %v1653 = vsel %vm1649, %v1632, %v1644
        %v1654 = vmul.f32 %v1650, %v1541
        %v1655 = vmul.f32 %v1651, %v1541
        %v1656 = vmul.f32 %v1652, %v1541
        %v1657 = vmul.f32 %v1653, %v1541
        %v1658 = vadd.f32 %v1621, %v1654
        %v1659 = vadd.f32 %v1622, %v1655
        %v1660 = vadd.f32 %v1623, %v1656
        %v1661 = vadd.f32 %v1624, %v1657
        %v1662 = vld [vmem:[%s1308] sm:$0xff]
        %v1663 = vpack.c.bf16 %v1662, %v1662
        %v1664 = vld [vmem:[#allocation16] sm:$0xf]
        %v1665 = vld [vmem:[#allocation16 + $0x4] sm:$0xf]
        %v1666 = vld [vmem:[#allocation16 + $0x8] sm:$0xf]
        %v1667 = vld [vmem:[#allocation16 + $0xc] sm:$0xf]
        %v1668 = vld [vmem:[#allocation17] sm:$0x1]
        %v1670 = vlaneseq
        %v1671 = vshrl.u32 %v1670, 7
        %v1672 = vsub.s32 0, %v1671
        %v1673 = vrot.slane %v1668, %v1672
        %v1679 = vunpack.c.l.b16 %v1664
        %v1680 = vunpack.c.l.b16 %v1665
        %v1681 = vunpack.c.l.b16 %v1666
        %v1682 = vunpack.c.l.b16 %v1667
        %v1683 = vpack.c.b16 %v1680, %v1679
        %v1684 = vpack.c.b16 %v1682, %v1681
        %v1688 = vsel %vm1567, %v1663, 0
        %1690 = vmatprep.subr.bf16.mxu0 0
        %1691 = vmatpush1.bf16.msra.mxu0 %v1683
        %1692 = vmatprep.subr.bf16.mxu0 0
        %1693 = vmatpush1.bf16.msra.mxu0 %v1684
        %1694 = vmatprep.subr.bf16.mxu0 0
        %1695 = vmatpush1.bf16.msra.mxu0 0
        %1696 = vmatprep.subr.bf16.mxu0 0
        %1697 = vmatpush1.bf16.msra.mxu0 0
        %1698 = vmatprep.subr.bf16.mxu0 0
        %1699 = vmatpush1.bf16.msra.mxu0 0
        %1700 = vmatprep.subr.bf16.mxu0 0
        %1701 = vmatpush1.bf16.msra.mxu0 0
        %1702 = vmatprep.subr.bf16.mxu0 0
        %1703 = vmatpush1.bf16.msra.mxu0 0
        %1704 = vmatprep.subr.bf16.mxu0 0
        %1705 = vmatpush1.bf16.msra.mxu0 0
        %1706 = vmatprep.subr.bf16.mxu0 0
        %1707 = vmatpush1.bf16.msra.mxu0 0
        %1708 = vmatprep.subr.bf16.mxu0 0
        %1709 = vmatpush1.bf16.msra.mxu0 0
        %1710 = vmatprep.subr.bf16.mxu0 0
        %1711 = vmatpush1.bf16.msra.mxu0 0
        %1712 = vmatprep.subr.bf16.mxu0 0
        %1713 = vmatpush1.bf16.msra.mxu0 0
        %1714 = vmatprep.subr.bf16.mxu0 0
        %1715 = vmatpush1.bf16.msra.mxu0 0
        %1716 = vmatprep.subr.bf16.mxu0 0
        %1717 = vmatpush1.bf16.msra.mxu0 0
        %1718 = vmatprep.subr.bf16.mxu0 0
        %1719 = vmatpush1.bf16.msra.mxu0 0
        %1720 = vmatprep.subr.bf16.mxu0 0
        %1721 = vmatpush1.bf16.msra.mxu0 0
        %1722 = vmatprep.mubr.bf16.mxu0 0
        %1723 = vmatmul.mubr.bf16.gmra.mrb[0].mxu0 %v1688
        %v1724 = vpop.f32.mrb[0].mxu0
        %v1725 = vadd.f32 %v1673, %v1724
        %v1726 = vpop.f32.mrb[0].mxu0
        %v1727 = vpop.f32.mrb[0].mxu0
        %v1728 = vpop.f32.mrb[0].mxu0
        %1729 = vdwg.mxu0
        %v1730 = vld [vmem:[#allocation19] sm:$0xf]
        %v1731 = vld [vmem:[#allocation19 + $0x4] sm:$0xf]
        %v1732 = vld [vmem:[#allocation19 + $0x8] sm:$0xf]
        %v1733 = vld [vmem:[#allocation19 + $0xc] sm:$0xf]
        %v1734 = vld [vmem:[#allocation20] sm:$0x1]
        %v1736 = vlaneseq
        %v1737 = vshrl.u32 %v1736, 7
        %v1738 = vsub.s32 0, %v1737
        %v1739 = vrot.slane %v1734, %v1738
        %v1745 = vunpack.c.l.b16 %v1730
        %v1746 = vunpack.c.l.b16 %v1731
        %v1747 = vunpack.c.l.b16 %v1732
        %v1748 = vunpack.c.l.b16 %v1733
        %v1749 = vpack.c.b16 %v1746, %v1745
        %v1750 = vpack.c.b16 %v1748, %v1747
        %1753 = vmatprep.subr.bf16.mxu0 0
        %1754 = vmatpush1.bf16.msra.mxu0 %v1749
        %1755 = vmatprep.subr.bf16.mxu0 0
        %1756 = vmatpush1.bf16.msra.mxu0 %v1750
        %1757 = vmatprep.subr.bf16.mxu0 0
        %1758 = vmatpush1.bf16.msra.mxu0 0
        %1759 = vmatprep.subr.bf16.mxu0 0
        %1760 = vmatpush1.bf16.msra.mxu0 0
        %1761 = vmatprep.subr.bf16.mxu0 0
        %1762 = vmatpush1.bf16.msra.mxu0 0
        %1763 = vmatprep.subr.bf16.mxu0 0
        %1764 = vmatpush1.bf16.msra.mxu0 0
        %1765 = vmatprep.subr.bf16.mxu0 0
        %1766 = vmatpush1.bf16.msra.mxu0 0
        %1767 = vmatprep.subr.bf16.mxu0 0
        %1768 = vmatpush1.bf16.msra.mxu0 0
        %1769 = vmatprep.subr.bf16.mxu0 0
        %1770 = vmatpush1.bf16.msra.mxu0 0
        %1771 = vmatprep.subr.bf16.mxu0 0
        %1772 = vmatpush1.bf16.msra.mxu0 0
        %1773 = vmatprep.subr.bf16.mxu0 0
        %1774 = vmatpush1.bf16.msra.mxu0 0
        %1775 = vmatprep.subr.bf16.mxu0 0
        %1776 = vmatpush1.bf16.msra.mxu0 0
        %1777 = vmatprep.subr.bf16.mxu0 0
        %1778 = vmatpush1.bf16.msra.mxu0 0
        %1779 = vmatprep.subr.bf16.mxu0 0
        %1780 = vmatpush1.bf16.msra.mxu0 0
        %1781 = vmatprep.subr.bf16.mxu0 0
        %1782 = vmatpush1.bf16.msra.mxu0 0
        %1783 = vmatprep.subr.bf16.mxu0 0
        %1784 = vmatpush1.bf16.msra.mxu0 0
        %1785 = vmatprep.mubr.bf16.mxu0 0
        %1786 = vmatmul.mubr.bf16.gmra.mrb[0].mxu0 %v1688
        %v1787 = vpop.f32.mrb[0].mxu0
        %v1788 = vadd.f32 %v1739, %v1787
        %v1789 = vpop.f32.mrb[0].mxu0
        %v1790 = vpop.f32.mrb[0].mxu0
        %v1791 = vpop.f32.mrb[0].mxu0
        %1792 = vdwg.mxu0
        %1794 = vrot.lane.b32.xlu0 %v1725, 120
        %v1795 = vpop.permute.xlu0 %1794
        %1797 = vrot.lane.b32.xlu0 %v1725, 112
        %v1798 = vpop.permute.xlu0 %1797
        %1800 = vrot.lane.b32.xlu0 %v1725, 104
        %v1801 = vpop.permute.xlu0 %1800
        %1804 = vrot.lane.b32.xlu0 %v1788, 120
        %v1805 = vpop.permute.xlu0 %1804
        %1807 = vrot.lane.b32.xlu0 %v1788, 112
        %v1808 = vpop.permute.xlu0 %1807
        %1810 = vrot.lane.b32.xlu0 %v1788, 104
        %v1811 = vpop.permute.xlu0 %1810
        %v1813 = vmul.f32 %v1725, %v1540
        %v1814 = vmul.f32 %v1795, %v1540
        %v1815 = vmul.f32 %v1798, %v1540
        %v1816 = vmul.f32 %v1801, %v1540
        %1817 = vrot.lane.b32.xlu0 %v1725, 124
        %v1818 = vpop.permute.xlu0 %1817
        %1819 = vrot.lane.b32.xlu0 %v1795, 124
        %v1820 = vpop.permute.xlu0 %1819
        %1821 = vrot.lane.b32.xlu0 %v1798, 124
        %v1822 = vpop.permute.xlu0 %1821
        %1823 = vrot.lane.b32.xlu0 %v1801, 124
        %v1824 = vpop.permute.xlu0 %1823
        %1829 = vrot.lane.b32.xlu0 %v1725, 4
        %v1830 = vpop.permute.xlu0 %1829
        %1831 = vrot.lane.b32.xlu0 %v1795, 4
        %v1832 = vpop.permute.xlu0 %1831
        %1833 = vrot.lane.b32.xlu0 %v1798, 4
        %v1834 = vpop.permute.xlu0 %1833
        %1835 = vrot.lane.b32.xlu0 %v1801, 4
        %v1836 = vpop.permute.xlu0 %1835
        %v1841 = vsel %vm1649, %v1818, %v1830
        %v1842 = vsel %vm1649, %v1820, %v1832
        %v1843 = vsel %vm1649, %v1822, %v1834
        %v1844 = vsel %vm1649, %v1824, %v1836
        %v1845 = vmul.f32 %v1841, %v1541
        %v1846 = vmul.f32 %v1842, %v1541
        %v1847 = vmul.f32 %v1843, %v1541
        %v1848 = vmul.f32 %v1844, %v1541
        %v1849 = vadd.f32 %v1813, %v1845
        %v1850 = vadd.f32 %v1814, %v1846
        %v1851 = vadd.f32 %v1815, %v1847
        %v1852 = vadd.f32 %v1816, %v1848
        %v1853 = vpack.c.bf16 %v1658, %v1658
        %v1854 = vpack.c.bf16 %v1659, %v1659
        %v1855 = vpack.c.bf16 %v1660, %v1660
        %v1856 = vpack.c.bf16 %v1661, %v1661
        %v1857 = vpack.c.bf16 %v1849, %v1849
        %v1858 = vpack.c.bf16 %v1850, %v1850
        %v1859 = vpack.c.bf16 %v1851, %v1851
        %v1860 = vpack.c.bf16 %v1852, %v1852
        %vm1861 = vcmask 64512
        %v1863 = vsel %vm1861, %v1853, 0
        %v1866 = vsel %vm1861, %v1857, 0
        %1868 = vmatprep.subr.bf16.mxu0 0
        %1869 = vmatpush1.bf16.xpose.msra.mxu0 %v1866
        %1870 = vmatprep.subr.bf16.mxu0 0
        %1871 = vmatpush1.bf16.xpose.msra.mxu0 0
        %1872 = vmatprep.subr.bf16.mxu0 0
        %1873 = vmatpush1.bf16.xpose.msra.mxu0 0
        %1874 = vmatprep.subr.bf16.mxu0 0
        %1875 = vmatpush1.bf16.xpose.msra.mxu0 0
        %1876 = vmatprep.subr.bf16.mxu0 0
        %1877 = vmatpush1.bf16.xpose.msra.mxu0 0
        %1878 = vmatprep.subr.bf16.mxu0 0
        %1879 = vmatpush1.bf16.xpose.msra.mxu0 0
        %1880 = vmatprep.subr.bf16.mxu0 0
        %1881 = vmatpush1.bf16.xpose.msra.mxu0 0
        %1882 = vmatprep.subr.bf16.mxu0 0
        %1883 = vmatpush1.bf16.xpose.msra.mxu0 0
        %1884 = vmatprep.subr.bf16.mxu0 0
        %1885 = vmatpush1.bf16.xpose.msra.mxu0 0
        %1886 = vmatprep.subr.bf16.mxu0 0
        %1887 = vmatpush1.bf16.xpose.msra.mxu0 0
        %1888 = vmatprep.subr.bf16.mxu0 0
        %1889 = vmatpush1.bf16.xpose.msra.mxu0 0
        %1890 = vmatprep.subr.bf16.mxu0 0
        %1891 = vmatpush1.bf16.xpose.msra.mxu0 0
        %1892 = vmatprep.subr.bf16.mxu0 0
        %1893 = vmatpush1.bf16.xpose.msra.mxu0 0
        %1894 = vmatprep.subr.bf16.mxu0 0
        %1895 = vmatpush1.bf16.xpose.msra.mxu0 0
        %1896 = vmatprep.subr.bf16.mxu0 0
        %1897 = vmatpush1.bf16.xpose.msra.mxu0 0
        %1898 = vmatprep.subr.bf16.mxu0 0
        %1899 = vmatpush1.bf16.xpose.msra.mxu0 0
        %1900 = vmatprep.mubr.bf16.mxu0 0
        %1901 = vmatmul.mubr.bf16.gmra.mrb[0].mxu0 %v1863
        %v1902 = vpop.f32.mrb[0].mxu0
        %v1903 = vadd.f32 %v1542, %v1902
        %v1904 = vpop.f32.mrb[0].mxu0
        %v1905 = vpop.f32.mrb[0].mxu0
        %v1906 = vpop.f32.mrb[0].mxu0
        %1907 = vdwg.mxu0
        %v1909 = vsel %vm1861, %v1854, 0
        %v1912 = vsel %vm1861, %v1858, 0
        %1914 = vmatprep.subr.bf16.mxu0 0
        %1915 = vmatpush1.bf16.xpose.msra.mxu0 %v1912
        %1916 = vmatprep.subr.bf16.mxu0 0
        %1917 = vmatpush1.bf16.xpose.msra.mxu0 0
        %1918 = vmatprep.subr.bf16.mxu0 0
        %1919 = vmatpush1.bf16.xpose.msra.mxu0 0
        %1920 = vmatprep.subr.bf16.mxu0 0
        %1921 = vmatpush1.bf16.xpose.msra.mxu0 0
        %1922 = vmatprep.subr.bf16.mxu0 0
        %1923 = vmatpush1.bf16.xpose.msra.mxu0 0
        %1924 = vmatprep.subr.bf16.mxu0 0
        %1925 = vmatpush1.bf16.xpose.msra.mxu0 0
        %1926 = vmatprep.subr.bf16.mxu0 0
        %1927 = vmatpush1.bf16.xpose.msra.mxu0 0
        %1928 = vmatprep.subr.bf16.mxu0 0
        %1929 = vmatpush1.bf16.xpose.msra.mxu0 0
        %1930 = vmatprep.subr.bf16.mxu0 0
        %1931 = vmatpush1.bf16.xpose.msra.mxu0 0
        %1932 = vmatprep.subr.bf16.mxu0 0
        %1933 = vmatpush1.bf16.xpose.msra.mxu0 0
        %1934 = vmatprep.subr.bf16.mxu0 0
        %1935 = vmatpush1.bf16.xpose.msra.mxu0 0
        %1936 = vmatprep.subr.bf16.mxu0 0
        %1937 = vmatpush1.bf16.xpose.msra.mxu0 0
        %1938 = vmatprep.subr.bf16.mxu0 0
        %1939 = vmatpush1.bf16.xpose.msra.mxu0 0
        %1940 = vmatprep.subr.bf16.mxu0 0
        %1941 = vmatpush1.bf16.xpose.msra.mxu0 0
        %1942 = vmatprep.subr.bf16.mxu0 0
        %1943 = vmatpush1.bf16.xpose.msra.mxu0 0
        %1944 = vmatprep.subr.bf16.mxu0 0
        %1945 = vmatpush1.bf16.xpose.msra.mxu0 0
        %1946 = vmatprep.mubr.bf16.mxu0 0
        %1947 = vmatmul.mubr.bf16.gmra.mrb[0].mxu0 %v1909
        %v1948 = vpop.f32.mrb[0].mxu0
        %v1949 = vadd.f32 %v1542, %v1948
        %v1950 = vpop.f32.mrb[0].mxu0
        %v1951 = vpop.f32.mrb[0].mxu0
        %v1952 = vpop.f32.mrb[0].mxu0
        %1953 = vdwg.mxu0
        %v1955 = vsel %vm1861, %v1855, 0
        %v1958 = vsel %vm1861, %v1859, 0
        %1960 = vmatprep.subr.bf16.mxu0 0
        %1961 = vmatpush1.bf16.xpose.msra.mxu0 %v1958
        %1962 = vmatprep.subr.bf16.mxu0 0
        %1963 = vmatpush1.bf16.xpose.msra.mxu0 0
        %1964 = vmatprep.subr.bf16.mxu0 0
        %1965 = vmatpush1.bf16.xpose.msra.mxu0 0
        %1966 = vmatprep.subr.bf16.mxu0 0
        %1967 = vmatpush1.bf16.xpose.msra.mxu0 0
        %1968 = vmatprep.subr.bf16.mxu0 0
        %1969 = vmatpush1.bf16.xpose.msra.mxu0 0
        %1970 = vmatprep.subr.bf16.mxu0 0
        %1971 = vmatpush1.bf16.xpose.msra.mxu0 0
        %1972 = vmatprep.subr.bf16.mxu0 0
        %1973 = vmatpush1.bf16.xpose.msra.mxu0 0
        %1974 = vmatprep.subr.bf16.mxu0 0
        %1975 = vmatpush1.bf16.xpose.msra.mxu0 0
        %1976 = vmatprep.subr.bf16.mxu0 0
        %1977 = vmatpush1.bf16.xpose.msra.mxu0 0
        %1978 = vmatprep.subr.bf16.mxu0 0
        %1979 = vmatpush1.bf16.xpose.msra.mxu0 0
        %1980 = vmatprep.subr.bf16.mxu0 0
        %1981 = vmatpush1.bf16.xpose.msra.mxu0 0
        %1982 = vmatprep.subr.bf16.mxu0 0
        %1983 = vmatpush1.bf16.xpose.msra.mxu0 0
        %1984 = vmatprep.subr.bf16.mxu0 0
        %1985 = vmatpush1.bf16.xpose.msra.mxu0 0
        %1986 = vmatprep.subr.bf16.mxu0 0
        %1987 = vmatpush1.bf16.xpose.msra.mxu0 0
        %1988 = vmatprep.subr.bf16.mxu0 0
        %1989 = vmatpush1.bf16.xpose.msra.mxu0 0
        %1990 = vmatprep.subr.bf16.mxu0 0
        %1991 = vmatpush1.bf16.xpose.msra.mxu0 0
        %1992 = vmatprep.mubr.bf16.mxu0 0
        %1993 = vmatmul.mubr.bf16.gmra.mrb[0].mxu0 %v1955
        %v1994 = vpop.f32.mrb[0].mxu0
        %v1995 = vadd.f32 %v1542, %v1994
        %v1996 = vpop.f32.mrb[0].mxu0
        %v1997 = vpop.f32.mrb[0].mxu0
        %v1998 = vpop.f32.mrb[0].mxu0
        %1999 = vdwg.mxu0
        %v2001 = vsel %vm1861, %v1856, 0
        %v2004 = vsel %vm1861, %v1860, 0
        %2006 = vmatprep.subr.bf16.mxu0 0
        %2007 = vmatpush1.bf16.xpose.msra.mxu0 %v2004
        %2008 = vmatprep.subr.bf16.mxu0 0
        %2009 = vmatpush1.bf16.xpose.msra.mxu0 0
        %2010 = vmatprep.subr.bf16.mxu0 0
        %2011 = vmatpush1.bf16.xpose.msra.mxu0 0
        %2012 = vmatprep.subr.bf16.mxu0 0
        %2013 = vmatpush1.bf16.xpose.msra.mxu0 0
        %2014 = vmatprep.subr.bf16.mxu0 0
        %2015 = vmatpush1.bf16.xpose.msra.mxu0 0
        %2016 = vmatprep.subr.bf16.mxu0 0
        %2017 = vmatpush1.bf16.xpose.msra.mxu0 0
        %2018 = vmatprep.subr.bf16.mxu0 0
        %2019 = vmatpush1.bf16.xpose.msra.mxu0 0
        %2020 = vmatprep.subr.bf16.mxu0 0
        %2021 = vmatpush1.bf16.xpose.msra.mxu0 0
        %2022 = vmatprep.subr.bf16.mxu0 0
        %2023 = vmatpush1.bf16.xpose.msra.mxu0 0
        %2024 = vmatprep.subr.bf16.mxu0 0
        %2025 = vmatpush1.bf16.xpose.msra.mxu0 0
        %2026 = vmatprep.subr.bf16.mxu0 0
        %2027 = vmatpush1.bf16.xpose.msra.mxu0 0
        %2028 = vmatprep.subr.bf16.mxu0 0
        %2029 = vmatpush1.bf16.xpose.msra.mxu0 0
        %2030 = vmatprep.subr.bf16.mxu0 0
        %2031 = vmatpush1.bf16.xpose.msra.mxu0 0
        %2032 = vmatprep.subr.bf16.mxu0 0
        %2033 = vmatpush1.bf16.xpose.msra.mxu0 0
        %2034 = vmatprep.subr.bf16.mxu0 0
        %2035 = vmatpush1.bf16.xpose.msra.mxu0 0
        %2036 = vmatprep.subr.bf16.mxu0 0
        %2037 = vmatpush1.bf16.xpose.msra.mxu0 0
        %2038 = vmatprep.mubr.bf16.mxu0 0
        %2039 = vmatmul.mubr.bf16.gmra.mrb[0].mxu0 %v2001
        %v2040 = vpop.f32.mrb[0].mxu0
        %v2041 = vadd.f32 %v1542, %v2040
        %v2042 = vpop.f32.mrb[0].mxu0
        %v2043 = vpop.f32.mrb[0].mxu0
        %v2044 = vpop.f32.mrb[0].mxu0
        %2045 = vdwg.mxu0
        %v2046 = vsel %vm1861, %v1903, -inf
        %2047 = vmax.xlane.f32.xlu0 %v2046
        %v2048 = vpop.xlane.xlu0 %2047
        %v2049 = vsel %vm1861, %v1949, -inf
        %2050 = vmax.xlane.f32.xlu0 %v2049
        %v2051 = vpop.xlane.xlu0 %2050
        %v2052 = vsel %vm1861, %v1995, -inf
        %2053 = vmax.xlane.f32.xlu0 %v2052
        %v2054 = vpop.xlane.xlu0 %2053
        %v2055 = vsel %vm1861, %v2041, -inf
        %2056 = vmax.xlane.f32.xlu0 %v2055
        %v2057 = vpop.xlane.xlu0 %2056
        %v2058 = vmax.f32 %v2048, -1e+30
        %v2059 = vmax.f32 %v2051, -1e+30
        %v2060 = vmax.f32 %v2054, -1e+30
        %v2061 = vmax.f32 %v2057, -1e+30
        %v2062 = vsub.f32 -1e+30, %v2058
        %v2063 = vsub.f32 -1e+30, %v2059
        %v2064 = vsub.f32 -1e+30, %v2060
        %v2065 = vsub.f32 -1e+30, %v2061
        %v2066 = vmul.f32 %v2062, 1.442695
        %v2067 = vpow.pop %v2066
        %v2068 = vmul.f32 %v2063, 1.442695
        %v2069 = vpow.pop %v2068
        %v2070 = vmul.f32 %v2064, 1.442695
        %v2071 = vpow.pop %v2070
        %v2072 = vmul.f32 %v2065, 1.442695
        %v2073 = vpow.pop %v2072
        %v2074 = vsub.f32 %v1903, %v2058
        %v2075 = vsub.f32 %v1949, %v2059
        %v2076 = vsub.f32 %v1995, %v2060
        %v2077 = vsub.f32 %v2041, %v2061
        %v2078 = vmul.f32 %v2074, 1.442695
        %v2079 = vpow.pop %v2078
        %v2080 = vmul.f32 %v2075, 1.442695
        %v2081 = vpow.pop %v2080
        %v2082 = vmul.f32 %v2076, 1.442695
        %v2083 = vpow.pop %v2082
        %v2084 = vmul.f32 %v2077, 1.442695
        %v2085 = vpow.pop %v2084
        %v2086 = vmul.f32 %v2067, 0.0
        %v2087 = vmul.f32 %v2069, 0.0
        %v2088 = vmul.f32 %v2071, 0.0
        %v2089 = vmul.f32 %v2073, 0.0
        %v2090 = vsel %vm1861, %v2079, 0.0
        %2091 = vadd.xlane.f32.xlu0 %v2090
        %v2092 = vpop.xlane.xlu0 %2091
        %v2093 = vsel %vm1861, %v2081, 0.0
        %2094 = vadd.xlane.f32.xlu0 %v2093
        %v2095 = vpop.xlane.xlu0 %2094
        %v2096 = vsel %vm1861, %v2083, 0.0
        %2097 = vadd.xlane.f32.xlu0 %v2096
        %v2098 = vpop.xlane.xlu0 %2097
        %v2099 = vsel %vm1861, %v2085, 0.0
        %2100 = vadd.xlane.f32.xlu0 %v2099
        %v2101 = vpop.xlane.xlu0 %2100
        %v2102 = vadd.f32 %v2086, %v2092
        %v2103 = vadd.f32 %v2087, %v2095
        %v2104 = vadd.f32 %v2088, %v2098
        %v2105 = vadd.f32 %v2089, %v2101
        %v2106 = vpack.c.bf16 %v2079, %v2079
        %v2107 = vpack.c.bf16 %v2081, %v2081
        %v2108 = vpack.c.bf16 %v2083, %v2083
        %v2109 = vpack.c.bf16 %v2085, %v2085
        %v2110 = vpack.c.bf16 %v1788, %v1788
        %v2111 = vpack.c.bf16 %v1805, %v1805
        %v2112 = vpack.c.bf16 %v1808, %v1808
        %v2113 = vpack.c.bf16 %v1811, %v1811
        %v2115 = vsel %vm1861, %v2106, 0
        %vm2117 = vcmask 1043456
        %v2119 = vsel %vm2117, %v2110, 0
        %2121 = vmatprep.subr.bf16.mxu0 0
        %2122 = vmatpush1.bf16.msra.mxu0 %v2119
        %2123 = vmatprep.subr.bf16.mxu0 0
        %2124 = vmatpush1.bf16.msra.mxu0 0
        %2125 = vmatprep.subr.bf16.mxu0 0
        %2126 = vmatpush1.bf16.msra.mxu0 0
        %2127 = vmatprep.subr.bf16.mxu0 0
        %2128 = vmatpush1.bf16.msra.mxu0 0
        %2129 = vmatprep.subr.bf16.mxu0 0
        %2130 = vmatpush1.bf16.msra.mxu0 0
        %2131 = vmatprep.subr.bf16.mxu0 0
        %2132 = vmatpush1.bf16.msra.mxu0 0
        %2133 = vmatprep.subr.bf16.mxu0 0
        %2134 = vmatpush1.bf16.msra.mxu0 0
        %2135 = vmatprep.subr.bf16.mxu0 0
        %2136 = vmatpush1.bf16.msra.mxu0 0
        %2137 = vmatprep.subr.bf16.mxu0 0
        %2138 = vmatpush1.bf16.msra.mxu0 0
        %2139 = vmatprep.subr.bf16.mxu0 0
        %2140 = vmatpush1.bf16.msra.mxu0 0
        %2141 = vmatprep.subr.bf16.mxu0 0
        %2142 = vmatpush1.bf16.msra.mxu0 0
        %2143 = vmatprep.subr.bf16.mxu0 0
        %2144 = vmatpush1.bf16.msra.mxu0 0
        %2145 = vmatprep.subr.bf16.mxu0 0
        %2146 = vmatpush1.bf16.msra.mxu0 0
        %2147 = vmatprep.subr.bf16.mxu0 0
        %2148 = vmatpush1.bf16.msra.mxu0 0
        %2149 = vmatprep.subr.bf16.mxu0 0
        %2150 = vmatpush1.bf16.msra.mxu0 0
        %2151 = vmatprep.subr.bf16.mxu0 0
        %2152 = vmatpush1.bf16.msra.mxu0 0
        %2153 = vmatprep.mubr.bf16.mxu0 0
        %2154 = vmatmul.mubr.bf16.gmra.mrb[0].mxu0 %v2115
        %v2155 = vpop.f32.mrb[0].mxu0
        %v2156 = vadd.f32 0.0, %v2155
        %v2157 = vpop.f32.mrb[0].mxu0
        %v2158 = vpop.f32.mrb[0].mxu0
        %v2159 = vpop.f32.mrb[0].mxu0
        %2160 = vdwg.mxu0
        %v2162 = vsel %vm1861, %v2107, 0
        %v2165 = vsel %vm2117, %v2111, 0
        %2167 = vmatprep.subr.bf16.mxu0 0
        %2168 = vmatpush1.bf16.msra.mxu0 %v2165
        %2169 = vmatprep.subr.bf16.mxu0 0
        %2170 = vmatpush1.bf16.msra.mxu0 0
        %2171 = vmatprep.subr.bf16.mxu0 0
        %2172 = vmatpush1.bf16.msra.mxu0 0
        %2173 = vmatprep.subr.bf16.mxu0 0
        %2174 = vmatpush1.bf16.msra.mxu0 0
        %2175 = vmatprep.subr.bf16.mxu0 0
        %2176 = vmatpush1.bf16.msra.mxu0 0
        %2177 = vmatprep.subr.bf16.mxu0 0
        %2178 = vmatpush1.bf16.msra.mxu0 0
        %2179 = vmatprep.subr.bf16.mxu0 0
        %2180 = vmatpush1.bf16.msra.mxu0 0
        %2181 = vmatprep.subr.bf16.mxu0 0
        %2182 = vmatpush1.bf16.msra.mxu0 0
        %2183 = vmatprep.subr.bf16.mxu0 0
        %2184 = vmatpush1.bf16.msra.mxu0 0
        %2185 = vmatprep.subr.bf16.mxu0 0
        %2186 = vmatpush1.bf16.msra.mxu0 0
        %2187 = vmatprep.subr.bf16.mxu0 0
        %2188 = vmatpush1.bf16.msra.mxu0 0
        %2189 = vmatprep.subr.bf16.mxu0 0
        %2190 = vmatpush1.bf16.msra.mxu0 0
        %2191 = vmatprep.subr.bf16.mxu0 0
        %2192 = vmatpush1.bf16.msra.mxu0 0
        %2193 = vmatprep.subr.bf16.mxu0 0
        %2194 = vmatpush1.bf16.msra.mxu0 0
        %2195 = vmatprep.subr.bf16.mxu0 0
        %2196 = vmatpush1.bf16.msra.mxu0 0
        %2197 = vmatprep.subr.bf16.mxu0 0
        %2198 = vmatpush1.bf16.msra.mxu0 0
        %2199 = vmatprep.mubr.bf16.mxu0 0
        %2200 = vmatmul.mubr.bf16.gmra.mrb[0].mxu0 %v2162
        %v2201 = vpop.f32.mrb[0].mxu0
        %v2202 = vadd.f32 0.0, %v2201
        %v2203 = vpop.f32.mrb[0].mxu0
        %v2204 = vpop.f32.mrb[0].mxu0
        %v2205 = vpop.f32.mrb[0].mxu0
        %2206 = vdwg.mxu0
        %v2208 = vsel %vm1861, %v2108, 0
        %v2211 = vsel %vm2117, %v2112, 0
        %2213 = vmatprep.subr.bf16.mxu0 0
        %2214 = vmatpush1.bf16.msra.mxu0 %v2211
        %2215 = vmatprep.subr.bf16.mxu0 0
        %2216 = vmatpush1.bf16.msra.mxu0 0
        %2217 = vmatprep.subr.bf16.mxu0 0
        %2218 = vmatpush1.bf16.msra.mxu0 0
        %2219 = vmatprep.subr.bf16.mxu0 0
        %2220 = vmatpush1.bf16.msra.mxu0 0
        %2221 = vmatprep.subr.bf16.mxu0 0
        %2222 = vmatpush1.bf16.msra.mxu0 0
        %2223 = vmatprep.subr.bf16.mxu0 0
        %2224 = vmatpush1.bf16.msra.mxu0 0
        %2225 = vmatprep.subr.bf16.mxu0 0
        %2226 = vmatpush1.bf16.msra.mxu0 0
        %2227 = vmatprep.subr.bf16.mxu0 0
        %2228 = vmatpush1.bf16.msra.mxu0 0
        %2229 = vmatprep.subr.bf16.mxu0 0
        %2230 = vmatpush1.bf16.msra.mxu0 0
        %2231 = vmatprep.subr.bf16.mxu0 0
        %2232 = vmatpush1.bf16.msra.mxu0 0
        %2233 = vmatprep.subr.bf16.mxu0 0
        %2234 = vmatpush1.bf16.msra.mxu0 0
        %2235 = vmatprep.subr.bf16.mxu0 0
        %2236 = vmatpush1.bf16.msra.mxu0 0
        %2237 = vmatprep.subr.bf16.mxu0 0
        %2238 = vmatpush1.bf16.msra.mxu0 0
        %2239 = vmatprep.subr.bf16.mxu0 0
        %2240 = vmatpush1.bf16.msra.mxu0 0
        %2241 = vmatprep.subr.bf16.mxu0 0
        %2242 = vmatpush1.bf16.msra.mxu0 0
        %2243 = vmatprep.subr.bf16.mxu0 0
        %2244 = vmatpush1.bf16.msra.mxu0 0
        %2245 = vmatprep.mubr.bf16.mxu0 0
        %2246 = vmatmul.mubr.bf16.gmra.mrb[0].mxu0 %v2208
        %v2247 = vpop.f32.mrb[0].mxu0
        %v2248 = vadd.f32 0.0, %v2247
        %v2249 = vpop.f32.mrb[0].mxu0
        %v2250 = vpop.f32.mrb[0].mxu0
        %v2251 = vpop.f32.mrb[0].mxu0
        %2252 = vdwg.mxu0
        %v2254 = vsel %vm1861, %v2109, 0
        %v2257 = vsel %vm2117, %v2113, 0
        %2259 = vmatprep.subr.bf16.mxu0 0
        %2260 = vmatpush1.bf16.msra.mxu0 %v2257
        %2261 = vmatprep.subr.bf16.mxu0 0
        %2262 = vmatpush1.bf16.msra.mxu0 0
        %2263 = vmatprep.subr.bf16.mxu0 0
        %2264 = vmatpush1.bf16.msra.mxu0 0
        %2265 = vmatprep.subr.bf16.mxu0 0
        %2266 = vmatpush1.bf16.msra.mxu0 0
        %2267 = vmatprep.subr.bf16.mxu0 0
        %2268 = vmatpush1.bf16.msra.mxu0 0
        %2269 = vmatprep.subr.bf16.mxu0 0
        %2270 = vmatpush1.bf16.msra.mxu0 0
        %2271 = vmatprep.subr.bf16.mxu0 0
        %2272 = vmatpush1.bf16.msra.mxu0 0
        %2273 = vmatprep.subr.bf16.mxu0 0
        %2274 = vmatpush1.bf16.msra.mxu0 0
        %2275 = vmatprep.subr.bf16.mxu0 0
        %2276 = vmatpush1.bf16.msra.mxu0 0
        %2277 = vmatprep.subr.bf16.mxu0 0
        %2278 = vmatpush1.bf16.msra.mxu0 0
        %2279 = vmatprep.subr.bf16.mxu0 0
        %2280 = vmatpush1.bf16.msra.mxu0 0
        %2281 = vmatprep.subr.bf16.mxu0 0
        %2282 = vmatpush1.bf16.msra.mxu0 0
        %2283 = vmatprep.subr.bf16.mxu0 0
        %2284 = vmatpush1.bf16.msra.mxu0 0
        %2285 = vmatprep.subr.bf16.mxu0 0
        %2286 = vmatpush1.bf16.msra.mxu0 0
        %2287 = vmatprep.subr.bf16.mxu0 0
        %2288 = vmatpush1.bf16.msra.mxu0 0
        %2289 = vmatprep.subr.bf16.mxu0 0
        %2290 = vmatpush1.bf16.msra.mxu0 0
        %2291 = vmatprep.mubr.bf16.mxu0 0
        %2292 = vmatmul.mubr.bf16.gmra.mrb[0].mxu0 %v2254
        %v2293 = vpop.f32.mrb[0].mxu0
        %v2294 = vadd.f32 0.0, %v2293
        %v2295 = vpop.f32.mrb[0].mxu0
        %v2296 = vpop.f32.mrb[0].mxu0
        %v2297 = vpop.f32.mrb[0].mxu0
        %2298 = vdwg.mxu0
        %v2299 = vadd.f32 %v2086, %v2156
        %v2300 = vadd.f32 %v2087, %v2202
        %v2301 = vadd.f32 %v2088, %v2248
        %v2302 = vadd.f32 %v2089, %v2294
        %v2303 = vrcp.pop %v2102
        %v2304 = vrcp.pop %v2103
        %v2305 = vrcp.pop %v2104
        %v2306 = vrcp.pop %v2105
        %v2307 = vmul.f32 %v2299, %v2303
        %v2308 = vmul.f32 %v2300, %v2304
        %v2309 = vmul.f32 %v2301, %v2305
        %v2310 = vmul.f32 %v2302, %v2306
        %2312 = vrot.lane.b32.xlu0 %v2308, 8
        %v2313 = vpop.permute.xlu0 %2312
        %2316 = vrot.lane.b32.xlu0 %v2309, 16
        %v2317 = vpop.permute.xlu0 %2316
        %2320 = vrot.lane.b32.xlu0 %v2310, 24
        %v2321 = vpop.permute.xlu0 %2320
        %v2323 = vsel %vm1861, %v2307, %v2313
        %vm2324 = vcmask 130048
        %v2325 = vsel %vm2324, %v2323, %v2317
        %vm2326 = vcmask 195584
        %v2327 = vsel %vm2326, %v2325, %v2321
        %v2328 = vpack.c.bf16 %v2327, %v2327
        %v2329 = vld [vmem:[#allocation22] sm:$0xf]
        %v2330 = vld [vmem:[#allocation22 + $0x4] sm:$0xf]
        %v2331 = vld [vmem:[#allocation22 + $0x8] sm:$0xf]
        %v2332 = vld [vmem:[#allocation22 + $0xc] sm:$0xf]
        %v2333 = vld [vmem:[#allocation23] sm:$0x1]
        %v2335 = vlaneseq
        %v2336 = vshrl.u32 %v2335, 7
        %v2337 = vsub.s32 0, %v2336
        %v2338 = vrot.slane %v2333, %v2337
        %v2344 = vunpack.c.l.b16 %v2329
        %v2345 = vunpack.c.l.b16 %v2330
        %v2346 = vunpack.c.l.b16 %v2331
        %v2347 = vunpack.c.l.b16 %v2332
        %v2348 = vpack.c.b16 %v2345, %v2344
        %v2349 = vpack.c.b16 %v2347, %v2346
        %v2353 = vsel %vm1567, %v2328, 0
        %2355 = vmatprep.subr.bf16.mxu0 0
        %2356 = vmatpush1.bf16.msra.mxu0 %v2348
        %2357 = vmatprep.subr.bf16.mxu0 0
        %2358 = vmatpush1.bf16.msra.mxu0 %v2349
        %2359 = vmatprep.subr.bf16.mxu0 0
        %2360 = vmatpush1.bf16.msra.mxu0 0
        %2361 = vmatprep.subr.bf16.mxu0 0
        %2362 = vmatpush1.bf16.msra.mxu0 0
        %2363 = vmatprep.subr.bf16.mxu0 0
        %2364 = vmatpush1.bf16.msra.mxu0 0
        %2365 = vmatprep.subr.bf16.mxu0 0
        %2366 = vmatpush1.bf16.msra.mxu0 0
        %2367 = vmatprep.subr.bf16.mxu0 0
        %2368 = vmatpush1.bf16.msra.mxu0 0
        %2369 = vmatprep.subr.bf16.mxu0 0
        %2370 = vmatpush1.bf16.msra.mxu0 0
        %2371 = vmatprep.subr.bf16.mxu0 0
        %2372 = vmatpush1.bf16.msra.mxu0 0
        %2373 = vmatprep.subr.bf16.mxu0 0
        %2374 = vmatpush1.bf16.msra.mxu0 0
        %2375 = vmatprep.subr.bf16.mxu0 0
        %2376 = vmatpush1.bf16.msra.mxu0 0
        %2377 = vmatprep.subr.bf16.mxu0 0
        %2378 = vmatpush1.bf16.msra.mxu0 0
        %2379 = vmatprep.subr.bf16.mxu0 0
        %2380 = vmatpush1.bf16.msra.mxu0 0
        %2381 = vmatprep.subr.bf16.mxu0 0
        %2382 = vmatpush1.bf16.msra.mxu0 0
        %2383 = vmatprep.subr.bf16.mxu0 0
        %2384 = vmatpush1.bf16.msra.mxu0 0
        %2385 = vmatprep.subr.bf16.mxu0 0
        %2386 = vmatpush1.bf16.msra.mxu0 0
        %2387 = vmatprep.mubr.bf16.mxu0 0
        %2388 = vmatmul.mubr.bf16.gmra.mrb[0].mxu0 %v2353
        %v2389 = vpop.f32.mrb[0].mxu0
        %v2390 = vadd.f32 %v2338, %v2389
        %v2391 = vpop.f32.mrb[0].mxu0
        %v2392 = vpop.f32.mrb[0].mxu0
        %v2393 = vpop.f32.mrb[0].mxu0
        %2394 = vdwg.mxu0
        %v2395 = vadd.f32 %v2390, %v1539
        %v2396 = vld [vmem:[#allocation43] sm:$0x1]
        %v2397 = vld [vmem:[#allocation44] sm:$0x1]
        %v2398 = vsel %vm1567, %v2395, 0.0
        %2399 = vadd.xlane.f32.xlu0 %v2398
        %v2400 = vpop.xlane.xlu0 %2399
        %v2401 = vrcp.pop 32.0
        %v2402 = vmul.f32 %v2400, %v2401
        %v2403 = vsub.f32 %v2395, %v2402
        %v2404 = vmul.f32 %v2403, %v2403
        %v2405 = vsel %vm1567, %v2404, 0.0
        %2406 = vadd.xlane.f32.xlu0 %v2405
        %v2407 = vpop.xlane.xlu0 %2406
        %v2408 = vmul.f32 %v2407, %v2401
        %v2409 = vadd.f32 %v2408, 1e-05
        %v2410 = vrsqrt.pop %v2409
        %v2411 = vmul.f32 %v2403, %v2410
        %v2413 = vlaneseq
        %v2414 = vshrl.u32 %v2413, 7
        %v2415 = vsub.s32 0, %v2414
        %v2416 = vrot.slane %v2396, %v2415
        %v2418 = vmul.f32 %v2411, %v2416
        %v2420 = vlaneseq
        %v2421 = vshrl.u32 %v2420, 7
        %v2422 = vsub.s32 0, %v2421
        %v2423 = vrot.slane %v2397, %v2422
        %v2425 = vadd.f32 %v2418, %v2423
        %v2426 = vld [vmem:[%s1337] sm:$0x1]
        %v2427 = vpack.c.bf16 %v2425, %v2425
        %v2428 = vld [vmem:[#allocation25] sm:$0xf]
        %v2429 = vld [vmem:[#allocation25 + $0x4] sm:$0xf]
        %v2430 = vld [vmem:[#allocation25 + $0x8] sm:$0xf]
        %v2431 = vld [vmem:[#allocation25 + $0xc] sm:$0xf]
        %v2432 = vld [vmem:[#allocation26] sm:$0x1]
        %v2434 = vlaneseq
        %v2435 = vshrl.u32 %v2434, 7
        %v2436 = vsub.s32 0, %v2435
        %v2437 = vrot.slane %v2432, %v2436
        %v2443 = vunpack.c.l.b16 %v2428
        %v2444 = vunpack.c.l.b16 %v2429
        %v2445 = vunpack.c.l.b16 %v2430
        %v2446 = vunpack.c.l.b16 %v2431
        %v2447 = vpack.c.b16 %v2444, %v2443
        %v2448 = vpack.c.b16 %v2446, %v2445
        %v2452 = vsel %vm1567, %v2427, 0
        %2454 = vmatprep.subr.bf16.mxu0 0
        %2455 = vmatpush1.bf16.msra.mxu0 %v2447
        %2456 = vmatprep.subr.bf16.mxu0 0
        %2457 = vmatpush1.bf16.msra.mxu0 %v2448
        %2458 = vmatprep.subr.bf16.mxu0 0
        %2459 = vmatpush1.bf16.msra.mxu0 0
        %2460 = vmatprep.subr.bf16.mxu0 0
        %2461 = vmatpush1.bf16.msra.mxu0 0
        %2462 = vmatprep.subr.bf16.mxu0 0
        %2463 = vmatpush1.bf16.msra.mxu0 0
        %2464 = vmatprep.subr.bf16.mxu0 0
        %2465 = vmatpush1.bf16.msra.mxu0 0
        %2466 = vmatprep.subr.bf16.mxu0 0
        %2467 = vmatpush1.bf16.msra.mxu0 0
        %2468 = vmatprep.subr.bf16.mxu0 0
        %2469 = vmatpush1.bf16.msra.mxu0 0
        %2470 = vmatprep.subr.bf16.mxu0 0
        %2471 = vmatpush1.bf16.msra.mxu0 0
        %2472 = vmatprep.subr.bf16.mxu0 0
        %2473 = vmatpush1.bf16.msra.mxu0 0
        %2474 = vmatprep.subr.bf16.mxu0 0
        %2475 = vmatpush1.bf16.msra.mxu0 0
        %2476 = vmatprep.subr.bf16.mxu0 0
        %2477 = vmatpush1.bf16.msra.mxu0 0
        %2478 = vmatprep.subr.bf16.mxu0 0
        %2479 = vmatpush1.bf16.msra.mxu0 0
        %2480 = vmatprep.subr.bf16.mxu0 0
        %2481 = vmatpush1.bf16.msra.mxu0 0
        %2482 = vmatprep.subr.bf16.mxu0 0
        %2483 = vmatpush1.bf16.msra.mxu0 0
        %2484 = vmatprep.subr.bf16.mxu0 0
        %2485 = vmatpush1.bf16.msra.mxu0 0
        %2486 = vmatprep.mubr.bf16.mxu0 0
        %2487 = vmatmul.mubr.bf16.gmra.mrb[0].mxu0 %v2452
        %v2488 = vpop.f32.mrb[0].mxu0
        %v2489 = vadd.f32 %v2437, %v2488
        %v2490 = vpop.f32.mrb[0].mxu0
        %v2491 = vpop.f32.mrb[0].mxu0
        %v2492 = vpop.f32.mrb[0].mxu0
        %2493 = vdwg.mxu0
        %2495 = vrot.lane.b32.xlu0 %v2489, 120
        %v2496 = vpop.permute.xlu0 %2495
        %2498 = vrot.lane.b32.xlu0 %v2489, 112
        %v2499 = vpop.permute.xlu0 %2498
        %2501 = vrot.lane.b32.xlu0 %v2489, 104
        %v2502 = vpop.permute.xlu0 %2501
        %v2504 = vld [vmem:[%s1317] sm:$0xff]
        %v2505 = vpack.c.bf16 %v2504, %v2504
        %v2506 = vld [vmem:[#allocation28] sm:$0xf]
        %v2507 = vld [vmem:[#allocation28 + $0x4] sm:$0xf]
        %v2508 = vld [vmem:[#allocation28 + $0x8] sm:$0xf]
        %v2509 = vld [vmem:[#allocation28 + $0xc] sm:$0xf]
        %v2510 = vld [vmem:[#allocation29] sm:$0x1]
        %v2512 = vlaneseq
        %v2513 = vshrl.u32 %v2512, 7
        %v2514 = vsub.s32 0, %v2513
        %v2515 = vrot.slane %v2510, %v2514
        %v2521 = vunpack.c.l.b16 %v2506
        %v2522 = vunpack.c.l.b16 %v2507
        %v2523 = vunpack.c.l.b16 %v2508
        %v2524 = vunpack.c.l.b16 %v2509
        %v2525 = vpack.c.b16 %v2522, %v2521
        %v2526 = vpack.c.b16 %v2524, %v2523
        %v2530 = vsel %vm1567, %v2505, 0
        %2532 = vmatprep.subr.bf16.mxu0 0
        %2533 = vmatpush1.bf16.msra.mxu0 %v2525
        %2534 = vmatprep.subr.bf16.mxu0 0
        %2535 = vmatpush1.bf16.msra.mxu0 %v2526
        %2536 = vmatprep.subr.bf16.mxu0 0
        %2537 = vmatpush1.bf16.msra.mxu0 0
        %2538 = vmatprep.subr.bf16.mxu0 0
        %2539 = vmatpush1.bf16.msra.mxu0 0
        %2540 = vmatprep.subr.bf16.mxu0 0
        %2541 = vmatpush1.bf16.msra.mxu0 0
        %2542 = vmatprep.subr.bf16.mxu0 0
        %2543 = vmatpush1.bf16.msra.mxu0 0
        %2544 = vmatprep.subr.bf16.mxu0 0
        %2545 = vmatpush1.bf16.msra.mxu0 0
        %2546 = vmatprep.subr.bf16.mxu0 0
        %2547 = vmatpush1.bf16.msra.mxu0 0
        %2548 = vmatprep.subr.bf16.mxu0 0
        %2549 = vmatpush1.bf16.msra.mxu0 0
        %2550 = vmatprep.subr.bf16.mxu0 0
        %2551 = vmatpush1.bf16.msra.mxu0 0
        %2552 = vmatprep.subr.bf16.mxu0 0
        %2553 = vmatpush1.bf16.msra.mxu0 0
        %2554 = vmatprep.subr.bf16.mxu0 0
        %2555 = vmatpush1.bf16.msra.mxu0 0
        %2556 = vmatprep.subr.bf16.mxu0 0
        %2557 = vmatpush1.bf16.msra.mxu0 0
        %2558 = vmatprep.subr.bf16.mxu0 0
        %2559 = vmatpush1.bf16.msra.mxu0 0
        %2560 = vmatprep.subr.bf16.mxu0 0
        %2561 = vmatpush1.bf16.msra.mxu0 0
        %2562 = vmatprep.subr.bf16.mxu0 0
        %2563 = vmatpush1.bf16.msra.mxu0 0
        %2564 = vmatprep.mubr.bf16.mxu0 0
        %2565 = vmatmul.mubr.bf16.gmra.mrb[0].mxu0 %v2530
        %v2566 = vpop.f32.mrb[0].mxu0
        %v2567 = vadd.f32 %v2515, %v2566
        %v2568 = vpop.f32.mrb[0].mxu0
        %v2569 = vpop.f32.mrb[0].mxu0
        %v2570 = vpop.f32.mrb[0].mxu0
        %2571 = vdwg.mxu0
        %v2572 = vld [vmem:[#allocation31] sm:$0xf]
        %v2573 = vld [vmem:[#allocation31 + $0x4] sm:$0xf]
        %v2574 = vld [vmem:[#allocation31 + $0x8] sm:$0xf]
        %v2575 = vld [vmem:[#allocation31 + $0xc] sm:$0xf]
        %v2576 = vld [vmem:[#allocation32] sm:$0x1]
        %v2578 = vlaneseq
        %v2579 = vshrl.u32 %v2578, 7
        %v2580 = vsub.s32 0, %v2579
        %v2581 = vrot.slane %v2576, %v2580
        %v2587 = vunpack.c.l.b16 %v2572
        %v2588 = vunpack.c.l.b16 %v2573
        %v2589 = vunpack.c.l.b16 %v2574
        %v2590 = vunpack.c.l.b16 %v2575
        %v2591 = vpack.c.b16 %v2588, %v2587
        %v2592 = vpack.c.b16 %v2590, %v2589
        %2595 = vmatprep.subr.bf16.mxu0 0
        %2596 = vmatpush1.bf16.msra.mxu0 %v2591
        %2597 = vmatprep.subr.bf16.mxu0 0
        %2598 = vmatpush1.bf16.msra.mxu0 %v2592
        %2599 = vmatprep.subr.bf16.mxu0 0
        %2600 = vmatpush1.bf16.msra.mxu0 0
        %2601 = vmatprep.subr.bf16.mxu0 0
        %2602 = vmatpush1.bf16.msra.mxu0 0
        %2603 = vmatprep.subr.bf16.mxu0 0
        %2604 = vmatpush1.bf16.msra.mxu0 0
        %2605 = vmatprep.subr.bf16.mxu0 0
        %2606 = vmatpush1.bf16.msra.mxu0 0
        %2607 = vmatprep.subr.bf16.mxu0 0
        %2608 = vmatpush1.bf16.msra.mxu0 0
        %2609 = vmatprep.subr.bf16.mxu0 0
        %2610 = vmatpush1.bf16.msra.mxu0 0
        %2611 = vmatprep.subr.bf16.mxu0 0
        %2612 = vmatpush1.bf16.msra.mxu0 0
        %2613 = vmatprep.subr.bf16.mxu0 0
        %2614 = vmatpush1.bf16.msra.mxu0 0
        %2615 = vmatprep.subr.bf16.mxu0 0
        %2616 = vmatpush1.bf16.msra.mxu0 0
        %2617 = vmatprep.subr.bf16.mxu0 0
        %2618 = vmatpush1.bf16.msra.mxu0 0
        %2619 = vmatprep.subr.bf16.mxu0 0
        %2620 = vmatpush1.bf16.msra.mxu0 0
        %2621 = vmatprep.subr.bf16.mxu0 0
        %2622 = vmatpush1.bf16.msra.mxu0 0
        %2623 = vmatprep.subr.bf16.mxu0 0
        %2624 = vmatpush1.bf16.msra.mxu0 0
        %2625 = vmatprep.subr.bf16.mxu0 0
        %2626 = vmatpush1.bf16.msra.mxu0 0
        %2627 = vmatprep.mubr.bf16.mxu0 0
        %2628 = vmatmul.mubr.bf16.gmra.mrb[0].mxu0 %v2530
        %v2629 = vpop.f32.mrb[0].mxu0
        %v2630 = vadd.f32 %v2581, %v2629
        %v2631 = vpop.f32.mrb[0].mxu0
        %v2632 = vpop.f32.mrb[0].mxu0
        %v2633 = vpop.f32.mrb[0].mxu0
        %2634 = vdwg.mxu0
        %2636 = vrot.lane.b32.xlu0 %v2567, 120
        %v2637 = vpop.permute.xlu0 %2636
        %2639 = vrot.lane.b32.xlu0 %v2567, 112
        %v2640 = vpop.permute.xlu0 %2639
        %2642 = vrot.lane.b32.xlu0 %v2567, 104
        %v2643 = vpop.permute.xlu0 %2642
        %2646 = vrot.lane.b32.xlu0 %v2630, 120
        %v2647 = vpop.permute.xlu0 %2646
        %2649 = vrot.lane.b32.xlu0 %v2630, 112
        %v2650 = vpop.permute.xlu0 %2649
        %2652 = vrot.lane.b32.xlu0 %v2630, 104
        %v2653 = vpop.permute.xlu0 %2652
        %v2655 = vpack.c.bf16 %v2489, %v2489
        %v2656 = vpack.c.bf16 %v2496, %v2496
        %v2657 = vpack.c.bf16 %v2499, %v2499
        %v2658 = vpack.c.bf16 %v2502, %v2502
        %v2659 = vpack.c.bf16 %v2567, %v2567
        %v2660 = vpack.c.bf16 %v2637, %v2637
        %v2661 = vpack.c.bf16 %v2640, %v2640
        %v2662 = vpack.c.bf16 %v2643, %v2643
        %v2664 = vlaneseq
        %v2665 = vshrl.u32 %v2664, 7
        %v2666 = vsub.s32 0, %v2665
        %v2667 = vrot.slane %v2426, %v2666
        %v2670 = vsel %vm1861, %v2655, 0
        %v2673 = vsel %vm1861, %v2659, 0
        %2675 = vmatprep.subr.bf16.mxu0 0
        %2676 = vmatpush1.bf16.xpose.msra.mxu0 %v2673
        %2677 = vmatprep.subr.bf16.mxu0 0
        %2678 = vmatpush1.bf16.xpose.msra.mxu0 0
        %2679 = vmatprep.subr.bf16.mxu0 0
        %2680 = vmatpush1.bf16.xpose.msra.mxu0 0
        %2681 = vmatprep.subr.bf16.mxu0 0
        %2682 = vmatpush1.bf16.xpose.msra.mxu0 0
        %2683 = vmatprep.subr.bf16.mxu0 0
        %2684 = vmatpush1.bf16.xpose.msra.mxu0 0
        %2685 = vmatprep.subr.bf16.mxu0 0
        %2686 = vmatpush1.bf16.xpose.msra.mxu0 0
        %2687 = vmatprep.subr.bf16.mxu0 0
        %2688 = vmatpush1.bf16.xpose.msra.mxu0 0
        %2689 = vmatprep.subr.bf16.mxu0 0
        %2690 = vmatpush1.bf16.xpose.msra.mxu0 0
        %2691 = vmatprep.subr.bf16.mxu0 0
        %2692 = vmatpush1.bf16.xpose.msra.mxu0 0
        %2693 = vmatprep.subr.bf16.mxu0 0
        %2694 = vmatpush1.bf16.xpose.msra.mxu0 0
        %2695 = vmatprep.subr.bf16.mxu0 0
        %2696 = vmatpush1.bf16.xpose.msra.mxu0 0
        %2697 = vmatprep.subr.bf16.mxu0 0
        %2698 = vmatpush1.bf16.xpose.msra.mxu0 0
        %2699 = vmatprep.subr.bf16.mxu0 0
        %2700 = vmatpush1.bf16.xpose.msra.mxu0 0
        %2701 = vmatprep.subr.bf16.mxu0 0
        %2702 = vmatpush1.bf16.xpose.msra.mxu0 0
        %2703 = vmatprep.subr.bf16.mxu0 0
        %2704 = vmatpush1.bf16.xpose.msra.mxu0 0
        %2705 = vmatprep.subr.bf16.mxu0 0
        %2706 = vmatpush1.bf16.xpose.msra.mxu0 0
        %2707 = vmatprep.mubr.bf16.mxu0 0
        %2708 = vmatmul.mubr.bf16.gmra.mrb[0].mxu0 %v2670
        %v2709 = vpop.f32.mrb[0].mxu0
        %v2710 = vadd.f32 %v2667, %v2709
        %v2711 = vpop.f32.mrb[0].mxu0
        %v2712 = vpop.f32.mrb[0].mxu0
        %v2713 = vpop.f32.mrb[0].mxu0
        %2714 = vdwg.mxu0
        %v2716 = vsel %vm1861, %v2656, 0
        %v2719 = vsel %vm1861, %v2660, 0
        %2721 = vmatprep.subr.bf16.mxu0 0
        %2722 = vmatpush1.bf16.xpose.msra.mxu0 %v2719
        %2723 = vmatprep.subr.bf16.mxu0 0
        %2724 = vmatpush1.bf16.xpose.msra.mxu0 0
        %2725 = vmatprep.subr.bf16.mxu0 0
        %2726 = vmatpush1.bf16.xpose.msra.mxu0 0
        %2727 = vmatprep.subr.bf16.mxu0 0
        %2728 = vmatpush1.bf16.xpose.msra.mxu0 0
        %2729 = vmatprep.subr.bf16.mxu0 0
        %2730 = vmatpush1.bf16.xpose.msra.mxu0 0
        %2731 = vmatprep.subr.bf16.mxu0 0
        %2732 = vmatpush1.bf16.xpose.msra.mxu0 0
        %2733 = vmatprep.subr.bf16.mxu0 0
        %2734 = vmatpush1.bf16.xpose.msra.mxu0 0
        %2735 = vmatprep.subr.bf16.mxu0 0
        %2736 = vmatpush1.bf16.xpose.msra.mxu0 0
        %2737 = vmatprep.subr.bf16.mxu0 0
        %2738 = vmatpush1.bf16.xpose.msra.mxu0 0
        %2739 = vmatprep.subr.bf16.mxu0 0
        %2740 = vmatpush1.bf16.xpose.msra.mxu0 0
        %2741 = vmatprep.subr.bf16.mxu0 0
        %2742 = vmatpush1.bf16.xpose.msra.mxu0 0
        %2743 = vmatprep.subr.bf16.mxu0 0
        %2744 = vmatpush1.bf16.xpose.msra.mxu0 0
        %2745 = vmatprep.subr.bf16.mxu0 0
        %2746 = vmatpush1.bf16.xpose.msra.mxu0 0
        %2747 = vmatprep.subr.bf16.mxu0 0
        %2748 = vmatpush1.bf16.xpose.msra.mxu0 0
        %2749 = vmatprep.subr.bf16.mxu0 0
        %2750 = vmatpush1.bf16.xpose.msra.mxu0 0
        %2751 = vmatprep.subr.bf16.mxu0 0
        %2752 = vmatpush1.bf16.xpose.msra.mxu0 0
        %2753 = vmatprep.mubr.bf16.mxu0 0
        %2754 = vmatmul.mubr.bf16.gmra.mrb[0].mxu0 %v2716
        %v2755 = vpop.f32.mrb[0].mxu0
        %v2756 = vadd.f32 %v2667, %v2755
        %v2757 = vpop.f32.mrb[0].mxu0
        %v2758 = vpop.f32.mrb[0].mxu0
        %v2759 = vpop.f32.mrb[0].mxu0
        %2760 = vdwg.mxu0
        %v2762 = vsel %vm1861, %v2657, 0
        %v2765 = vsel %vm1861, %v2661, 0
        %2767 = vmatprep.subr.bf16.mxu0 0
        %2768 = vmatpush1.bf16.xpose.msra.mxu0 %v2765
        %2769 = vmatprep.subr.bf16.mxu0 0
        %2770 = vmatpush1.bf16.xpose.msra.mxu0 0
        %2771 = vmatprep.subr.bf16.mxu0 0
        %2772 = vmatpush1.bf16.xpose.msra.mxu0 0
        %2773 = vmatprep.subr.bf16.mxu0 0
        %2774 = vmatpush1.bf16.xpose.msra.mxu0 0
        %2775 = vmatprep.subr.bf16.mxu0 0
        %2776 = vmatpush1.bf16.xpose.msra.mxu0 0
        %2777 = vmatprep.subr.bf16.mxu0 0
        %2778 = vmatpush1.bf16.xpose.msra.mxu0 0
        %2779 = vmatprep.subr.bf16.mxu0 0
        %2780 = vmatpush1.bf16.xpose.msra.mxu0 0
        %2781 = vmatprep.subr.bf16.mxu0 0
        %2782 = vmatpush1.bf16.xpose.msra.mxu0 0
        %2783 = vmatprep.subr.bf16.mxu0 0
        %2784 = vmatpush1.bf16.xpose.msra.mxu0 0
        %2785 = vmatprep.subr.bf16.mxu0 0
        %2786 = vmatpush1.bf16.xpose.msra.mxu0 0
        %2787 = vmatprep.subr.bf16.mxu0 0
        %2788 = vmatpush1.bf16.xpose.msra.mxu0 0
        %2789 = vmatprep.subr.bf16.mxu0 0
        %2790 = vmatpush1.bf16.xpose.msra.mxu0 0
        %2791 = vmatprep.subr.bf16.mxu0 0
        %2792 = vmatpush1.bf16.xpose.msra.mxu0 0
        %2793 = vmatprep.subr.bf16.mxu0 0
        %2794 = vmatpush1.bf16.xpose.msra.mxu0 0
        %2795 = vmatprep.subr.bf16.mxu0 0
        %2796 = vmatpush1.bf16.xpose.msra.mxu0 0
        %2797 = vmatprep.subr.bf16.mxu0 0
        %2798 = vmatpush1.bf16.xpose.msra.mxu0 0
        %2799 = vmatprep.mubr.bf16.mxu0 0
        %2800 = vmatmul.mubr.bf16.gmra.mrb[0].mxu0 %v2762
        %v2801 = vpop.f32.mrb[0].mxu0
        %v2802 = vadd.f32 %v2667, %v2801
        %v2803 = vpop.f32.mrb[0].mxu0
        %v2804 = vpop.f32.mrb[0].mxu0
        %v2805 = vpop.f32.mrb[0].mxu0
        %2806 = vdwg.mxu0
        %v2808 = vsel %vm1861, %v2658, 0
        %v2811 = vsel %vm1861, %v2662, 0
        %2813 = vmatprep.subr.bf16.mxu0 0
        %2814 = vmatpush1.bf16.xpose.msra.mxu0 %v2811
        %2815 = vmatprep.subr.bf16.mxu0 0
        %2816 = vmatpush1.bf16.xpose.msra.mxu0 0
        %2817 = vmatprep.subr.bf16.mxu0 0
        %2818 = vmatpush1.bf16.xpose.msra.mxu0 0
        %2819 = vmatprep.subr.bf16.mxu0 0
        %2820 = vmatpush1.bf16.xpose.msra.mxu0 0
        %2821 = vmatprep.subr.bf16.mxu0 0
        %2822 = vmatpush1.bf16.xpose.msra.mxu0 0
        %2823 = vmatprep.subr.bf16.mxu0 0
        %2824 = vmatpush1.bf16.xpose.msra.mxu0 0
        %2825 = vmatprep.subr.bf16.mxu0 0
        %2826 = vmatpush1.bf16.xpose.msra.mxu0 0
        %2827 = vmatprep.subr.bf16.mxu0 0
        %2828 = vmatpush1.bf16.xpose.msra.mxu0 0
        %2829 = vmatprep.subr.bf16.mxu0 0
        %2830 = vmatpush1.bf16.xpose.msra.mxu0 0
        %2831 = vmatprep.subr.bf16.mxu0 0
        %2832 = vmatpush1.bf16.xpose.msra.mxu0 0
        %2833 = vmatprep.subr.bf16.mxu0 0
        %2834 = vmatpush1.bf16.xpose.msra.mxu0 0
        %2835 = vmatprep.subr.bf16.mxu0 0
        %2836 = vmatpush1.bf16.xpose.msra.mxu0 0
        %2837 = vmatprep.subr.bf16.mxu0 0
        %2838 = vmatpush1.bf16.xpose.msra.mxu0 0
        %2839 = vmatprep.subr.bf16.mxu0 0
        %2840 = vmatpush1.bf16.xpose.msra.mxu0 0
        %2841 = vmatprep.subr.bf16.mxu0 0
        %2842 = vmatpush1.bf16.xpose.msra.mxu0 0
        %2843 = vmatprep.subr.bf16.mxu0 0
        %2844 = vmatpush1.bf16.xpose.msra.mxu0 0
        %2845 = vmatprep.mubr.bf16.mxu0 0
        %2846 = vmatmul.mubr.bf16.gmra.mrb[0].mxu0 %v2808
        %v2847 = vpop.f32.mrb[0].mxu0
        %v2848 = vadd.f32 %v2667, %v2847
        %v2849 = vpop.f32.mrb[0].mxu0
        %v2850 = vpop.f32.mrb[0].mxu0
        %v2851 = vpop.f32.mrb[0].mxu0
        %2852 = vdwg.mxu0
        %v2853 = vsel %vm1861, %v2710, -inf
        %2854 = vmax.xlane.f32.xlu0 %v2853
        %v2855 = vpop.xlane.xlu0 %2854
        %v2856 = vsel %vm1861, %v2756, -inf
        %2857 = vmax.xlane.f32.xlu0 %v2856
        %v2858 = vpop.xlane.xlu0 %2857
        %v2859 = vsel %vm1861, %v2802, -inf
        %2860 = vmax.xlane.f32.xlu0 %v2859
        %v2861 = vpop.xlane.xlu0 %2860
        %v2862 = vsel %vm1861, %v2848, -inf
        %2863 = vmax.xlane.f32.xlu0 %v2862
        %v2864 = vpop.xlane.xlu0 %2863
        %v2865 = vmax.f32 %v2855, -1e+30
        %v2866 = vmax.f32 %v2858, -1e+30
        %v2867 = vmax.f32 %v2861, -1e+30
        %v2868 = vmax.f32 %v2864, -1e+30
        %v2869 = vsub.f32 -1e+30, %v2865
        %v2870 = vsub.f32 -1e+30, %v2866
        %v2871 = vsub.f32 -1e+30, %v2867
        %v2872 = vsub.f32 -1e+30, %v2868
        %v2873 = vmul.f32 %v2869, 1.442695
        %v2874 = vpow.pop %v2873
        %v2875 = vmul.f32 %v2870, 1.442695
        %v2876 = vpow.pop %v2875
        %v2877 = vmul.f32 %v2871, 1.442695
        %v2878 = vpow.pop %v2877
        %v2879 = vmul.f32 %v2872, 1.442695
        %v2880 = vpow.pop %v2879
        %v2881 = vsub.f32 %v2710, %v2865
        %v2882 = vsub.f32 %v2756, %v2866
        %v2883 = vsub.f32 %v2802, %v2867
        %v2884 = vsub.f32 %v2848, %v2868
        %v2885 = vmul.f32 %v2881, 1.442695
        %v2886 = vpow.pop %v2885
        %v2887 = vmul.f32 %v2882, 1.442695
        %v2888 = vpow.pop %v2887
        %v2889 = vmul.f32 %v2883, 1.442695
        %v2890 = vpow.pop %v2889
        %v2891 = vmul.f32 %v2884, 1.442695
        %v2892 = vpow.pop %v2891
        %v2893 = vmul.f32 %v2874, 0.0
        %v2894 = vmul.f32 %v2876, 0.0
        %v2895 = vmul.f32 %v2878, 0.0
        %v2896 = vmul.f32 %v2880, 0.0
        %v2897 = vsel %vm1861, %v2886, 0.0
        %2898 = vadd.xlane.f32.xlu0 %v2897
        %v2899 = vpop.xlane.xlu0 %2898
        %v2900 = vsel %vm1861, %v2888, 0.0
        %2901 = vadd.xlane.f32.xlu0 %v2900
        %v2902 = vpop.xlane.xlu0 %2901
        %v2903 = vsel %vm1861, %v2890, 0.0
        %2904 = vadd.xlane.f32.xlu0 %v2903
        %v2905 = vpop.xlane.xlu0 %2904
        %v2906 = vsel %vm1861, %v2892, 0.0
        %2907 = vadd.xlane.f32.xlu0 %v2906
        %v2908 = vpop.xlane.xlu0 %2907
        %v2909 = vadd.f32 %v2893, %v2899
        %v2910 = vadd.f32 %v2894, %v2902
        %v2911 = vadd.f32 %v2895, %v2905
        %v2912 = vadd.f32 %v2896, %v2908
        %v2913 = vpack.c.bf16 %v2886, %v2886
        %v2914 = vpack.c.bf16 %v2888, %v2888
        %v2915 = vpack.c.bf16 %v2890, %v2890
        %v2916 = vpack.c.bf16 %v2892, %v2892
        %v2917 = vpack.c.bf16 %v2630, %v2630
        %v2918 = vpack.c.bf16 %v2647, %v2647
        %v2919 = vpack.c.bf16 %v2650, %v2650
        %v2920 = vpack.c.bf16 %v2653, %v2653
        %v2922 = vsel %vm1861, %v2913, 0
        %v2925 = vsel %vm2117, %v2917, 0
        %2927 = vmatprep.subr.bf16.mxu0 0
        %2928 = vmatpush1.bf16.msra.mxu0 %v2925
        %2929 = vmatprep.subr.bf16.mxu0 0
        %2930 = vmatpush1.bf16.msra.mxu0 0
        %2931 = vmatprep.subr.bf16.mxu0 0
        %2932 = vmatpush1.bf16.msra.mxu0 0
        %2933 = vmatprep.subr.bf16.mxu0 0
        %2934 = vmatpush1.bf16.msra.mxu0 0
        %2935 = vmatprep.subr.bf16.mxu0 0
        %2936 = vmatpush1.bf16.msra.mxu0 0
        %2937 = vmatprep.subr.bf16.mxu0 0
        %2938 = vmatpush1.bf16.msra.mxu0 0
        %2939 = vmatprep.subr.bf16.mxu0 0
        %2940 = vmatpush1.bf16.msra.mxu0 0
        %2941 = vmatprep.subr.bf16.mxu0 0
        %2942 = vmatpush1.bf16.msra.mxu0 0
        %2943 = vmatprep.subr.bf16.mxu0 0
        %2944 = vmatpush1.bf16.msra.mxu0 0
        %2945 = vmatprep.subr.bf16.mxu0 0
        %2946 = vmatpush1.bf16.msra.mxu0 0
        %2947 = vmatprep.subr.bf16.mxu0 0
        %2948 = vmatpush1.bf16.msra.mxu0 0
        %2949 = vmatprep.subr.bf16.mxu0 0
        %2950 = vmatpush1.bf16.msra.mxu0 0
        %2951 = vmatprep.subr.bf16.mxu0 0
        %2952 = vmatpush1.bf16.msra.mxu0 0
        %2953 = vmatprep.subr.bf16.mxu0 0
        %2954 = vmatpush1.bf16.msra.mxu0 0
        %2955 = vmatprep.subr.bf16.mxu0 0
        %2956 = vmatpush1.bf16.msra.mxu0 0
        %2957 = vmatprep.subr.bf16.mxu0 0
        %2958 = vmatpush1.bf16.msra.mxu0 0
        %2959 = vmatprep.mubr.bf16.mxu0 0
        %2960 = vmatmul.mubr.bf16.gmra.mrb[0].mxu0 %v2922
        %v2961 = vpop.f32.mrb[0].mxu0
        %v2962 = vadd.f32 0.0, %v2961
        %v2963 = vpop.f32.mrb[0].mxu0
        %v2964 = vpop.f32.mrb[0].mxu0
        %v2965 = vpop.f32.mrb[0].mxu0
        %2966 = vdwg.mxu0
        %v2968 = vsel %vm1861, %v2914, 0
        %v2971 = vsel %vm2117, %v2918, 0
        %2973 = vmatprep.subr.bf16.mxu0 0
        %2974 = vmatpush1.bf16.msra.mxu0 %v2971
        %2975 = vmatprep.subr.bf16.mxu0 0
        %2976 = vmatpush1.bf16.msra.mxu0 0
        %2977 = vmatprep.subr.bf16.mxu0 0
        %2978 = vmatpush1.bf16.msra.mxu0 0
        %2979 = vmatprep.subr.bf16.mxu0 0
        %2980 = vmatpush1.bf16.msra.mxu0 0
        %2981 = vmatprep.subr.bf16.mxu0 0
        %2982 = vmatpush1.bf16.msra.mxu0 0
        %2983 = vmatprep.subr.bf16.mxu0 0
        %2984 = vmatpush1.bf16.msra.mxu0 0
        %2985 = vmatprep.subr.bf16.mxu0 0
        %2986 = vmatpush1.bf16.msra.mxu0 0
        %2987 = vmatprep.subr.bf16.mxu0 0
        %2988 = vmatpush1.bf16.msra.mxu0 0
        %2989 = vmatprep.subr.bf16.mxu0 0
        %2990 = vmatpush1.bf16.msra.mxu0 0
        %2991 = vmatprep.subr.bf16.mxu0 0
        %2992 = vmatpush1.bf16.msra.mxu0 0
        %2993 = vmatprep.subr.bf16.mxu0 0
        %2994 = vmatpush1.bf16.msra.mxu0 0
        %2995 = vmatprep.subr.bf16.mxu0 0
        %2996 = vmatpush1.bf16.msra.mxu0 0
        %2997 = vmatprep.subr.bf16.mxu0 0
        %2998 = vmatpush1.bf16.msra.mxu0 0
        %2999 = vmatprep.subr.bf16.mxu0 0
        %3000 = vmatpush1.bf16.msra.mxu0 0
        %3001 = vmatprep.subr.bf16.mxu0 0
        %3002 = vmatpush1.bf16.msra.mxu0 0
        %3003 = vmatprep.subr.bf16.mxu0 0
        %3004 = vmatpush1.bf16.msra.mxu0 0
        %3005 = vmatprep.mubr.bf16.mxu0 0
        %3006 = vmatmul.mubr.bf16.gmra.mrb[0].mxu0 %v2968
        %v3007 = vpop.f32.mrb[0].mxu0
        %v3008 = vadd.f32 0.0, %v3007
        %v3009 = vpop.f32.mrb[0].mxu0
        %v3010 = vpop.f32.mrb[0].mxu0
        %v3011 = vpop.f32.mrb[0].mxu0
        %3012 = vdwg.mxu0
        %v3014 = vsel %vm1861, %v2915, 0
        %v3017 = vsel %vm2117, %v2919, 0
        %3019 = vmatprep.subr.bf16.mxu0 0
        %3020 = vmatpush1.bf16.msra.mxu0 %v3017
        %3021 = vmatprep.subr.bf16.mxu0 0
        %3022 = vmatpush1.bf16.msra.mxu0 0
        %3023 = vmatprep.subr.bf16.mxu0 0
        %3024 = vmatpush1.bf16.msra.mxu0 0
        %3025 = vmatprep.subr.bf16.mxu0 0
        %3026 = vmatpush1.bf16.msra.mxu0 0
        %3027 = vmatprep.subr.bf16.mxu0 0
        %3028 = vmatpush1.bf16.msra.mxu0 0
        %3029 = vmatprep.subr.bf16.mxu0 0
        %3030 = vmatpush1.bf16.msra.mxu0 0
        %3031 = vmatprep.subr.bf16.mxu0 0
        %3032 = vmatpush1.bf16.msra.mxu0 0
        %3033 = vmatprep.subr.bf16.mxu0 0
        %3034 = vmatpush1.bf16.msra.mxu0 0
        %3035 = vmatprep.subr.bf16.mxu0 0
        %3036 = vmatpush1.bf16.msra.mxu0 0
        %3037 = vmatprep.subr.bf16.mxu0 0
        %3038 = vmatpush1.bf16.msra.mxu0 0
        %3039 = vmatprep.subr.bf16.mxu0 0
        %3040 = vmatpush1.bf16.msra.mxu0 0
        %3041 = vmatprep.subr.bf16.mxu0 0
        %3042 = vmatpush1.bf16.msra.mxu0 0
        %3043 = vmatprep.subr.bf16.mxu0 0
        %3044 = vmatpush1.bf16.msra.mxu0 0
        %3045 = vmatprep.subr.bf16.mxu0 0
        %3046 = vmatpush1.bf16.msra.mxu0 0
        %3047 = vmatprep.subr.bf16.mxu0 0
        %3048 = vmatpush1.bf16.msra.mxu0 0
        %3049 = vmatprep.subr.bf16.mxu0 0
        %3050 = vmatpush1.bf16.msra.mxu0 0
        %3051 = vmatprep.mubr.bf16.mxu0 0
        %3052 = vmatmul.mubr.bf16.gmra.mrb[0].mxu0 %v3014
        %v3053 = vpop.f32.mrb[0].mxu0
        %v3054 = vadd.f32 0.0, %v3053
        %v3055 = vpop.f32.mrb[0].mxu0
        %v3056 = vpop.f32.mrb[0].mxu0
        %v3057 = vpop.f32.mrb[0].mxu0
        %3058 = vdwg.mxu0
        %v3060 = vsel %vm1861, %v2916, 0
        %v3063 = vsel %vm2117, %v2920, 0
        %3065 = vmatprep.subr.bf16.mxu0 0
        %3066 = vmatpush1.bf16.msra.mxu0 %v3063
        %3067 = vmatprep.subr.bf16.mxu0 0
        %3068 = vmatpush1.bf16.msra.mxu0 0
        %3069 = vmatprep.subr.bf16.mxu0 0
        %3070 = vmatpush1.bf16.msra.mxu0 0
        %3071 = vmatprep.subr.bf16.mxu0 0
        %3072 = vmatpush1.bf16.msra.mxu0 0
        %3073 = vmatprep.subr.bf16.mxu0 0
        %3074 = vmatpush1.bf16.msra.mxu0 0
        %3075 = vmatprep.subr.bf16.mxu0 0
        %3076 = vmatpush1.bf16.msra.mxu0 0
        %3077 = vmatprep.subr.bf16.mxu0 0
        %3078 = vmatpush1.bf16.msra.mxu0 0
        %3079 = vmatprep.subr.bf16.mxu0 0
        %3080 = vmatpush1.bf16.msra.mxu0 0
        %3081 = vmatprep.subr.bf16.mxu0 0
        %3082 = vmatpush1.bf16.msra.mxu0 0
        %3083 = vmatprep.subr.bf16.mxu0 0
        %3084 = vmatpush1.bf16.msra.mxu0 0
        %3085 = vmatprep.subr.bf16.mxu0 0
        %3086 = vmatpush1.bf16.msra.mxu0 0
        %3087 = vmatprep.subr.bf16.mxu0 0
        %3088 = vmatpush1.bf16.msra.mxu0 0
        %3089 = vmatprep.subr.bf16.mxu0 0
        %3090 = vmatpush1.bf16.msra.mxu0 0
        %3091 = vmatprep.subr.bf16.mxu0 0
        %3092 = vmatpush1.bf16.msra.mxu0 0
        %3093 = vmatprep.subr.bf16.mxu0 0
        %3094 = vmatpush1.bf16.msra.mxu0 0
        %3095 = vmatprep.subr.bf16.mxu0 0
        %3096 = vmatpush1.bf16.msra.mxu0 0
        %3097 = vmatprep.mubr.bf16.mxu0 0
        %3098 = vmatmul.mubr.bf16.gmra.mrb[0].mxu0 %v3060
        %v3099 = vpop.f32.mrb[0].mxu0
        %v3100 = vadd.f32 0.0, %v3099
        %v3101 = vpop.f32.mrb[0].mxu0
        %v3102 = vpop.f32.mrb[0].mxu0
        %v3103 = vpop.f32.mrb[0].mxu0
        %3104 = vdwg.mxu0
        %v3105 = vadd.f32 %v2893, %v2962
        %v3106 = vadd.f32 %v2894, %v3008
        %v3107 = vadd.f32 %v2895, %v3054
        %v3108 = vadd.f32 %v2896, %v3100
        %v3109 = vrcp.pop %v2909
        %v3110 = vrcp.pop %v2910
        %v3111 = vrcp.pop %v2911
        %v3112 = vrcp.pop %v2912
        %v3113 = vmul.f32 %v3105, %v3109
        %v3114 = vmul.f32 %v3106, %v3110
        %v3115 = vmul.f32 %v3107, %v3111
        %v3116 = vmul.f32 %v3108, %v3112
        %3118 = vrot.lane.b32.xlu0 %v3114, 8
        %v3119 = vpop.permute.xlu0 %3118
        %3122 = vrot.lane.b32.xlu0 %v3115, 16
        %v3123 = vpop.permute.xlu0 %3122
        %3126 = vrot.lane.b32.xlu0 %v3116, 24
        %v3127 = vpop.permute.xlu0 %3126
        %v3129 = vsel %vm1861, %v3113, %v3119
        %v3130 = vsel %vm2324, %v3129, %v3123
        %v3131 = vsel %vm2326, %v3130, %v3127
        %v3132 = vpack.c.bf16 %v3131, %v3131
        %v3133 = vld [vmem:[#allocation34] sm:$0xf]
        %v3134 = vld [vmem:[#allocation34 + $0x4] sm:$0xf]
        %v3135 = vld [vmem:[#allocation34 + $0x8] sm:$0xf]
        %v3136 = vld [vmem:[#allocation34 + $0xc] sm:$0xf]
        %v3137 = vld [vmem:[#allocation35] sm:$0x1]
        %v3139 = vlaneseq
        %v3140 = vshrl.u32 %v3139, 7
        %v3141 = vsub.s32 0, %v3140
        %v3142 = vrot.slane %v3137, %v3141
        %v3148 = vunpack.c.l.b16 %v3133
        %v3149 = vunpack.c.l.b16 %v3134
        %v3150 = vunpack.c.l.b16 %v3135
        %v3151 = vunpack.c.l.b16 %v3136
        %v3152 = vpack.c.b16 %v3149, %v3148
        %v3153 = vpack.c.b16 %v3151, %v3150
        %v3157 = vsel %vm1567, %v3132, 0
        %3159 = vmatprep.subr.bf16.mxu0 0
        %3160 = vmatpush1.bf16.msra.mxu0 %v3152
        %3161 = vmatprep.subr.bf16.mxu0 0
        %3162 = vmatpush1.bf16.msra.mxu0 %v3153
        %3163 = vmatprep.subr.bf16.mxu0 0
        %3164 = vmatpush1.bf16.msra.mxu0 0
        %3165 = vmatprep.subr.bf16.mxu0 0
        %3166 = vmatpush1.bf16.msra.mxu0 0
        %3167 = vmatprep.subr.bf16.mxu0 0
        %3168 = vmatpush1.bf16.msra.mxu0 0
        %3169 = vmatprep.subr.bf16.mxu0 0
        %3170 = vmatpush1.bf16.msra.mxu0 0
        %3171 = vmatprep.subr.bf16.mxu0 0
        %3172 = vmatpush1.bf16.msra.mxu0 0
        %3173 = vmatprep.subr.bf16.mxu0 0
        %3174 = vmatpush1.bf16.msra.mxu0 0
        %3175 = vmatprep.subr.bf16.mxu0 0
        %3176 = vmatpush1.bf16.msra.mxu0 0
        %3177 = vmatprep.subr.bf16.mxu0 0
        %3178 = vmatpush1.bf16.msra.mxu0 0
        %3179 = vmatprep.subr.bf16.mxu0 0
        %3180 = vmatpush1.bf16.msra.mxu0 0
        %3181 = vmatprep.subr.bf16.mxu0 0
        %3182 = vmatpush1.bf16.msra.mxu0 0
        %3183 = vmatprep.subr.bf16.mxu0 0
        %3184 = vmatpush1.bf16.msra.mxu0 0
        %3185 = vmatprep.subr.bf16.mxu0 0
        %3186 = vmatpush1.bf16.msra.mxu0 0
        %3187 = vmatprep.subr.bf16.mxu0 0
        %3188 = vmatpush1.bf16.msra.mxu0 0
        %3189 = vmatprep.subr.bf16.mxu0 0
        %3190 = vmatpush1.bf16.msra.mxu0 0
        %3191 = vmatprep.mubr.bf16.mxu0 0
        %3192 = vmatmul.mubr.bf16.gmra.mrb[0].mxu0 %v3157
        %v3193 = vpop.f32.mrb[0].mxu0
        %v3194 = vadd.f32 %v3142, %v3193
        %v3195 = vpop.f32.mrb[0].mxu0
        %v3196 = vpop.f32.mrb[0].mxu0
        %v3197 = vpop.f32.mrb[0].mxu0
        %3198 = vdwg.mxu0
        %v3199 = vadd.f32 %v3194, %v2425
        %v3200 = vld [vmem:[#allocation46] sm:$0x1]
        %v3201 = vld [vmem:[#allocation47] sm:$0x1]
        %v3202 = vsel %vm1567, %v3199, 0.0
        %3203 = vadd.xlane.f32.xlu0 %v3202
        %v3204 = vpop.xlane.xlu0 %3203
        %v3205 = vmul.f32 %v3204, %v2401
        %v3206 = vsub.f32 %v3199, %v3205
        %v3207 = vmul.f32 %v3206, %v3206
        %v3208 = vsel %vm1567, %v3207, 0.0
        %3209 = vadd.xlane.f32.xlu0 %v3208
        %v3210 = vpop.xlane.xlu0 %3209
        %v3211 = vmul.f32 %v3210, %v2401
        %v3212 = vadd.f32 %v3211, 1e-05
        %v3213 = vrsqrt.pop %v3212
        %v3214 = vmul.f32 %v3206, %v3213
        %v3216 = vlaneseq
        %v3217 = vshrl.u32 %v3216, 7
        %v3218 = vsub.s32 0, %v3217
        %v3219 = vrot.slane %v3200, %v3218
        %v3221 = vmul.f32 %v3214, %v3219
        %v3223 = vlaneseq
        %v3224 = vshrl.u32 %v3223, 7
        %v3225 = vsub.s32 0, %v3224
        %v3226 = vrot.slane %v3201, %v3225
        %v3228 = vadd.f32 %v3221, %v3226
        %v3229 = vpack.c.bf16 %v3228, %v3228
        %v3230 = vld [vmem:[#allocation37] sm:$0xf]
        %v3231 = vld [vmem:[#allocation37 + $0x4] sm:$0xf]
        %v3232 = vld [vmem:[#allocation37 + $0x8] sm:$0xf]
        %v3233 = vld [vmem:[#allocation37 + $0xc] sm:$0xf]
        %v3234 = vld [vmem:[#allocation38] sm:$0x1]
        %v3236 = vlaneseq
        %v3237 = vshrl.u32 %v3236, 7
        %v3238 = vsub.s32 0, %v3237
        %v3239 = vrot.slane %v3234, %v3238
        %v3245 = vunpack.c.l.b16 %v3230
        %v3246 = vunpack.c.l.b16 %v3231
        %v3247 = vunpack.c.l.b16 %v3232
        %v3248 = vunpack.c.l.b16 %v3233
        %v3249 = vpack.c.b16 %v3246, %v3245
        %v3250 = vpack.c.b16 %v3248, %v3247
        %v3254 = vsel %vm1567, %v3229, 0
        %3256 = vmatprep.subr.bf16.mxu0 0
        %3257 = vmatpush1.bf16.msra.mxu0 %v3249
        %3258 = vmatprep.subr.bf16.mxu0 0
        %3259 = vmatpush1.bf16.msra.mxu0 %v3250
        %3260 = vmatprep.subr.bf16.mxu0 0
        %3261 = vmatpush1.bf16.msra.mxu0 0
        %3262 = vmatprep.subr.bf16.mxu0 0
        %3263 = vmatpush1.bf16.msra.mxu0 0
        %3264 = vmatprep.subr.bf16.mxu0 0
        %3265 = vmatpush1.bf16.msra.mxu0 0
        %3266 = vmatprep.subr.bf16.mxu0 0
        %3267 = vmatpush1.bf16.msra.mxu0 0
        %3268 = vmatprep.subr.bf16.mxu0 0
        %3269 = vmatpush1.bf16.msra.mxu0 0
        %3270 = vmatprep.subr.bf16.mxu0 0
        %3271 = vmatpush1.bf16.msra.mxu0 0
        %3272 = vmatprep.subr.bf16.mxu0 0
        %3273 = vmatpush1.bf16.msra.mxu0 0
        %3274 = vmatprep.subr.bf16.mxu0 0
        %3275 = vmatpush1.bf16.msra.mxu0 0
        %3276 = vmatprep.subr.bf16.mxu0 0
        %3277 = vmatpush1.bf16.msra.mxu0 0
        %3278 = vmatprep.subr.bf16.mxu0 0
        %3279 = vmatpush1.bf16.msra.mxu0 0
        %3280 = vmatprep.subr.bf16.mxu0 0
        %3281 = vmatpush1.bf16.msra.mxu0 0
        %3282 = vmatprep.subr.bf16.mxu0 0
        %3283 = vmatpush1.bf16.msra.mxu0 0
        %3284 = vmatprep.subr.bf16.mxu0 0
        %3285 = vmatpush1.bf16.msra.mxu0 0
        %3286 = vmatprep.subr.bf16.mxu0 0
        %3287 = vmatpush1.bf16.msra.mxu0 0
        %3288 = vmatprep.mubr.bf16.mxu0 0
        %3289 = vmatmul.mubr.bf16.gmra.mrb[0].mxu0 %v3254
        %v3290 = vpop.f32.mrb[0].mxu0
        %v3291 = vadd.f32 %v3239, %v3290
        %v3292 = vpop.f32.mrb[0].mxu0
        %v3293 = vpop.f32.mrb[0].mxu0
        %v3294 = vpop.f32.mrb[0].mxu0
        %3295 = vdwg.mxu0
        %v3296 = vmul.f32 %v3291, 0.5
        %v3297 = vmul.f32 %v3291, 0.70710677
        %v3298 = verf.f32.pop %v3297
        %v3299 = vadd.f32 %v3298, 1.0
        %v3300 = vmul.f32 %v3296, %v3299
        %v3301 = vpack.c.bf16 %v3300, %v3300
        %v3302 = vld [vmem:[#allocation40] sm:$0xf]
        %v3303 = vld [vmem:[#allocation40 + $0x4] sm:$0xf]
        %v3304 = vld [vmem:[#allocation40 + $0x8] sm:$0xf]
        %v3305 = vld [vmem:[#allocation40 + $0xc] sm:$0xf]
        %v3306 = vld [vmem:[#allocation40 + $0x10] sm:$0xf]
        %v3307 = vld [vmem:[#allocation40 + $0x14] sm:$0xf]
        %v3308 = vld [vmem:[#allocation40 + $0x18] sm:$0xf]
        %v3309 = vld [vmem:[#allocation40 + $0x1c] sm:$0xf]
        %v3310 = vld [vmem:[#allocation40 + $0x20] sm:$0xf]
        %v3311 = vld [vmem:[#allocation40 + $0x24] sm:$0xf]
        %v3312 = vld [vmem:[#allocation40 + $0x28] sm:$0xf]
        %v3313 = vld [vmem:[#allocation40 + $0x2c] sm:$0xf]
        %v3314 = vld [vmem:[#allocation40 + $0x30] sm:$0xf]
        %v3315 = vld [vmem:[#allocation40 + $0x34] sm:$0xf]
        %v3316 = vld [vmem:[#allocation40 + $0x38] sm:$0xf]
        %v3317 = vld [vmem:[#allocation40 + $0x3c] sm:$0xf]
        %v3318 = vld [vmem:[#allocation41] sm:$0x1]
        %v3320 = vlaneseq
        %v3321 = vshrl.u32 %v3320, 7
        %v3322 = vsub.s32 0, %v3321
        %v3323 = vrot.slane %v3318, %v3322
        %v3341 = vunpack.c.l.b16 %v3302
        %v3342 = vunpack.c.l.b16 %v3303
        %v3343 = vunpack.c.l.b16 %v3304
        %v3344 = vunpack.c.l.b16 %v3305
        %v3345 = vunpack.c.l.b16 %v3306
        %v3346 = vunpack.c.l.b16 %v3307
        %v3347 = vunpack.c.l.b16 %v3308
        %v3348 = vunpack.c.l.b16 %v3309
        %v3349 = vunpack.c.l.b16 %v3310
        %v3350 = vunpack.c.l.b16 %v3311
        %v3351 = vunpack.c.l.b16 %v3312
        %v3352 = vunpack.c.l.b16 %v3313
        %v3353 = vunpack.c.l.b16 %v3314
        %v3354 = vunpack.c.l.b16 %v3315
        %v3355 = vunpack.c.l.b16 %v3316
        %v3356 = vunpack.c.l.b16 %v3317
        %v3357 = vpack.c.b16 %v3342, %v3341
        %v3358 = vpack.c.b16 %v3344, %v3343
        %v3359 = vpack.c.b16 %v3346, %v3345
        %v3360 = vpack.c.b16 %v3348, %v3347
        %v3361 = vpack.c.b16 %v3350, %v3349
        %v3362 = vpack.c.b16 %v3352, %v3351
        %v3363 = vpack.c.b16 %v3354, %v3353
        %v3364 = vpack.c.b16 %v3356, %v3355
        %3373 = vmatprep.subr.bf16.mxu0 0
        %3374 = vmatpush1.bf16.msra.mxu0 %v3357
        %3375 = vmatprep.subr.bf16.mxu0 0
        %3376 = vmatpush1.bf16.msra.mxu0 %v3358
        %3377 = vmatprep.subr.bf16.mxu0 0
        %3378 = vmatpush1.bf16.msra.mxu0 %v3359
        %3379 = vmatprep.subr.bf16.mxu0 0
        %3380 = vmatpush1.bf16.msra.mxu0 %v3360
        %3381 = vmatprep.subr.bf16.mxu0 0
        %3382 = vmatpush1.bf16.msra.mxu0 %v3361
        %3383 = vmatprep.subr.bf16.mxu0 0
        %3384 = vmatpush1.bf16.msra.mxu0 %v3362
        %3385 = vmatprep.subr.bf16.mxu0 0
        %3386 = vmatpush1.bf16.msra.mxu0 %v3363
        %3387 = vmatprep.subr.bf16.mxu0 0
        %3388 = vmatpush1.bf16.msra.mxu0 %v3364
        %3389 = vmatprep.subr.bf16.mxu0 0
        %3390 = vmatpush1.bf16.msra.mxu0 0
        %3391 = vmatprep.subr.bf16.mxu0 0
        %3392 = vmatpush1.bf16.msra.mxu0 0
        %3393 = vmatprep.subr.bf16.mxu0 0
        %3394 = vmatpush1.bf16.msra.mxu0 0
        %3395 = vmatprep.subr.bf16.mxu0 0
        %3396 = vmatpush1.bf16.msra.mxu0 0
        %3397 = vmatprep.subr.bf16.mxu0 0
        %3398 = vmatpush1.bf16.msra.mxu0 0
        %3399 = vmatprep.subr.bf16.mxu0 0
        %3400 = vmatpush1.bf16.msra.mxu0 0
        %3401 = vmatprep.subr.bf16.mxu0 0
        %3402 = vmatpush1.bf16.msra.mxu0 0
        %3403 = vmatprep.subr.bf16.mxu0 0
        %3404 = vmatpush1.bf16.msra.mxu0 0
        %3405 = vmatprep.mubr.bf16.mxu0 0
        %3406 = vmatmul.mubr.bf16.gmra.mrb[0].mxu0 %v3301
        %v3407 = vpop.f32.mrb[0].mxu0
        %v3408 = vadd.f32 %v3323, %v3407
        %v3409 = vpop.f32.mrb[0].mxu0
        %v3410 = vpop.f32.mrb[0].mxu0
        %v3411 = vpop.f32.mrb[0].mxu0
        %3412 = vdwg.mxu0
        %v3413 = vadd.f32 %v3408, %v3228
        %v3414 = vld [vmem:[#allocation49] sm:$0x1]
        %v3415 = vld [vmem:[#allocation50] sm:$0x1]
        %v3416 = vsel %vm1567, %v3413, 0.0
        %3417 = vadd.xlane.f32.xlu0 %v3416
        %v3418 = vpop.xlane.xlu0 %3417
        %v3419 = vmul.f32 %v3418, %v2401
        %v3420 = vsub.f32 %v3413, %v3419
        %v3421 = vmul.f32 %v3420, %v3420
        %v3422 = vsel %vm1567, %v3421, 0.0
        %3423 = vadd.xlane.f32.xlu0 %v3422
        %v3424 = vpop.xlane.xlu0 %3423
        %v3425 = vmul.f32 %v3424, %v2401
        %v3426 = vadd.f32 %v3425, 1e-05
        %v3427 = vrsqrt.pop %v3426
        %v3428 = vmul.f32 %v3420, %v3427
        %v3430 = vlaneseq
        %v3431 = vshrl.u32 %v3430, 7
        %v3432 = vsub.s32 0, %v3431
        %v3433 = vrot.slane %v3414, %v3432
        %v3435 = vmul.f32 %v3428, %v3433
        %v3437 = vlaneseq
        %v3438 = vshrl.u32 %v3437, 7
        %v3439 = vsub.s32 0, %v3438
        %v3440 = vrot.slane %v3415, %v3439
        %v3442 = vadd.f32 %v3435, %v3440
        %3443 = vst.msk [vmem:[%s1537] sm:$0xff] %vm1567, %v3442
        %s3444 = sand.u32 %s843, 1
        %s3445 = scalar_lea.sflag [#allocation4], %s3444
        %s3446 = sand.u32 %s843, 1
        %s3447 = smul.addr %s3446, 8
        %s3448 = scalar_lea.vmem [#allocation52], %s3447
        // Predicated region
        $region285: #{tpu_custom_call.1} parent=151 // pred_check
          %p3449 = pneg %p853
        $region286: #{tpu_custom_call.1} parent=151 // pred_check_branch
          %3451 = sbr.rel (%p3449) target = $region288
        $region287: #{tpu_custom_call.1} parent=151 // pred_region
          %s3453 = ssub.s32 128, 128
          %3454 = vsyncadd %s3445, %s3453
          %s3455 = sadd.s32 %s106, %s105
          %s3456 = smul.addr %s3455, 128
          %s3457 = scalar_lea.hbm %s67, %s3456
          %s3459 = sshll.u32 %s3448, 4
          %s3460 = int_to_ptr.vmem [resolvable:$true] %s3459
          %3462 = dma.vmem_to_hbm [thread:$0]  %s3460, 128, %s3457, %s3445
        $region288: #{tpu_custom_call.1} parent=151 // pred_fallthru
          _
      $region152: #{tpu_custom_call.1} parent=5 // pred_fallthru
        _
      %p3463 = scmp.le.s32.totalorder 2, %s96
      // Predicated region
      $region289: #{tpu_custom_call.1} parent=5 // pred_check
        %p3464 = pneg %p3463
      $region290: #{tpu_custom_call.1} parent=5 // pred_check_branch
        %3466 = sbr.rel (%p3464) target = $region292
      $region291: #{tpu_custom_call.1} parent=5 // pred_region
        %s3467 = ssub.s32 %s96, 2
        // Predicated region
        $region293: #{tpu_custom_call.1} parent=291 // pred_check
          %p3468 = pneg %p859
        $region294: #{tpu_custom_call.1} parent=291 // pred_check_branch
          %3470 = sbr.rel (%p3468) target = $region296
        $region295: #{tpu_custom_call.1} parent=291 // pred_region
          %s3471 = sand.u32 %s844, 1
          %s3472 = scalar_lea.sflag [#allocation4], %s3471
          %s3473 = sand.u32 %s844, 1
          %s3474 = smul.addr %s3473, 8
          %s3475 = scalar_lea.vmem [#allocation52], %s3474
          %3476 = dma.done %s3472, 128
        $region296: #{tpu_custom_call.1} parent=291 // pred_fallthru
          _
      $region292: #{tpu_custom_call.1} parent=5 // pred_fallthru
        _
    $region6: #{tpu_custom_call.1} parent=1 // loop_footer
      %s100 = sadd.s32 1, %s96
    $region7: #{tpu_custom_call.1} parent=1 // loop_footer_branch
      %95 = sbr.rel target = $region3
    $region8: #{tpu_custom_call.1} parent=1 // loop_exit
      _
    %3477 = vsyncpa [#allocation3], 1
    %s3478 = scalar_lea.sflag [#allocation3], 1
    %3479 = vsyncpa %s3478, 1
    %3480 = vsyncpa [#allocation6], 1
    %s3481 = scalar_lea.sflag [#allocation6], 1
    %3482 = vsyncpa %s3481, 1
    %3483 = vsyncpa [#allocation9], 1
    %3484 = vsyncpa [#allocation12], 1
    %3485 = vsyncpa [#allocation18], 1
    %3486 = vsyncpa [#allocation21], 1
    %3487 = vsyncpa [#allocation24], 1
    %3488 = vsyncpa [#allocation27], 1
    %3489 = vsyncpa [#allocation30], 1
    %3490 = vsyncpa [#allocation33], 1
    %3491 = vsyncpa [#allocation36], 1
    %3492 = vsyncpa [#allocation39], 1
    %3493 = vsyncpa [#allocation42], 1
    %3494 = vsyncpa [#allocation45], 1
    %3495 = vsyncpa [#allocation48], 1
    %3496 = vsyncpa [#allocation51], 1
    %3497 = vsyncpa [#allocation4], 1
    %s3498 = scalar_lea.sflag [#allocation4], 1
    %3499 = vsyncpa %s3498, 1

</llo_original>
